<compile_context>
chip_gen: v7x
topology: tpu7x:2x2x1
jax: 0.10.0
libtpu: 0.0.40
codegen_flags: <defaults>
</compile_context>

<pallas_src>
import math
from collections import namedtuple

import jax
import jax.numpy as jnp
from jax.experimental import pallas as pl
from jax.experimental.pallas import tpu as pltpu

Genotype = namedtuple("Genotype", "normal normal_concat reduce reduce_concat")

DARTS_V1 = Genotype(
    normal=[("sep_conv_3x3", 1), ("sep_conv_3x3", 0),
            ("skip_connect", 0), ("sep_conv_3x3", 1),
            ("skip_connect", 0), ("sep_conv_3x3", 1),
            ("sep_conv_3x3", 0), ("skip_connect", 2)],
    normal_concat=[2, 3, 4, 5],
    reduce=[("max_pool_3x3", 0), ("max_pool_3x3", 1),
            ("skip_connect", 2), ("max_pool_3x3", 0),
            ("max_pool_3x3", 0), ("skip_connect", 2),
            ("skip_connect", 2), ("avg_pool_3x3", 0)],
    reduce_concat=[2, 3, 4, 5],
)

BN_EPS = 1e-5


# ---------------------------------------------------------------------------
# Weight folding (init time, plain JAX): build lane-dense matrices.
# Lane index convention inside the kernel: l = w * C + c.
# ---------------------------------------------------------------------------
def _bn_fold(gamma, beta):
    # inference-mode BN with running_mean=0, running_var=1
    return gamma / jnp.sqrt(1.0 + BN_EPS), beta


def _banded_block(width, dx, block):
    """(W*Cin, W*Cout) matrix with `block` placed on the band  w_in = w_out + dx."""
    cin, cout = block.shape
    band = jnp.eye(width, k=-dx, dtype=jnp.float32)
    return jnp.einsum("pq,ij->piqj", band,
                      block.astype(jnp.float32)).reshape(width * cin,
                                                         width * cout)


def _fold_relu_conv_bn(w_conv, gamma, beta, width):
    """ReLUConvBN(Cin,Cout,1,1,0):  y = relu(x) @ K + b   (lane-dense)."""
    scale, shift = _bn_fold(gamma, beta)
    k = _banded_block(width, 0, w_conv) * jnp.tile(scale, width)[None, :]
    b = jnp.tile(shift, width)[None, :]
    return k.astype(jnp.float32), b.astype(jnp.float32)


def _fold_sep_stage(dw, pw, gamma, beta, width):
    """One [ReLU, dw3x3, pw1x1, BN] SepConv stage.

    Returns K (3, W*C, W*C) and b (1, W*C) such that
        y = rowshift(-1, relu(x)) @ K[0] + relu(x) @ K[1]
          + rowshift(+1, relu(x)) @ K[2] + b
    exactly reproduces dw3x3 (pad=1, stride=1) -> pw1x1 -> BN (inference).
    dw: (3, 3, C) taps [ky, kx, c];  pw: (C, C) [c_in, c_out].
    """
    c = pw.shape[0]
    scale, shift = _bn_fold(gamma, beta)
    scale_t = jnp.tile(scale, width)[None, :]
    ks = []
    for ky in range(3):
        k = jnp.zeros((width * c, width * c), jnp.float32)
        for kx in range(3):
            block = dw[ky, kx][:, None] * pw            # (c_in, c_out)
            k = k + _banded_block(width, kx - 1, block)
        ks.append(k * scale_t)
    b = jnp.tile(shift, width)[None, :]
    return jnp.stack(ks).astype(jnp.float32), b.astype(jnp.float32)


# ---------------------------------------------------------------------------
# Parameter init (deterministic, synthetic) pre-folded for the fused kernel.
# ---------------------------------------------------------------------------
def init_cell(key, genotype, c_prev_prev, c_prev, c, height, width):
    op_names, indices = zip(*genotype.normal)
    concat = list(genotype.normal_concat)
    steps = len(op_names) // 2
    sep_positions = [i for i, n in enumerate(op_names) if n == "sep_conv_3x3"]
    sep_slot = {pos: j for j, pos in enumerate(sep_positions)}

    keys = jax.random.split(key, 2 + len(sep_positions))

    def relu_conv_bn_raw(k, cin, cout):
        kw, kg, kb = jax.random.split(k, 3)
        w = jax.random.normal(kw, (cin, cout), jnp.float32) / math.sqrt(cin)
        gamma = 1.0 + 0.1 * jax.random.normal(kg, (cout,), jnp.float32)
        beta = 0.1 * jax.random.normal(kb, (cout,), jnp.float32)
        return w, gamma, beta

    def sep_conv_raw(k, ch):
        ks = jax.random.split(k, 8)

        def stage(k_dw, k_pw, k_g, k_b):
            dw = jax.random.normal(k_dw, (3, 3, ch), jnp.float32) / 3.0
            pw = jax.random.normal(k_pw, (ch, ch), jnp.float32) / math.sqrt(ch)
            gamma = 1.0 + 0.1 * jax.random.normal(k_g, (ch,), jnp.float32)
            beta = 0.1 * jax.random.normal(k_b, (ch,), jnp.float32)
            return dw, pw, gamma, beta

        return stage(*ks[:4]), stage(*ks[4:])

    raw = {
        "pre0": relu_conv_bn_raw(keys[0], c_prev_prev, c),
        "pre1": relu_conv_bn_raw(keys[1], c_prev, c),
        "seps": [sep_conv_raw(keys[2 + j], c)
                 for j in range(len(sep_positions))],
    }

    pre0_k, pre0_b = _fold_relu_conv_bn(*raw["pre0"], width)
    pre1_k, pre1_b = _fold_relu_conv_bn(*raw["pre1"], width)
    sep_k_list, sep_b_list = [], []
    for stage0, stage1 in raw["seps"]:
        for stg in (stage0, stage1):
            k, b = _fold_sep_stage(*stg, width)
            sep_k_list.append(k)            # (3, W*C, W*C)
            sep_b_list.append(b)            # (1, W*C)

    params = {
        "pre0_K": pre0_k, "pre0_b": pre0_b,
        "pre1_K": pre1_k, "pre1_b": pre1_b,
        "sep_K": jnp.concatenate(sep_k_list, axis=0),   # (n_sep*2*3, WC, WC)
        "sep_b": jnp.stack(sep_b_list, axis=0),         # (n_sep*2, 1, WC)
        # zero-filled row-shift matrices: [0] reads row h-1, [1] reads row h+1
        "shift_mats": jnp.stack([jnp.eye(height, k=-1, dtype=jnp.float32),
                                 jnp.eye(height, k=1, dtype=jnp.float32)]),
    }
    meta = {"op_names": op_names, "indices": indices, "concat": concat,
            "steps": steps, "sep_slot": sep_slot, "C": c}
    return params, raw, meta


# ---------------------------------------------------------------------------
# The fused cell kernel: whole DAG in one pallas_call invocation per image.
# ---------------------------------------------------------------------------
def _make_cell_kernel(meta, height):
    op_names = meta["op_names"]
    op_indices = meta["indices"]
    concat = meta["concat"]
    steps = meta["steps"]
    sep_slot = meta["sep_slot"]

    def kernel(s0_ref, s1_ref, p0k_ref, p0b_ref, p1k_ref, p1b_ref,
               sep_k_ref, sep_b_ref, smat_ref, out_ref):
        shift_up = smat_ref[0]      # (H,H): row h <- row h-1, zero at h=0
        shift_dn = smat_ref[1]      # (H,H): row h <- row h+1, zero at h=H-1

        def relu_conv1x1_bn(x, k_ref, b_ref):
            # ReLU -> 1x1 conv (BN scale folded into k) -> + shift
            return (jnp.dot(jnp.maximum(x, 0.0), k_ref[...],
                            preferred_element_type=jnp.float32) + b_ref[...])

        def sep_stage(x, flat):
            # [ReLU, dw3x3, pw1x1, BN] as 3 lane-dense MXU matmuls; the row
            # halo comes from the zero-filled shift matrices, the W halo is
            # baked into the banded K matrices -> no pad, no masked stores.
            xr = jnp.maximum(x, 0.0)
            xu = jnp.dot(shift_up, xr, preferred_element_type=jnp.float32)
            xd = jnp.dot(shift_dn, xr, preferred_element_type=jnp.float32)
            y = jnp.dot(xu, sep_k_ref[3 * flat + 0],
                        preferred_element_type=jnp.float32)
            y = y + jnp.dot(xr, sep_k_ref[3 * flat + 1],
                            preferred_element_type=jnp.float32)
            y = y + jnp.dot(xd, sep_k_ref[3 * flat + 2],
                            preferred_element_type=jnp.float32)
            return y + sep_b_ref[flat]

        s0 = relu_conv1x1_bn(s0_ref[0], p0k_ref, p0b_ref)
        s1 = relu_conv1x1_bn(s1_ref[0], p1k_ref, p1b_ref)
        states = [s0, s1]
        for i in range(steps):
            hs = []
            for pos in (2 * i, 2 * i + 1):
                x = states[op_indices[pos]]
                if op_names[pos] == "skip_connect":
                    hs.append(x)                    # Identity (stride 1)
                elif op_names[pos] == "sep_conv_3x3":
                    j = sep_slot[pos]
                    h = sep_stage(x, 2 * j + 0)
                    h = sep_stage(h, 2 * j + 1)
                    hs.append(h)
                else:
                    raise NotImplementedError(op_names[pos])
            states.append(hs[0] + hs[1])            # drop_path no-op (p=0)
        # channel concat folded into lane-dense output writes
        for out_j, st in enumerate(concat):
            out_ref[0, out_j * height:(out_j + 1) * height, :] = (
                states[st].astype(out_ref.dtype))

    return kernel


def cell_forward(params, meta, s0_nchw, s1_nchw):
    n, c_pp, height, width = s0_nchw.shape
    c_p = s1_nchw.shape[1]
    c = meta["C"]
    n_concat = len(meta["concat"])
    wc = width * c

    # NCHW -> lane-dense (N, H, W*C): pixel lane-major, channel lane-minor.
    s0 = jnp.transpose(s0_nchw, (0, 2, 3, 1)).reshape(n, height, width * c_pp)
    s1 = jnp.transpose(s1_nchw, (0, 2, 3, 1)).reshape(n, height, width * c_p)

    out = pl.pallas_call(
        _make_cell_kernel(meta, height),
        out_shape=jax.ShapeDtypeStruct((n, n_concat * height, wc),
                                       jnp.float32),
        grid=(n,),
        in_specs=[
            pl.BlockSpec((1, height, width * c_pp), lambda b: (b, 0, 0)),
            pl.BlockSpec((1, height, width * c_p), lambda b: (b, 0, 0)),
            pl.BlockSpec(params["pre0_K"].shape, lambda b: (0, 0)),
            pl.BlockSpec(params["pre0_b"].shape, lambda b: (0, 0)),
            pl.BlockSpec(params["pre1_K"].shape, lambda b: (0, 0)),
            pl.BlockSpec(params["pre1_b"].shape, lambda b: (0, 0)),
            pl.BlockSpec(params["sep_K"].shape, lambda b: (0, 0, 0)),
            pl.BlockSpec(params["sep_b"].shape, lambda b: (0, 0, 0)),
            pl.BlockSpec(params["shift_mats"].shape, lambda b: (0, 0, 0)),
        ],
        out_specs=pl.BlockSpec((1, n_concat * height, wc),
                               lambda b: (b, 0, 0)),
        compiler_params=pltpu.CompilerParams(
            dimension_semantics=("parallel",)),  # N=2 -> both v7x TensorCores
    )(s0, s1, params["pre0_K"], params["pre0_b"], params["pre1_K"],
      params["pre1_b"], params["sep_K"], params["sep_b"],
      params["shift_mats"])

    # lane-dense (N, n_concat*H, W*C) -> NCHW (N, n_concat*C, H, W)
    out = out.reshape(n, n_concat, height, width, c)
    out = jnp.transpose(out, (0, 1, 4, 2, 3)).reshape(
        n, n_concat * c, height, width)
    return out


# ---------------------------------------------------------------------------
# Straightforward (unfused) jnp reference mirroring the PyTorch module.
# ---------------------------------------------------------------------------
def _ref_relu_conv_bn(x, w, gamma, beta):
    y = jnp.maximum(x, 0.0)
    y = jnp.einsum("nhwi,io->nhwo", y, w,
                   precision=jax.lax.Precision.HIGHEST)
    scale, shift = _bn_fold(gamma, beta)
    return y * scale + shift


def _ref_sep_stage(x, dw, pw, gamma, beta):
    n, h, w, c = x.shape
    y = jnp.maximum(x, 0.0)
    yp = jnp.pad(y, ((0, 0), (1, 1), (1, 1), (0, 0)))
    acc = jnp.zeros_like(y)
    for ky in range(3):
        for kx in range(3):
            acc = acc + yp[:, ky:ky + h, kx:kx + w, :] * dw[ky, kx]
    z = jnp.einsum("nhwi,io->nhwo", acc, pw,
                   precision=jax.lax.Precision.HIGHEST)
    scale, shift = _bn_fold(gamma, beta)
    return z * scale + shift


def cell_forward_reference(raw, meta, s0_nchw, s1_nchw):
    s0 = jnp.transpose(s0_nchw, (0, 2, 3, 1))
    s1 = jnp.transpose(s1_nchw, (0, 2, 3, 1))
    s0 = _ref_relu_conv_bn(s0, *raw["pre0"])
    s1 = _ref_relu_conv_bn(s1, *raw["pre1"])
    states = [s0, s1]
    for i in range(meta["steps"]):
        hs = []
        for pos in (2 * i, 2 * i + 1):
            x = states[meta["indices"][pos]]
            if meta["op_names"][pos] == "skip_connect":
                hs.append(x)
            else:
                stage0, stage1 = raw["seps"][meta["sep_slot"][pos]]
                h = _ref_sep_stage(x, *stage0)
                h = _ref_sep_stage(h, *stage1)
                hs.append(h)
        states.append(hs[0] + hs[1])
    out = jnp.concatenate([states[i] for i in meta["concat"]], axis=-1)
    return jnp.transpose(out, (0, 3, 1, 2))


if __name__ == "__main__":
    key = jax.random.PRNGKey(0)
    k_params, k_s0, k_s1 = jax.random.split(key, 3)

    N, H, W = 2, 16, 16
    C_prev_prev, C_prev, C = 8, 8, 8

    params, raw, meta = init_cell(k_params, DARTS_V1,
                                  C_prev_prev, C_prev, C, H, W)

    s0 = jax.random.normal(k_s0, (N, C_prev_prev, H, W), jnp.float32)
    s1 = jax.random.normal(k_s1, (N, C_prev, H, W), jnp.float32)

    fwd = jax.jit(lambda p, a, b: cell_forward(p, meta, a, b))
    out = fwd(params, s0, s1)
    jax.block_until_ready(out)

    multiplier = len(meta["concat"])
    assert out.shape == (N, multiplier * C, H, W), out.shape
    assert bool(jnp.all(jnp.isfinite(out)))

    # cross-check the fused/folded kernel against the unfused jnp reference
    ref = cell_forward_reference(raw, meta, s0, s1)
    rel_err = float(jnp.max(jnp.abs(out - ref)) /
                    (jnp.max(jnp.abs(ref)) + 1e-6))
    assert rel_err < 5e-2, f"kernel/reference mismatch: rel_err={rel_err:.3e}"

    print("KERNEL_OK")
</pallas_src>

<mosaic_0001>
module attributes {stable_mosaic.version = 11 : i64} {
  func.func @kernel(%arg0: i32, %arg1: memref<1x16x128xf32, #tpu.memory_space<vmem>>, %arg2: memref<1x16x128xf32, #tpu.memory_space<vmem>>, %arg3: memref<128x128xf32, #tpu.memory_space<vmem>>, %arg4: memref<1x128xf32, #tpu.memory_space<vmem>>, %arg5: memref<128x128xf32, #tpu.memory_space<vmem>>, %arg6: memref<1x128xf32, #tpu.memory_space<vmem>>, %arg7: memref<30x128x128xf32, #tpu.memory_space<vmem>>, %arg8: memref<10x1x128xf32, #tpu.memory_space<vmem>>, %arg9: memref<2x16x16xf32, #tpu.memory_space<vmem>>, %arg10: memref<1x64x128xf32, #tpu.memory_space<vmem>>) attributes {dimension_semantics = [#tpu.dimension_semantics<parallel>], iteration_bounds = array<i64: 2>, scalar_prefetch = 0 : i64, scratch_operands = 0 : i64, tpu.core_type = #tpu.core_type<tc>, window_params = [{transform_indices = @transform_0, window_bounds = array<i64: 1, 16, 128>}, {transform_indices = @transform_1, window_bounds = array<i64: 1, 16, 128>}, {pipeline_mode = #tpu.pipeline_mode<synchronous>, transform_indices = @transform_2, window_bounds = array<i64: 128, 128>}, {pipeline_mode = #tpu.pipeline_mode<synchronous>, transform_indices = @transform_3, window_bounds = array<i64: 1, 128>}, {pipeline_mode = #tpu.pipeline_mode<synchronous>, transform_indices = @transform_4, window_bounds = array<i64: 128, 128>}, {pipeline_mode = #tpu.pipeline_mode<synchronous>, transform_indices = @transform_5, window_bounds = array<i64: 1, 128>}, {pipeline_mode = #tpu.pipeline_mode<synchronous>, transform_indices = @transform_6, window_bounds = array<i64: 30, 128, 128>}, {pipeline_mode = #tpu.pipeline_mode<synchronous>, transform_indices = @transform_7, window_bounds = array<i64: 10, 1, 128>}, {pipeline_mode = #tpu.pipeline_mode<synchronous>, transform_indices = @transform_8, window_bounds = array<i64: 2, 16, 16>}, {transform_indices = @transform_9, window_bounds = array<i64: 1, 64, 128>}]} {
    %c0 = arith.constant 0 : index
    %c0_0 = arith.constant 0 : index
    %c0_1 = arith.constant 0 : index
    %0 = vector.load %arg9[%c0, %c0_0, %c0_1] : memref<2x16x16xf32, #tpu.memory_space<vmem>>, vector<1x16x16xf32>
    %1 = vector.shape_cast %0 : vector<1x16x16xf32> to vector<16x16xf32>
    %c1 = arith.constant 1 : index
    %c0_2 = arith.constant 0 : index
    %c0_3 = arith.constant 0 : index
    %2 = vector.load %arg9[%c1, %c0_2, %c0_3] : memref<2x16x16xf32, #tpu.memory_space<vmem>>, vector<1x16x16xf32>
    %3 = vector.shape_cast %2 : vector<1x16x16xf32> to vector<16x16xf32>
    %c0_4 = arith.constant 0 : index
    %c0_5 = arith.constant 0 : index
    %c0_6 = arith.constant 0 : index
    %4 = vector.load %arg1[%c0_4, %c0_5, %c0_6] : memref<1x16x128xf32, #tpu.memory_space<vmem>>, vector<1x16x128xf32>
    %5 = vector.shape_cast %4 : vector<1x16x128xf32> to vector<16x128xf32>
    %cst = arith.constant 0.000000e+00 : f32
    %6 = vector.broadcast %cst : f32 to vector<16x128xf32>
    %7 = arith.maximumf %5, %6 : vector<16x128xf32>
    %c0_7 = arith.constant 0 : index
    %c0_8 = arith.constant 0 : index
    %8 = vector.load %arg3[%c0_7, %c0_8] : memref<128x128xf32, #tpu.memory_space<vmem>>, vector<128x128xf32>
    %cst_9 = arith.constant dense<0.000000e+00> : vector<16x128xf32>
    %9 = tpu.matmul %7, %8, %cst_9 {dimension_numbers = #tpu.dot_dimension_numbers<[1], [0], [0], [1], [0, 0, 1, 1], [], []>} : vector<16x128xf32>, vector<128x128xf32>, vector<16x128xf32> -> vector<16x128xf32>
    %c0_10 = arith.constant 0 : index
    %c0_11 = arith.constant 0 : index
    %10 = vector.load %arg4[%c0_10, %c0_11] : memref<1x128xf32, #tpu.memory_space<vmem>>, vector<1x128xf32>
    %11 = vector.broadcast %10 : vector<1x128xf32> to vector<16x128xf32>
    %12 = arith.addf %9, %11 : vector<16x128xf32>
    %c0_12 = arith.constant 0 : index
    %c0_13 = arith.constant 0 : index
    %c0_14 = arith.constant 0 : index
    %13 = vector.load %arg2[%c0_12, %c0_13, %c0_14] : memref<1x16x128xf32, #tpu.memory_space<vmem>>, vector<1x16x128xf32>
    %14 = vector.shape_cast %13 : vector<1x16x128xf32> to vector<16x128xf32>
    %cst_15 = arith.constant 0.000000e+00 : f32
    %15 = vector.broadcast %cst_15 : f32 to vector<16x128xf32>
    %16 = arith.maximumf %14, %15 : vector<16x128xf32>
    %c0_16 = arith.constant 0 : index
    %c0_17 = arith.constant 0 : index
    %17 = vector.load %arg5[%c0_16, %c0_17] : memref<128x128xf32, #tpu.memory_space<vmem>>, vector<128x128xf32>
    %cst_18 = arith.constant dense<0.000000e+00> : vector<16x128xf32>
    %18 = tpu.matmul %16, %17, %cst_18 {dimension_numbers = #tpu.dot_dimension_numbers<[1], [0], [0], [1], [0, 0, 1, 1], [], []>} : vector<16x128xf32>, vector<128x128xf32>, vector<16x128xf32> -> vector<16x128xf32>
    %c0_19 = arith.constant 0 : index
    %c0_20 = arith.constant 0 : index
    %19 = vector.load %arg6[%c0_19, %c0_20] : memref<1x128xf32, #tpu.memory_space<vmem>>, vector<1x128xf32>
    %20 = vector.broadcast %19 : vector<1x128xf32> to vector<16x128xf32>
    %21 = arith.addf %18, %20 : vector<16x128xf32>
    %cst_21 = arith.constant 0.000000e+00 : f32
    %22 = vector.broadcast %cst_21 : f32 to vector<16x128xf32>
    %23 = arith.maximumf %21, %22 : vector<16x128xf32>
    %cst_22 = arith.constant dense<0.000000e+00> : vector<16x128xf32>
    %24 = tpu.matmul %1, %23, %cst_22 {dimension_numbers = #tpu.dot_dimension_numbers<[1], [0], [0], [1], [0, 0, 1, 1], [], []>} : vector<16x16xf32>, vector<16x128xf32>, vector<16x128xf32> -> vector<16x128xf32>
    %cst_23 = arith.constant dense<0.000000e+00> : vector<16x128xf32>
    %25 = tpu.matmul %3, %23, %cst_23 {dimension_numbers = #tpu.dot_dimension_numbers<[1], [0], [0], [1], [0, 0, 1, 1], [], []>} : vector<16x16xf32>, vector<16x128xf32>, vector<16x128xf32> -> vector<16x128xf32>
    %c0_24 = arith.constant 0 : index
    %c0_25 = arith.constant 0 : index
    %c0_26 = arith.constant 0 : index
    %26 = vector.load %arg7[%c0_24, %c0_25, %c0_26] : memref<30x128x128xf32, #tpu.memory_space<vmem>>, vector<1x128x128xf32>
    %27 = vector.shape_cast %26 : vector<1x128x128xf32> to vector<128x128xf32>
    %cst_27 = arith.constant dense<0.000000e+00> : vector<16x128xf32>
    %28 = tpu.matmul %24, %27, %cst_27 {dimension_numbers = #tpu.dot_dimension_numbers<[1], [0], [0], [1], [0, 0, 1, 1], [], []>} : vector<16x128xf32>, vector<128x128xf32>, vector<16x128xf32> -> vector<16x128xf32>
    %c1_28 = arith.constant 1 : index
    %c0_29 = arith.constant 0 : index
    %c0_30 = arith.constant 0 : index
    %29 = vector.load %arg7[%c1_28, %c0_29, %c0_30] : memref<30x128x128xf32, #tpu.memory_space<vmem>>, vector<1x128x128xf32>
    %30 = vector.shape_cast %29 : vector<1x128x128xf32> to vector<128x128xf32>
    %cst_31 = arith.constant dense<0.000000e+00> : vector<16x128xf32>
    %31 = tpu.matmul %23, %30, %cst_31 {dimension_numbers = #tpu.dot_dimension_numbers<[1], [0], [0], [1], [0, 0, 1, 1], [], []>} : vector<16x128xf32>, vector<128x128xf32>, vector<16x128xf32> -> vector<16x128xf32>
    %32 = arith.addf %28, %31 : vector<16x128xf32>
    %c2 = arith.constant 2 : index
    %c0_32 = arith.constant 0 : index
    %c0_33 = arith.constant 0 : index
    %33 = vector.load %arg7[%c2, %c0_32, %c0_33] : memref<30x128x128xf32, #tpu.memory_space<vmem>>, vector<1x128x128xf32>
    %34 = vector.shape_cast %33 : vector<1x128x128xf32> to vector<128x128xf32>
    %cst_34 = arith.constant dense<0.000000e+00> : vector<16x128xf32>
    %35 = tpu.matmul %25, %34, %cst_34 {dimension_numbers = #tpu.dot_dimension_numbers<[1], [0], [0], [1], [0, 0, 1, 1], [], []>} : vector<16x128xf32>, vector<128x128xf32>, vector<16x128xf32> -> vector<16x128xf32>
    %36 = arith.addf %32, %35 : vector<16x128xf32>
    %c0_35 = arith.constant 0 : index
    %c0_36 = arith.constant 0 : index
    %c0_37 = arith.constant 0 : index
    %37 = vector.load %arg8[%c0_35, %c0_36, %c0_37] : memref<10x1x128xf32, #tpu.memory_space<vmem>>, vector<1x1x128xf32>
    %38 = vector.shape_cast %37 : vector<1x1x128xf32> to vector<1x128xf32>
    %39 = vector.broadcast %38 : vector<1x128xf32> to vector<16x128xf32>
    %40 = arith.addf %36, %39 : vector<16x128xf32>
    %cst_38 = arith.constant 0.000000e+00 : f32
    %41 = vector.broadcast %cst_38 : f32 to vector<16x128xf32>
    %42 = arith.maximumf %40, %41 : vector<16x128xf32>
    %cst_39 = arith.constant dense<0.000000e+00> : vector<16x128xf32>
    %43 = tpu.matmul %1, %42, %cst_39 {dimension_numbers = #tpu.dot_dimension_numbers<[1], [0], [0], [1], [0, 0, 1, 1], [], []>} : vector<16x16xf32>, vector<16x128xf32>, vector<16x128xf32> -> vector<16x128xf32>
    %cst_40 = arith.constant dense<0.000000e+00> : vector<16x128xf32>
    %44 = tpu.matmul %3, %42, %cst_40 {dimension_numbers = #tpu.dot_dimension_numbers<[1], [0], [0], [1], [0, 0, 1, 1], [], []>} : vector<16x16xf32>, vector<16x128xf32>, vector<16x128xf32> -> vector<16x128xf32>
    %c3 = arith.constant 3 : index
    %c0_41 = arith.constant 0 : index
    %c0_42 = arith.constant 0 : index
    %45 = vector.load %arg7[%c3, %c0_41, %c0_42] : memref<30x128x128xf32, #tpu.memory_space<vmem>>, vector<1x128x128xf32>
    %46 = vector.shape_cast %45 : vector<1x128x128xf32> to vector<128x128xf32>
    %cst_43 = arith.constant dense<0.000000e+00> : vector<16x128xf32>
    %47 = tpu.matmul %43, %46, %cst_43 {dimension_numbers = #tpu.dot_dimension_numbers<[1], [0], [0], [1], [0, 0, 1, 1], [], []>} : vector<16x128xf32>, vector<128x128xf32>, vector<16x128xf32> -> vector<16x128xf32>
    %c4 = arith.constant 4 : index
    %c0_44 = arith.constant 0 : index
    %c0_45 = arith.constant 0 : index
    %48 = vector.load %arg7[%c4, %c0_44, %c0_45] : memref<30x128x128xf32, #tpu.memory_space<vmem>>, vector<1x128x128xf32>
    %49 = vector.shape_cast %48 : vector<1x128x128xf32> to vector<128x128xf32>
    %cst_46 = arith.constant dense<0.000000e+00> : vector<16x128xf32>
    %50 = tpu.matmul %42, %49, %cst_46 {dimension_numbers = #tpu.dot_dimension_numbers<[1], [0], [0], [1], [0, 0, 1, 1], [], []>} : vector<16x128xf32>, vector<128x128xf32>, vector<16x128xf32> -> vector<16x128xf32>
    %51 = arith.addf %47, %50 : vector<16x128xf32>
    %c5 = arith.constant 5 : index
    %c0_47 = arith.constant 0 : index
    %c0_48 = arith.constant 0 : index
    %52 = vector.load %arg7[%c5, %c0_47, %c0_48] : memref<30x128x128xf32, #tpu.memory_space<vmem>>, vector<1x128x128xf32>
    %53 = vector.shape_cast %52 : vector<1x128x128xf32> to vector<128x128xf32>
    %cst_49 = arith.constant dense<0.000000e+00> : vector<16x128xf32>
    %54 = tpu.matmul %44, %53, %cst_49 {dimension_numbers = #tpu.dot_dimension_numbers<[1], [0], [0], [1], [0, 0, 1, 1], [], []>} : vector<16x128xf32>, vector<128x128xf32>, vector<16x128xf32> -> vector<16x128xf32>
    %55 = arith.addf %51, %54 : vector<16x128xf32>
    %c1_50 = arith.constant 1 : index
    %c0_51 = arith.constant 0 : index
    %c0_52 = arith.constant 0 : index
    %56 = vector.load %arg8[%c1_50, %c0_51, %c0_52] : memref<10x1x128xf32, #tpu.memory_space<vmem>>, vector<1x1x128xf32>
    %57 = vector.shape_cast %56 : vector<1x1x128xf32> to vector<1x128xf32>
    %58 = vector.broadcast %57 : vector<1x128xf32> to vector<16x128xf32>
    %59 = arith.addf %55, %58 : vector<16x128xf32>
    %cst_53 = arith.constant 0.000000e+00 : f32
    %60 = vector.broadcast %cst_53 : f32 to vector<16x128xf32>
    %61 = arith.maximumf %12, %60 : vector<16x128xf32>
    %cst_54 = arith.constant dense<0.000000e+00> : vector<16x128xf32>
    %62 = tpu.matmul %1, %61, %cst_54 {dimension_numbers = #tpu.dot_dimension_numbers<[1], [0], [0], [1], [0, 0, 1, 1], [], []>} : vector<16x16xf32>, vector<16x128xf32>, vector<16x128xf32> -> vector<16x128xf32>
    %cst_55 = arith.constant dense<0.000000e+00> : vector<16x128xf32>
    %63 = tpu.matmul %3, %61, %cst_55 {dimension_numbers = #tpu.dot_dimension_numbers<[1], [0], [0], [1], [0, 0, 1, 1], [], []>} : vector<16x16xf32>, vector<16x128xf32>, vector<16x128xf32> -> vector<16x128xf32>
    %c6 = arith.constant 6 : index
    %c0_56 = arith.constant 0 : index
    %c0_57 = arith.constant 0 : index
    %64 = vector.load %arg7[%c6, %c0_56, %c0_57] : memref<30x128x128xf32, #tpu.memory_space<vmem>>, vector<1x128x128xf32>
    %65 = vector.shape_cast %64 : vector<1x128x128xf32> to vector<128x128xf32>
    %cst_58 = arith.constant dense<0.000000e+00> : vector<16x128xf32>
    %66 = tpu.matmul %62, %65, %cst_58 {dimension_numbers = #tpu.dot_dimension_numbers<[1], [0], [0], [1], [0, 0, 1, 1], [], []>} : vector<16x128xf32>, vector<128x128xf32>, vector<16x128xf32> -> vector<16x128xf32>
    %c7 = arith.constant 7 : index
    %c0_59 = arith.constant 0 : index
    %c0_60 = arith.constant 0 : index
    %67 = vector.load %arg7[%c7, %c0_59, %c0_60] : memref<30x128x128xf32, #tpu.memory_space<vmem>>, vector<1x128x128xf32>
    %68 = vector.shape_cast %67 : vector<1x128x128xf32> to vector<128x128xf32>
    %cst_61 = arith.constant dense<0.000000e+00> : vector<16x128xf32>
    %69 = tpu.matmul %61, %68, %cst_61 {dimension_numbers = #tpu.dot_dimension_numbers<[1], [0], [0], [1], [0, 0, 1, 1], [], []>} : vector<16x128xf32>, vector<128x128xf32>, vector<16x128xf32> -> vector<16x128xf32>
    %70 = arith.addf %66, %69 : vector<16x128xf32>
    %c8 = arith.constant 8 : index
    %c0_62 = arith.constant 0 : index
    %c0_63 = arith.constant 0 : index
    %71 = vector.load %arg7[%c8, %c0_62, %c0_63] : memref<30x128x128xf32, #tpu.memory_space<vmem>>, vector<1x128x128xf32>
    %72 = vector.shape_cast %71 : vector<1x128x128xf32> to vector<128x128xf32>
    %cst_64 = arith.constant dense<0.000000e+00> : vector<16x128xf32>
    %73 = tpu.matmul %63, %72, %cst_64 {dimension_numbers = #tpu.dot_dimension_numbers<[1], [0], [0], [1], [0, 0, 1, 1], [], []>} : vector<16x128xf32>, vector<128x128xf32>, vector<16x128xf32> -> vector<16x128xf32>
    %74 = arith.addf %70, %73 : vector<16x128xf32>
    %c2_65 = arith.constant 2 : index
    %c0_66 = arith.constant 0 : index
    %c0_67 = arith.constant 0 : index
    %75 = vector.load %arg8[%c2_65, %c0_66, %c0_67] : memref<10x1x128xf32, #tpu.memory_space<vmem>>, vector<1x1x128xf32>
    %76 = vector.shape_cast %75 : vector<1x1x128xf32> to vector<1x128xf32>
    %77 = vector.broadcast %76 : vector<1x128xf32> to vector<16x128xf32>
    %78 = arith.addf %74, %77 : vector<16x128xf32>
    %cst_68 = arith.constant 0.000000e+00 : f32
    %79 = vector.broadcast %cst_68 : f32 to vector<16x128xf32>
    %80 = arith.maximumf %78, %79 : vector<16x128xf32>
    %cst_69 = arith.constant dense<0.000000e+00> : vector<16x128xf32>
    %81 = tpu.matmul %1, %80, %cst_69 {dimension_numbers = #tpu.dot_dimension_numbers<[1], [0], [0], [1], [0, 0, 1, 1], [], []>} : vector<16x16xf32>, vector<16x128xf32>, vector<16x128xf32> -> vector<16x128xf32>
    %cst_70 = arith.constant dense<0.000000e+00> : vector<16x128xf32>
    %82 = tpu.matmul %3, %80, %cst_70 {dimension_numbers = #tpu.dot_dimension_numbers<[1], [0], [0], [1], [0, 0, 1, 1], [], []>} : vector<16x16xf32>, vector<16x128xf32>, vector<16x128xf32> -> vector<16x128xf32>
    %c9 = arith.constant 9 : index
    %c0_71 = arith.constant 0 : index
    %c0_72 = arith.constant 0 : index
    %83 = vector.load %arg7[%c9, %c0_71, %c0_72] : memref<30x128x128xf32, #tpu.memory_space<vmem>>, vector<1x128x128xf32>
    %84 = vector.shape_cast %83 : vector<1x128x128xf32> to vector<128x128xf32>
    %cst_73 = arith.constant dense<0.000000e+00> : vector<16x128xf32>
    %85 = tpu.matmul %81, %84, %cst_73 {dimension_numbers = #tpu.dot_dimension_numbers<[1], [0], [0], [1], [0, 0, 1, 1], [], []>} : vector<16x128xf32>, vector<128x128xf32>, vector<16x128xf32> -> vector<16x128xf32>
    %c10 = arith.constant 10 : index
    %c0_74 = arith.constant 0 : index
    %c0_75 = arith.constant 0 : index
    %86 = vector.load %arg7[%c10, %c0_74, %c0_75] : memref<30x128x128xf32, #tpu.memory_space<vmem>>, vector<1x128x128xf32>
    %87 = vector.shape_cast %86 : vector<1x128x128xf32> to vector<128x128xf32>
    %cst_76 = arith.constant dense<0.000000e+00> : vector<16x128xf32>
    %88 = tpu.matmul %80, %87, %cst_76 {dimension_numbers = #tpu.dot_dimension_numbers<[1], [0], [0], [1], [0, 0, 1, 1], [], []>} : vector<16x128xf32>, vector<128x128xf32>, vector<16x128xf32> -> vector<16x128xf32>
    %89 = arith.addf %85, %88 : vector<16x128xf32>
    %c11 = arith.constant 11 : index
    %c0_77 = arith.constant 0 : index
    %c0_78 = arith.constant 0 : index
    %90 = vector.load %arg7[%c11, %c0_77, %c0_78] : memref<30x128x128xf32, #tpu.memory_space<vmem>>, vector<1x128x128xf32>
    %91 = vector.shape_cast %90 : vector<1x128x128xf32> to vector<128x128xf32>
    %cst_79 = arith.constant dense<0.000000e+00> : vector<16x128xf32>
    %92 = tpu.matmul %82, %91, %cst_79 {dimension_numbers = #tpu.dot_dimension_numbers<[1], [0], [0], [1], [0, 0, 1, 1], [], []>} : vector<16x128xf32>, vector<128x128xf32>, vector<16x128xf32> -> vector<16x128xf32>
    %93 = arith.addf %89, %92 : vector<16x128xf32>
    %c3_80 = arith.constant 3 : index
    %c0_81 = arith.constant 0 : index
    %c0_82 = arith.constant 0 : index
    %94 = vector.load %arg8[%c3_80, %c0_81, %c0_82] : memref<10x1x128xf32, #tpu.memory_space<vmem>>, vector<1x1x128xf32>
    %95 = vector.shape_cast %94 : vector<1x1x128xf32> to vector<1x128xf32>
    %96 = vector.broadcast %95 : vector<1x128xf32> to vector<16x128xf32>
    %97 = arith.addf %93, %96 : vector<16x128xf32>
    %98 = arith.addf %59, %97 : vector<16x128xf32>
    %cst_83 = arith.constant 0.000000e+00 : f32
    %99 = vector.broadcast %cst_83 : f32 to vector<16x128xf32>
    %100 = arith.maximumf %21, %99 : vector<16x128xf32>
    %cst_84 = arith.constant dense<0.000000e+00> : vector<16x128xf32>
    %101 = tpu.matmul %1, %100, %cst_84 {dimension_numbers = #tpu.dot_dimension_numbers<[1], [0], [0], [1], [0, 0, 1, 1], [], []>} : vector<16x16xf32>, vector<16x128xf32>, vector<16x128xf32> -> vector<16x128xf32>
    %cst_85 = arith.constant dense<0.000000e+00> : vector<16x128xf32>
    %102 = tpu.matmul %3, %100, %cst_85 {dimension_numbers = #tpu.dot_dimension_numbers<[1], [0], [0], [1], [0, 0, 1, 1], [], []>} : vector<16x16xf32>, vector<16x128xf32>, vector<16x128xf32> -> vector<16x128xf32>
    %c12 = arith.constant 12 : index
    %c0_86 = arith.constant 0 : index
    %c0_87 = arith.constant 0 : index
    %103 = vector.load %arg7[%c12, %c0_86, %c0_87] : memref<30x128x128xf32, #tpu.memory_space<vmem>>, vector<1x128x128xf32>
    %104 = vector.shape_cast %103 : vector<1x128x128xf32> to vector<128x128xf32>
    %cst_88 = arith.constant dense<0.000000e+00> : vector<16x128xf32>
    %105 = tpu.matmul %101, %104, %cst_88 {dimension_numbers = #tpu.dot_dimension_numbers<[1], [0], [0], [1], [0, 0, 1, 1], [], []>} : vector<16x128xf32>, vector<128x128xf32>, vector<16x128xf32> -> vector<16x128xf32>
    %c13 = arith.constant 13 : index
    %c0_89 = arith.constant 0 : index
    %c0_90 = arith.constant 0 : index
    %106 = vector.load %arg7[%c13, %c0_89, %c0_90] : memref<30x128x128xf32, #tpu.memory_space<vmem>>, vector<1x128x128xf32>
    %107 = vector.shape_cast %106 : vector<1x128x128xf32> to vector<128x128xf32>
    %cst_91 = arith.constant dense<0.000000e+00> : vector<16x128xf32>
    %108 = tpu.matmul %100, %107, %cst_91 {dimension_numbers = #tpu.dot_dimension_numbers<[1], [0], [0], [1], [0, 0, 1, 1], [], []>} : vector<16x128xf32>, vector<128x128xf32>, vector<16x128xf32> -> vector<16x128xf32>
    %109 = arith.addf %105, %108 : vector<16x128xf32>
    %c14 = arith.constant 14 : index
    %c0_92 = arith.constant 0 : index
    %c0_93 = arith.constant 0 : index
    %110 = vector.load %arg7[%c14, %c0_92, %c0_93] : memref<30x128x128xf32, #tpu.memory_space<vmem>>, vector<1x128x128xf32>
    %111 = vector.shape_cast %110 : vector<1x128x128xf32> to vector<128x128xf32>
    %cst_94 = arith.constant dense<0.000000e+00> : vector<16x128xf32>
    %112 = tpu.matmul %102, %111, %cst_94 {dimension_numbers = #tpu.dot_dimension_numbers<[1], [0], [0], [1], [0, 0, 1, 1], [], []>} : vector<16x128xf32>, vector<128x128xf32>, vector<16x128xf32> -> vector<16x128xf32>
    %113 = arith.addf %109, %112 : vector<16x128xf32>
    %c4_95 = arith.constant 4 : index
    %c0_96 = arith.constant 0 : index
    %c0_97 = arith.constant 0 : index
    %114 = vector.load %arg8[%c4_95, %c0_96, %c0_97] : memref<10x1x128xf32, #tpu.memory_space<vmem>>, vector<1x1x128xf32>
    %115 = vector.shape_cast %114 : vector<1x1x128xf32> to vector<1x128xf32>
    %116 = vector.broadcast %115 : vector<1x128xf32> to vector<16x128xf32>
    %117 = arith.addf %113, %116 : vector<16x128xf32>
    %cst_98 = arith.constant 0.000000e+00 : f32
    %118 = vector.broadcast %cst_98 : f32 to vector<16x128xf32>
    %119 = arith.maximumf %117, %118 : vector<16x128xf32>
    %cst_99 = arith.constant dense<0.000000e+00> : vector<16x128xf32>
    %120 = tpu.matmul %1, %119, %cst_99 {dimension_numbers = #tpu.dot_dimension_numbers<[1], [0], [0], [1], [0, 0, 1, 1], [], []>} : vector<16x16xf32>, vector<16x128xf32>, vector<16x128xf32> -> vector<16x128xf32>
    %cst_100 = arith.constant dense<0.000000e+00> : vector<16x128xf32>
    %121 = tpu.matmul %3, %119, %cst_100 {dimension_numbers = #tpu.dot_dimension_numbers<[1], [0], [0], [1], [0, 0, 1, 1], [], []>} : vector<16x16xf32>, vector<16x128xf32>, vector<16x128xf32> -> vector<16x128xf32>
    %c15 = arith.constant 15 : index
    %c0_101 = arith.constant 0 : index
    %c0_102 = arith.constant 0 : index
    %122 = vector.load %arg7[%c15, %c0_101, %c0_102] : memref<30x128x128xf32, #tpu.memory_space<vmem>>, vector<1x128x128xf32>
    %123 = vector.shape_cast %122 : vector<1x128x128xf32> to vector<128x128xf32>
    %cst_103 = arith.constant dense<0.000000e+00> : vector<16x128xf32>
    %124 = tpu.matmul %120, %123, %cst_103 {dimension_numbers = #tpu.dot_dimension_numbers<[1], [0], [0], [1], [0, 0, 1, 1], [], []>} : vector<16x128xf32>, vector<128x128xf32>, vector<16x128xf32> -> vector<16x128xf32>
    %c16 = arith.constant 16 : index
    %c0_104 = arith.constant 0 : index
    %c0_105 = arith.constant 0 : index
    %125 = vector.load %arg7[%c16, %c0_104, %c0_105] : memref<30x128x128xf32, #tpu.memory_space<vmem>>, vector<1x128x128xf32>
    %126 = vector.shape_cast %125 : vector<1x128x128xf32> to vector<128x128xf32>
    %cst_106 = arith.constant dense<0.000000e+00> : vector<16x128xf32>
    %127 = tpu.matmul %119, %126, %cst_106 {dimension_numbers = #tpu.dot_dimension_numbers<[1], [0], [0], [1], [0, 0, 1, 1], [], []>} : vector<16x128xf32>, vector<128x128xf32>, vector<16x128xf32> -> vector<16x128xf32>
    %128 = arith.addf %124, %127 : vector<16x128xf32>
    %c17 = arith.constant 17 : index
    %c0_107 = arith.constant 0 : index
    %c0_108 = arith.constant 0 : index
    %129 = vector.load %arg7[%c17, %c0_107, %c0_108] : memref<30x128x128xf32, #tpu.memory_space<vmem>>, vector<1x128x128xf32>
    %130 = vector.shape_cast %129 : vector<1x128x128xf32> to vector<128x128xf32>
    %cst_109 = arith.constant dense<0.000000e+00> : vector<16x128xf32>
    %131 = tpu.matmul %121, %130, %cst_109 {dimension_numbers = #tpu.dot_dimension_numbers<[1], [0], [0], [1], [0, 0, 1, 1], [], []>} : vector<16x128xf32>, vector<128x128xf32>, vector<16x128xf32> -> vector<16x128xf32>
    %132 = arith.addf %128, %131 : vector<16x128xf32>
    %c5_110 = arith.constant 5 : index
    %c0_111 = arith.constant 0 : index
    %c0_112 = arith.constant 0 : index
    %133 = vector.load %arg8[%c5_110, %c0_111, %c0_112] : memref<10x1x128xf32, #tpu.memory_space<vmem>>, vector<1x1x128xf32>
    %134 = vector.shape_cast %133 : vector<1x1x128xf32> to vector<1x128xf32>
    %135 = vector.broadcast %134 : vector<1x128xf32> to vector<16x128xf32>
    %136 = arith.addf %132, %135 : vector<16x128xf32>
    %137 = arith.addf %12, %136 : vector<16x128xf32>
    %cst_113 = arith.constant 0.000000e+00 : f32
    %138 = vector.broadcast %cst_113 : f32 to vector<16x128xf32>
    %139 = arith.maximumf %21, %138 : vector<16x128xf32>
    %cst_114 = arith.constant dense<0.000000e+00> : vector<16x128xf32>
    %140 = tpu.matmul %1, %139, %cst_114 {dimension_numbers = #tpu.dot_dimension_numbers<[1], [0], [0], [1], [0, 0, 1, 1], [], []>} : vector<16x16xf32>, vector<16x128xf32>, vector<16x128xf32> -> vector<16x128xf32>
    %cst_115 = arith.constant dense<0.000000e+00> : vector<16x128xf32>
    %141 = tpu.matmul %3, %139, %cst_115 {dimension_numbers = #tpu.dot_dimension_numbers<[1], [0], [0], [1], [0, 0, 1, 1], [], []>} : vector<16x16xf32>, vector<16x128xf32>, vector<16x128xf32> -> vector<16x128xf32>
    %c18 = arith.constant 18 : index
    %c0_116 = arith.constant 0 : index
    %c0_117 = arith.constant 0 : index
    %142 = vector.load %arg7[%c18, %c0_116, %c0_117] : memref<30x128x128xf32, #tpu.memory_space<vmem>>, vector<1x128x128xf32>
    %143 = vector.shape_cast %142 : vector<1x128x128xf32> to vector<128x128xf32>
    %cst_118 = arith.constant dense<0.000000e+00> : vector<16x128xf32>
    %144 = tpu.matmul %140, %143, %cst_118 {dimension_numbers = #tpu.dot_dimension_numbers<[1], [0], [0], [1], [0, 0, 1, 1], [], []>} : vector<16x128xf32>, vector<128x128xf32>, vector<16x128xf32> -> vector<16x128xf32>
    %c19 = arith.constant 19 : index
    %c0_119 = arith.constant 0 : index
    %c0_120 = arith.constant 0 : index
    %145 = vector.load %arg7[%c19, %c0_119, %c0_120] : memref<30x128x128xf32, #tpu.memory_space<vmem>>, vector<1x128x128xf32>
    %146 = vector.shape_cast %145 : vector<1x128x128xf32> to vector<128x128xf32>
    %cst_121 = arith.constant dense<0.000000e+00> : vector<16x128xf32>
    %147 = tpu.matmul %139, %146, %cst_121 {dimension_numbers = #tpu.dot_dimension_numbers<[1], [0], [0], [1], [0, 0, 1, 1], [], []>} : vector<16x128xf32>, vector<128x128xf32>, vector<16x128xf32> -> vector<16x128xf32>
    %148 = arith.addf %144, %147 : vector<16x128xf32>
    %c20 = arith.constant 20 : index
    %c0_122 = arith.constant 0 : index
    %c0_123 = arith.constant 0 : index
    %149 = vector.load %arg7[%c20, %c0_122, %c0_123] : memref<30x128x128xf32, #tpu.memory_space<vmem>>, vector<1x128x128xf32>
    %150 = vector.shape_cast %149 : vector<1x128x128xf32> to vector<128x128xf32>
    %cst_124 = arith.constant dense<0.000000e+00> : vector<16x128xf32>
    %151 = tpu.matmul %141, %150, %cst_124 {dimension_numbers = #tpu.dot_dimension_numbers<[1], [0], [0], [1], [0, 0, 1, 1], [], []>} : vector<16x128xf32>, vector<128x128xf32>, vector<16x128xf32> -> vector<16x128xf32>
    %152 = arith.addf %148, %151 : vector<16x128xf32>
    %c6_125 = arith.constant 6 : index
    %c0_126 = arith.constant 0 : index
    %c0_127 = arith.constant 0 : index
    %153 = vector.load %arg8[%c6_125, %c0_126, %c0_127] : memref<10x1x128xf32, #tpu.memory_space<vmem>>, vector<1x1x128xf32>
    %154 = vector.shape_cast %153 : vector<1x1x128xf32> to vector<1x128xf32>
    %155 = vector.broadcast %154 : vector<1x128xf32> to vector<16x128xf32>
    %156 = arith.addf %152, %155 : vector<16x128xf32>
    %cst_128 = arith.constant 0.000000e+00 : f32
    %157 = vector.broadcast %cst_128 : f32 to vector<16x128xf32>
    %158 = arith.maximumf %156, %157 : vector<16x128xf32>
    %cst_129 = arith.constant dense<0.000000e+00> : vector<16x128xf32>
    %159 = tpu.matmul %1, %158, %cst_129 {dimension_numbers = #tpu.dot_dimension_numbers<[1], [0], [0], [1], [0, 0, 1, 1], [], []>} : vector<16x16xf32>, vector<16x128xf32>, vector<16x128xf32> -> vector<16x128xf32>
    %cst_130 = arith.constant dense<0.000000e+00> : vector<16x128xf32>
    %160 = tpu.matmul %3, %158, %cst_130 {dimension_numbers = #tpu.dot_dimension_numbers<[1], [0], [0], [1], [0, 0, 1, 1], [], []>} : vector<16x16xf32>, vector<16x128xf32>, vector<16x128xf32> -> vector<16x128xf32>
    %c21 = arith.constant 21 : index
    %c0_131 = arith.constant 0 : index
    %c0_132 = arith.constant 0 : index
    %161 = vector.load %arg7[%c21, %c0_131, %c0_132] : memref<30x128x128xf32, #tpu.memory_space<vmem>>, vector<1x128x128xf32>
    %162 = vector.shape_cast %161 : vector<1x128x128xf32> to vector<128x128xf32>
    %cst_133 = arith.constant dense<0.000000e+00> : vector<16x128xf32>
    %163 = tpu.matmul %159, %162, %cst_133 {dimension_numbers = #tpu.dot_dimension_numbers<[1], [0], [0], [1], [0, 0, 1, 1], [], []>} : vector<16x128xf32>, vector<128x128xf32>, vector<16x128xf32> -> vector<16x128xf32>
    %c22 = arith.constant 22 : index
    %c0_134 = arith.constant 0 : index
    %c0_135 = arith.constant 0 : index
    %164 = vector.load %arg7[%c22, %c0_134, %c0_135] : memref<30x128x128xf32, #tpu.memory_space<vmem>>, vector<1x128x128xf32>
    %165 = vector.shape_cast %164 : vector<1x128x128xf32> to vector<128x128xf32>
    %cst_136 = arith.constant dense<0.000000e+00> : vector<16x128xf32>
    %166 = tpu.matmul %158, %165, %cst_136 {dimension_numbers = #tpu.dot_dimension_numbers<[1], [0], [0], [1], [0, 0, 1, 1], [], []>} : vector<16x128xf32>, vector<128x128xf32>, vector<16x128xf32> -> vector<16x128xf32>
    %167 = arith.addf %163, %166 : vector<16x128xf32>
    %c23 = arith.constant 23 : index
    %c0_137 = arith.constant 0 : index
    %c0_138 = arith.constant 0 : index
    %168 = vector.load %arg7[%c23, %c0_137, %c0_138] : memref<30x128x128xf32, #tpu.memory_space<vmem>>, vector<1x128x128xf32>
    %169 = vector.shape_cast %168 : vector<1x128x128xf32> to vector<128x128xf32>
    %cst_139 = arith.constant dense<0.000000e+00> : vector<16x128xf32>
    %170 = tpu.matmul %160, %169, %cst_139 {dimension_numbers = #tpu.dot_dimension_numbers<[1], [0], [0], [1], [0, 0, 1, 1], [], []>} : vector<16x128xf32>, vector<128x128xf32>, vector<16x128xf32> -> vector<16x128xf32>
    %171 = arith.addf %167, %170 : vector<16x128xf32>
    %c7_140 = arith.constant 7 : index
    %c0_141 = arith.constant 0 : index
    %c0_142 = arith.constant 0 : index
    %172 = vector.load %arg8[%c7_140, %c0_141, %c0_142] : memref<10x1x128xf32, #tpu.memory_space<vmem>>, vector<1x1x128xf32>
    %173 = vector.shape_cast %172 : vector<1x1x128xf32> to vector<1x128xf32>
    %174 = vector.broadcast %173 : vector<1x128xf32> to vector<16x128xf32>
    %175 = arith.addf %171, %174 : vector<16x128xf32>
    %176 = arith.addf %12, %175 : vector<16x128xf32>
    %cst_143 = arith.constant 0.000000e+00 : f32
    %177 = vector.broadcast %cst_143 : f32 to vector<16x128xf32>
    %178 = arith.maximumf %12, %177 : vector<16x128xf32>
    %cst_144 = arith.constant dense<0.000000e+00> : vector<16x128xf32>
    %179 = tpu.matmul %1, %178, %cst_144 {dimension_numbers = #tpu.dot_dimension_numbers<[1], [0], [0], [1], [0, 0, 1, 1], [], []>} : vector<16x16xf32>, vector<16x128xf32>, vector<16x128xf32> -> vector<16x128xf32>
    %cst_145 = arith.constant dense<0.000000e+00> : vector<16x128xf32>
    %180 = tpu.matmul %3, %178, %cst_145 {dimension_numbers = #tpu.dot_dimension_numbers<[1], [0], [0], [1], [0, 0, 1, 1], [], []>} : vector<16x16xf32>, vector<16x128xf32>, vector<16x128xf32> -> vector<16x128xf32>
    %c24 = arith.constant 24 : index
    %c0_146 = arith.constant 0 : index
    %c0_147 = arith.constant 0 : index
    %181 = vector.load %arg7[%c24, %c0_146, %c0_147] : memref<30x128x128xf32, #tpu.memory_space<vmem>>, vector<1x128x128xf32>
    %182 = vector.shape_cast %181 : vector<1x128x128xf32> to vector<128x128xf32>
    %cst_148 = arith.constant dense<0.000000e+00> : vector<16x128xf32>
    %183 = tpu.matmul %179, %182, %cst_148 {dimension_numbers = #tpu.dot_dimension_numbers<[1], [0], [0], [1], [0, 0, 1, 1], [], []>} : vector<16x128xf32>, vector<128x128xf32>, vector<16x128xf32> -> vector<16x128xf32>
    %c25 = arith.constant 25 : index
    %c0_149 = arith.constant 0 : index
    %c0_150 = arith.constant 0 : index
    %184 = vector.load %arg7[%c25, %c0_149, %c0_150] : memref<30x128x128xf32, #tpu.memory_space<vmem>>, vector<1x128x128xf32>
    %185 = vector.shape_cast %184 : vector<1x128x128xf32> to vector<128x128xf32>
    %cst_151 = arith.constant dense<0.000000e+00> : vector<16x128xf32>
    %186 = tpu.matmul %178, %185, %cst_151 {dimension_numbers = #tpu.dot_dimension_numbers<[1], [0], [0], [1], [0, 0, 1, 1], [], []>} : vector<16x128xf32>, vector<128x128xf32>, vector<16x128xf32> -> vector<16x128xf32>
    %187 = arith.addf %183, %186 : vector<16x128xf32>
    %c26 = arith.constant 26 : index
    %c0_152 = arith.constant 0 : index
    %c0_153 = arith.constant 0 : index
    %188 = vector.load %arg7[%c26, %c0_152, %c0_153] : memref<30x128x128xf32, #tpu.memory_space<vmem>>, vector<1x128x128xf32>
    %189 = vector.shape_cast %188 : vector<1x128x128xf32> to vector<128x128xf32>
    %cst_154 = arith.constant dense<0.000000e+00> : vector<16x128xf32>
    %190 = tpu.matmul %180, %189, %cst_154 {dimension_numbers = #tpu.dot_dimension_numbers<[1], [0], [0], [1], [0, 0, 1, 1], [], []>} : vector<16x128xf32>, vector<128x128xf32>, vector<16x128xf32> -> vector<16x128xf32>
    %191 = arith.addf %187, %190 : vector<16x128xf32>
    %c8_155 = arith.constant 8 : index
    %c0_156 = arith.constant 0 : index
    %c0_157 = arith.constant 0 : index
    %192 = vector.load %arg8[%c8_155, %c0_156, %c0_157] : memref<10x1x128xf32, #tpu.memory_space<vmem>>, vector<1x1x128xf32>
    %193 = vector.shape_cast %192 : vector<1x1x128xf32> to vector<1x128xf32>
    %194 = vector.broadcast %193 : vector<1x128xf32> to vector<16x128xf32>
    %195 = arith.addf %191, %194 : vector<16x128xf32>
    %cst_158 = arith.constant 0.000000e+00 : f32
    %196 = vector.broadcast %cst_158 : f32 to vector<16x128xf32>
    %197 = arith.maximumf %195, %196 : vector<16x128xf32>
    %cst_159 = arith.constant dense<0.000000e+00> : vector<16x128xf32>
    %198 = tpu.matmul %1, %197, %cst_159 {dimension_numbers = #tpu.dot_dimension_numbers<[1], [0], [0], [1], [0, 0, 1, 1], [], []>} : vector<16x16xf32>, vector<16x128xf32>, vector<16x128xf32> -> vector<16x128xf32>
    %cst_160 = arith.constant dense<0.000000e+00> : vector<16x128xf32>
    %199 = tpu.matmul %3, %197, %cst_160 {dimension_numbers = #tpu.dot_dimension_numbers<[1], [0], [0], [1], [0, 0, 1, 1], [], []>} : vector<16x16xf32>, vector<16x128xf32>, vector<16x128xf32> -> vector<16x128xf32>
    %c27 = arith.constant 27 : index
    %c0_161 = arith.constant 0 : index
    %c0_162 = arith.constant 0 : index
    %200 = vector.load %arg7[%c27, %c0_161, %c0_162] : memref<30x128x128xf32, #tpu.memory_space<vmem>>, vector<1x128x128xf32>
    %201 = vector.shape_cast %200 : vector<1x128x128xf32> to vector<128x128xf32>
    %cst_163 = arith.constant dense<0.000000e+00> : vector<16x128xf32>
    %202 = tpu.matmul %198, %201, %cst_163 {dimension_numbers = #tpu.dot_dimension_numbers<[1], [0], [0], [1], [0, 0, 1, 1], [], []>} : vector<16x128xf32>, vector<128x128xf32>, vector<16x128xf32> -> vector<16x128xf32>
    %c28 = arith.constant 28 : index
    %c0_164 = arith.constant 0 : index
    %c0_165 = arith.constant 0 : index
    %203 = vector.load %arg7[%c28, %c0_164, %c0_165] : memref<30x128x128xf32, #tpu.memory_space<vmem>>, vector<1x128x128xf32>
    %204 = vector.shape_cast %203 : vector<1x128x128xf32> to vector<128x128xf32>
    %cst_166 = arith.constant dense<0.000000e+00> : vector<16x128xf32>
    %205 = tpu.matmul %197, %204, %cst_166 {dimension_numbers = #tpu.dot_dimension_numbers<[1], [0], [0], [1], [0, 0, 1, 1], [], []>} : vector<16x128xf32>, vector<128x128xf32>, vector<16x128xf32> -> vector<16x128xf32>
    %206 = arith.addf %202, %205 : vector<16x128xf32>
    %c29 = arith.constant 29 : index
    %c0_167 = arith.constant 0 : index
    %c0_168 = arith.constant 0 : index
    %207 = vector.load %arg7[%c29, %c0_167, %c0_168] : memref<30x128x128xf32, #tpu.memory_space<vmem>>, vector<1x128x128xf32>
    %208 = vector.shape_cast %207 : vector<1x128x128xf32> to vector<128x128xf32>
    %cst_169 = arith.constant dense<0.000000e+00> : vector<16x128xf32>
    %209 = tpu.matmul %199, %208, %cst_169 {dimension_numbers = #tpu.dot_dimension_numbers<[1], [0], [0], [1], [0, 0, 1, 1], [], []>} : vector<16x128xf32>, vector<128x128xf32>, vector<16x128xf32> -> vector<16x128xf32>
    %210 = arith.addf %206, %209 : vector<16x128xf32>
    %c9_170 = arith.constant 9 : index
    %c0_171 = arith.constant 0 : index
    %c0_172 = arith.constant 0 : index
    %211 = vector.load %arg8[%c9_170, %c0_171, %c0_172] : memref<10x1x128xf32, #tpu.memory_space<vmem>>, vector<1x1x128xf32>
    %212 = vector.shape_cast %211 : vector<1x1x128xf32> to vector<1x128xf32>
    %213 = vector.broadcast %212 : vector<1x128xf32> to vector<16x128xf32>
    %214 = arith.addf %210, %213 : vector<16x128xf32>
    %215 = arith.addf %214, %98 : vector<16x128xf32>
    %c0_173 = arith.constant 0 : index
    %c0_174 = arith.constant 0 : index
    %c0_175 = arith.constant 0 : index
    %216 = vector.load %arg10[%c0_173, %c0_174, %c0_175] : memref<1x64x128xf32, #tpu.memory_space<vmem>>, vector<1x16x128xf32>
    %217 = vector.shape_cast %216 : vector<1x16x128xf32> to vector<16x128xf32>
    %218 = vector.shape_cast %98 : vector<16x128xf32> to vector<1x16x128xf32>
    tpu.vector_store %arg10[%c0_173, %c0_174, %c0_175], %218 {strides = array<i32>} : memref<1x64x128xf32, #tpu.memory_space<vmem>>, vector<1x16x128xf32>,
    %c0_176 = arith.constant 0 : index
    %c16_177 = arith.constant 16 : index
    %c0_178 = arith.constant 0 : index
    %219 = vector.load %arg10[%c0_176, %c16_177, %c0_178] : memref<1x64x128xf32, #tpu.memory_space<vmem>>, vector<1x16x128xf32>
    %220 = vector.shape_cast %219 : vector<1x16x128xf32> to vector<16x128xf32>
    %221 = vector.shape_cast %137 : vector<16x128xf32> to vector<1x16x128xf32>
    tpu.vector_store %arg10[%c0_176, %c16_177, %c0_178], %221 {strides = array<i32>} : memref<1x64x128xf32, #tpu.memory_space<vmem>>, vector<1x16x128xf32>,
    %c0_179 = arith.constant 0 : index
    %c32 = arith.constant 32 : index
    %c0_180 = arith.constant 0 : index
    %222 = vector.load %arg10[%c0_179, %c32, %c0_180] : memref<1x64x128xf32, #tpu.memory_space<vmem>>, vector<1x16x128xf32>
    %223 = vector.shape_cast %222 : vector<1x16x128xf32> to vector<16x128xf32>
    %224 = vector.shape_cast %176 : vector<16x128xf32> to vector<1x16x128xf32>
    tpu.vector_store %arg10[%c0_179, %c32, %c0_180], %224 {strides = array<i32>} : memref<1x64x128xf32, #tpu.memory_space<vmem>>, vector<1x16x128xf32>,
    %c0_181 = arith.constant 0 : index
    %c48 = arith.constant 48 : index
    %c0_182 = arith.constant 0 : index
    %225 = vector.load %arg10[%c0_181, %c48, %c0_182] : memref<1x64x128xf32, #tpu.memory_space<vmem>>, vector<1x16x128xf32>
    %226 = vector.shape_cast %225 : vector<1x16x128xf32> to vector<16x128xf32>
    %227 = vector.shape_cast %215 : vector<16x128xf32> to vector<1x16x128xf32>
    tpu.vector_store %arg10[%c0_181, %c48, %c0_182], %227 {strides = array<i32>} : memref<1x64x128xf32, #tpu.memory_space<vmem>>, vector<1x16x128xf32>,
    return
  }
  func.func @transform_0(%arg0: i32) -> (i32, i32, i32) {
    %c0_i32 = arith.constant 0 : i32
    %c0_i32_0 = arith.constant 0 : i32
    %c0_i32_1 = arith.constant 0 : i32
    return %arg0, %c0_i32, %c0_i32_0 : i32, i32, i32
  }
  func.func @transform_1(%arg0: i32) -> (i32, i32, i32) {
    %c0_i32 = arith.constant 0 : i32
    %c0_i32_0 = arith.constant 0 : i32
    %c0_i32_1 = arith.constant 0 : i32
    return %arg0, %c0_i32, %c0_i32_0 : i32, i32, i32
  }
  func.func @transform_2(%arg0: i32) -> (i32, i32) {
    %c0_i32 = arith.constant 0 : i32
    %c0_i32_0 = arith.constant 0 : i32
    %c0_i32_1 = arith.constant 0 : i32
    return %c0_i32, %c0_i32_0 : i32, i32
  }
  func.func @transform_3(%arg0: i32) -> (i32, i32) {
    %c0_i32 = arith.constant 0 : i32
    %c0_i32_0 = arith.constant 0 : i32
    %c0_i32_1 = arith.constant 0 : i32
    return %c0_i32, %c0_i32_0 : i32, i32
  }
  func.func @transform_4(%arg0: i32) -> (i32, i32) {
    %c0_i32 = arith.constant 0 : i32
    %c0_i32_0 = arith.constant 0 : i32
    %c0_i32_1 = arith.constant 0 : i32
    return %c0_i32, %c0_i32_0 : i32, i32
  }
  func.func @transform_5(%arg0: i32) -> (i32, i32) {
    %c0_i32 = arith.constant 0 : i32
    %c0_i32_0 = arith.constant 0 : i32
    %c0_i32_1 = arith.constant 0 : i32
    return %c0_i32, %c0_i32_0 : i32, i32
  }
  func.func @transform_6(%arg0: i32) -> (i32, i32, i32) {
    %c0_i32 = arith.constant 0 : i32
    %c0_i32_0 = arith.constant 0 : i32
    %c0_i32_1 = arith.constant 0 : i32
    %c0_i32_2 = arith.constant 0 : i32
    return %c0_i32, %c0_i32_0, %c0_i32_1 : i32, i32, i32
  }
  func.func @transform_7(%arg0: i32) -> (i32, i32, i32) {
    %c0_i32 = arith.constant 0 : i32
    %c0_i32_0 = arith.constant 0 : i32
    %c0_i32_1 = arith.constant 0 : i32
    %c0_i32_2 = arith.constant 0 : i32
    return %c0_i32, %c0_i32_0, %c0_i32_1 : i32, i32, i32
  }
  func.func @transform_8(%arg0: i32) -> (i32, i32, i32) {
    %c0_i32 = arith.constant 0 : i32
    %c0_i32_0 = arith.constant 0 : i32
    %c0_i32_1 = arith.constant 0 : i32
    %c0_i32_2 = arith.constant 0 : i32
    return %c0_i32, %c0_i32_0, %c0_i32_1 : i32, i32, i32
  }
  func.func @transform_9(%arg0: i32) -> (i32, i32, i32) {
    %c0_i32 = arith.constant 0 : i32
    %c0_i32_0 = arith.constant 0 : i32
    %c0_i32_1 = arith.constant 0 : i32
    return %arg0, %c0_i32, %c0_i32_0 : i32, i32, i32
  }
}

</mosaic_0001>

<llo_original>
// kernel: _lambda_.1
$region0: #{_lambda_.1}
  #allocation0 [shape = 'u32[]', space=smem, size = 0x4, offset = 0x4, fixed_abs, tag = 'smem constant byte address 0x4 - core index']
  #allocation1 [shape = 'u32[144,128]{1,0:T(1,128)}', space=vmem, size = 0x12000, scoped, tag = 'internal scratch']
  %s0 = inlined_call_operand.vmem [shape: f32[2,16,128], index: 0, kind: input, shape index: {}]
  %s1 = inlined_call_operand.vmem [shape: f32[2,16,128], index: 1, kind: input, shape index: {}]
  %s2 = inlined_call_operand.hbm [shape: f32[128,128], index: 2, kind: input, shape index: {}]
  %s3 = inlined_call_operand.hbm [shape: f32[1,128], index: 3, kind: input, shape index: {}]
  %s4 = inlined_call_operand.hbm [shape: f32[128,128], index: 4, kind: input, shape index: {}]
  %s5 = inlined_call_operand.hbm [shape: f32[1,128], index: 5, kind: input, shape index: {}]
  %s6 = inlined_call_operand.hbm [shape: f32[30,128,128], index: 6, kind: input, shape index: {}]
  %s7 = inlined_call_operand.hbm [shape: f32[10,1,128], index: 7, kind: input, shape index: {}]
  %s8 = inlined_call_operand.hbm [shape: f32[2,16,16], index: 8, kind: input, shape index: {}]
  %s9 = inlined_call_operand.vmem [shape: f32[2,64,128], index: 9, kind: output, shape index: {}]
  %s10 = sld [smem:[#allocation0]]
  $region97: #{_lambda_.1} parent=0
    _
  %s12 = ssub.s32 1, %s10
  %s13 = scalar_select 0, %s12, %s10
  $region1: #{_lambda_.1} parent=0
    #allocation2 [shape = 'u8[65536]{0}', space=vmem, size = 0x10000, scoped, tag = 'input window, operand 2, single buffered']
    #allocation3 [shape = 's32[2]{0}', space=sflag, size = 0x8, scoped, tag = 'scoped memory for _lambda_.1']
    #allocation4 [shape = 'u8[512]{0}', space=vmem, size = 0x400, scoped, tag = 'input window, operand 3, single buffered']
    #allocation5 [shape = 's32[1]{0}', space=sflag, size = 0x4, scoped, tag = 'scoped memory for _lambda_.1']
    #allocation6 [shape = 'u8[65536]{0}', space=vmem, size = 0x10000, scoped, tag = 'input window, operand 4, single buffered']
    #allocation7 [shape = 'u8[512]{0}', space=vmem, size = 0x400, scoped, tag = 'input window, operand 5, single buffered']
    #allocation8 [shape = 's32[1]{0}', space=sflag, size = 0x4, scoped, tag = 'scoped memory for _lambda_.1']
    #allocation9 [shape = 'u8[1966080]{0}', space=vmem, size = 0x1e0000, scoped, tag = 'input window, operand 6, single buffered']
    #allocation10 [shape = 'u8[5120]{0}', space=vmem, size = 0x1400, scoped, tag = 'input window, operand 7, single buffered']
    #allocation11 [shape = 's32[1]{0}', space=sflag, size = 0x4, scoped, tag = 'scoped memory for _lambda_.1']
    #allocation12 [shape = 'u8[16384]{0}', space=vmem, size = 0x4000, scoped, tag = 'input window, operand 8, single buffered']
    %14 = vsyncpa [#allocation3], 0
    %15 = vsyncpa [#allocation5], 0
    %16 = vsyncpa [#allocation8], 0
    %17 = vsyncpa [#allocation11], 0
    loop: start=0, step=1, limit=4
    $region2: #{_lambda_.1} parent=1 // loop_pre_header
      _
    $region3: #{_lambda_.1} parent=1 // loop_header
      %s19 = sphi 0, %s23
      %p20 = scmp.ge.s32.totalorder %s19, 4
      %s29 = sphi 0, %s31
      %s32 = sphi 0, %s29
      %s33 = sphi 0, %s32
      %s49 = sphi 0, %s33
      %s55 = sphi 0, %s57
      %s58 = sphi 0, %s55
      %s59 = sphi 0, %s58
      %s75 = sphi 0, %s59
      %s79 = sphi 0, %s79
      %s81 = sphi 0, %s79
      %s82 = sphi 0, %s81
      %s96 = sphi 0, %s82
      %s100 = sphi 0, %s100
      %s102 = sphi 0, %s100
      %s103 = sphi 0, %s102
      %s117 = sphi 0, %s103
      %s121 = sphi 0, %s121
      %s123 = sphi 0, %s121
      %s124 = sphi 0, %s123
      %s138 = sphi 0, %s124
      %s142 = sphi 0, %s142
      %s144 = sphi 0, %s142
      %s145 = sphi 0, %s144
      %s159 = sphi 0, %s145
      %s163 = sphi 0, %s163
      %s165 = sphi 0, %s163
      %s166 = sphi 0, %s165
      %s180 = sphi 0, %s166
      %s184 = sphi 0, %s184
      %s186 = sphi 0, %s184
      %s187 = sphi 0, %s186
      %s201 = sphi 0, %s187
      %s205 = sphi 0, %s205
      %s207 = sphi 0, %s205
      %s208 = sphi 0, %s207
      %s222 = sphi 0, %s208
      %s228 = sphi 0, %s230
      %s231 = sphi 0, %s228
      %s232 = sphi 0, %s231
      %s248 = sphi 0, %s232
    $region4: #{_lambda_.1} parent=1 // loop_header_branch
      %22 = sbr.rel (%p20) target = $region8
    $region5: #{_lambda_.1} parent=1 // loop_body
      %s24 = ssub.s32 %s19, 1
      %s25 = ssub.s32 %s19, 2
      %s26 = sadd.s32 %s19, 1
      %s27 = ssub.s32 %s19, %s26
      %p28 = scmp.eq.s32.totalorder %s27, 0
      %s30 = sadd.s32 %s29, 1
      %s31 = scalar_select %p28, %s29, %s30
      %p34 = pneg %p28
      %p35 = scmp.eq.s32.totalorder %s19, 1
      %p36 = por %p34, %p35
      %p37 = scmp.ne.s32.totalorder %s29, %s32
      %p38 = scmp.eq.s32.totalorder %s19, 0
      %p39 = por %p37, %p38
      %p40 = scmp.ne.s32.totalorder %s29, %s32
      %p41 = scmp.eq.s32.totalorder %s24, 1
      %p42 = por %p40, %p41
      %p43 = scmp.ne.s32.totalorder %s32, %s33
      %p44 = scmp.eq.s32.totalorder %s24, 0
      %p45 = por %p43, %p44
      %p46 = scmp.ne.s32.totalorder %s32, %s33
      %p47 = scmp.eq.s32.totalorder %s25, 1
      %p48 = por %p46, %p47
      %p50 = scmp.ne.s32.totalorder %s33, %s49
      %p51 = scmp.eq.s32.totalorder %s25, 0
      %p52 = por %p50, %p51
      %s53 = ssub.s32 %s19, %s26
      %p54 = scmp.eq.s32.totalorder %s53, 0
      %s56 = sadd.s32 %s55, 1
      %s57 = scalar_select %p54, %s55, %s56
      %p60 = pneg %p54
      %p61 = scmp.eq.s32.totalorder %s19, 1
      %p62 = por %p60, %p61
      %p63 = scmp.ne.s32.totalorder %s55, %s58
      %p64 = scmp.eq.s32.totalorder %s19, 0
      %p65 = por %p63, %p64
      %p66 = scmp.ne.s32.totalorder %s55, %s58
      %p67 = scmp.eq.s32.totalorder %s24, 1
      %p68 = por %p66, %p67
      %p69 = scmp.ne.s32.totalorder %s58, %s59
      %p70 = scmp.eq.s32.totalorder %s24, 0
      %p71 = por %p69, %p70
      %p72 = scmp.ne.s32.totalorder %s58, %s59
      %p73 = scmp.eq.s32.totalorder %s25, 1
      %p74 = por %p72, %p73
      %p76 = scmp.ne.s32.totalorder %s59, %s75
      %p77 = scmp.eq.s32.totalorder %s25, 0
      %p78 = por %p76, %p77
      %s80 = sadd.s32 %s79, 1
      %p83 = scmp.eq.s32.totalorder %s19, 1
      %p84 = scmp.ne.s32.totalorder %s79, %s81
      %p85 = scmp.eq.s32.totalorder %s19, 0
      %p86 = por %p84, %p85
      %p87 = scmp.ne.s32.totalorder %s79, %s81
      %p88 = scmp.eq.s32.totalorder %s24, 1
      %p89 = por %p87, %p88
      %p90 = scmp.ne.s32.totalorder %s81, %s82
      %p91 = scmp.eq.s32.totalorder %s24, 0
      %p92 = por %p90, %p91
      %p93 = scmp.ne.s32.totalorder %s81, %s82
      %p94 = scmp.eq.s32.totalorder %s25, 1
      %p95 = por %p93, %p94
      %p97 = scmp.ne.s32.totalorder %s82, %s96
      %p98 = scmp.eq.s32.totalorder %s25, 0
      %p99 = por %p97, %p98
      %s101 = sadd.s32 %s100, 1
      %p104 = scmp.eq.s32.totalorder %s19, 1
      %p105 = scmp.ne.s32.totalorder %s100, %s102
      %p106 = scmp.eq.s32.totalorder %s19, 0
      %p107 = por %p105, %p106
      %p108 = scmp.ne.s32.totalorder %s100, %s102
      %p109 = scmp.eq.s32.totalorder %s24, 1
      %p110 = por %p108, %p109
      %p111 = scmp.ne.s32.totalorder %s102, %s103
      %p112 = scmp.eq.s32.totalorder %s24, 0
      %p113 = por %p111, %p112
      %p114 = scmp.ne.s32.totalorder %s102, %s103
      %p115 = scmp.eq.s32.totalorder %s25, 1
      %p116 = por %p114, %p115
      %p118 = scmp.ne.s32.totalorder %s103, %s117
      %p119 = scmp.eq.s32.totalorder %s25, 0
      %p120 = por %p118, %p119
      %s122 = sadd.s32 %s121, 1
      %p125 = scmp.eq.s32.totalorder %s19, 1
      %p126 = scmp.ne.s32.totalorder %s121, %s123
      %p127 = scmp.eq.s32.totalorder %s19, 0
      %p128 = por %p126, %p127
      %p129 = scmp.ne.s32.totalorder %s121, %s123
      %p130 = scmp.eq.s32.totalorder %s24, 1
      %p131 = por %p129, %p130
      %p132 = scmp.ne.s32.totalorder %s123, %s124
      %p133 = scmp.eq.s32.totalorder %s24, 0
      %p134 = por %p132, %p133
      %p135 = scmp.ne.s32.totalorder %s123, %s124
      %p136 = scmp.eq.s32.totalorder %s25, 1
      %p137 = por %p135, %p136
      %p139 = scmp.ne.s32.totalorder %s124, %s138
      %p140 = scmp.eq.s32.totalorder %s25, 0
      %p141 = por %p139, %p140
      %s143 = sadd.s32 %s142, 1
      %p146 = scmp.eq.s32.totalorder %s19, 1
      %p147 = scmp.ne.s32.totalorder %s142, %s144
      %p148 = scmp.eq.s32.totalorder %s19, 0
      %p149 = por %p147, %p148
      %p150 = scmp.ne.s32.totalorder %s142, %s144
      %p151 = scmp.eq.s32.totalorder %s24, 1
      %p152 = por %p150, %p151
      %p153 = scmp.ne.s32.totalorder %s144, %s145
      %p154 = scmp.eq.s32.totalorder %s24, 0
      %p155 = por %p153, %p154
      %p156 = scmp.ne.s32.totalorder %s144, %s145
      %p157 = scmp.eq.s32.totalorder %s25, 1
      %p158 = por %p156, %p157
      %p160 = scmp.ne.s32.totalorder %s145, %s159
      %p161 = scmp.eq.s32.totalorder %s25, 0
      %p162 = por %p160, %p161
      %s164 = sadd.s32 %s163, 1
      %p167 = scmp.eq.s32.totalorder %s19, 1
      %p168 = scmp.ne.s32.totalorder %s163, %s165
      %p169 = scmp.eq.s32.totalorder %s19, 0
      %p170 = por %p168, %p169
      %p171 = scmp.ne.s32.totalorder %s163, %s165
      %p172 = scmp.eq.s32.totalorder %s24, 1
      %p173 = por %p171, %p172
      %p174 = scmp.ne.s32.totalorder %s165, %s166
      %p175 = scmp.eq.s32.totalorder %s24, 0
      %p176 = por %p174, %p175
      %p177 = scmp.ne.s32.totalorder %s165, %s166
      %p178 = scmp.eq.s32.totalorder %s25, 1
      %p179 = por %p177, %p178
      %p181 = scmp.ne.s32.totalorder %s166, %s180
      %p182 = scmp.eq.s32.totalorder %s25, 0
      %p183 = por %p181, %p182
      %s185 = sadd.s32 %s184, 1
      %p188 = scmp.eq.s32.totalorder %s19, 1
      %p189 = scmp.ne.s32.totalorder %s184, %s186
      %p190 = scmp.eq.s32.totalorder %s19, 0
      %p191 = por %p189, %p190
      %p192 = scmp.ne.s32.totalorder %s184, %s186
      %p193 = scmp.eq.s32.totalorder %s24, 1
      %p194 = por %p192, %p193
      %p195 = scmp.ne.s32.totalorder %s186, %s187
      %p196 = scmp.eq.s32.totalorder %s24, 0
      %p197 = por %p195, %p196
      %p198 = scmp.ne.s32.totalorder %s186, %s187
      %p199 = scmp.eq.s32.totalorder %s25, 1
      %p200 = por %p198, %p199
      %p202 = scmp.ne.s32.totalorder %s187, %s201
      %p203 = scmp.eq.s32.totalorder %s25, 0
      %p204 = por %p202, %p203
      %s206 = sadd.s32 %s205, 1
      %p209 = scmp.eq.s32.totalorder %s19, 1
      %p210 = scmp.ne.s32.totalorder %s205, %s207
      %p211 = scmp.eq.s32.totalorder %s19, 0
      %p212 = por %p210, %p211
      %p213 = scmp.ne.s32.totalorder %s205, %s207
      %p214 = scmp.eq.s32.totalorder %s24, 1
      %p215 = por %p213, %p214
      %p216 = scmp.ne.s32.totalorder %s207, %s208
      %p217 = scmp.eq.s32.totalorder %s24, 0
      %p218 = por %p216, %p217
      %p219 = scmp.ne.s32.totalorder %s207, %s208
      %p220 = scmp.eq.s32.totalorder %s25, 1
      %p221 = por %p219, %p220
      %p223 = scmp.ne.s32.totalorder %s208, %s222
      %p224 = scmp.eq.s32.totalorder %s25, 0
      %p225 = por %p223, %p224
      %s226 = ssub.s32 %s19, %s26
      %p227 = scmp.eq.s32.totalorder %s226, 0
      %s229 = sadd.s32 %s228, 1
      %s230 = scalar_select %p227, %s228, %s229
      %p233 = pneg %p227
      %p234 = scmp.eq.s32.totalorder %s19, 1
      %p235 = por %p233, %p234
      %p236 = scmp.ne.s32.totalorder %s228, %s231
      %p237 = scmp.eq.s32.totalorder %s19, 0
      %p238 = por %p236, %p237
      %p239 = scmp.ne.s32.totalorder %s228, %s231
      %p240 = scmp.eq.s32.totalorder %s24, 1
      %p241 = por %p239, %p240
      %p242 = scmp.ne.s32.totalorder %s231, %s232
      %p243 = scmp.eq.s32.totalorder %s24, 0
      %p244 = por %p242, %p243
      %p245 = scmp.ne.s32.totalorder %s231, %s232
      %p246 = scmp.eq.s32.totalorder %s25, 1
      %p247 = por %p245, %p246
      %p249 = scmp.ne.s32.totalorder %s232, %s248
      %p250 = scmp.eq.s32.totalorder %s25, 0
      %p251 = por %p249, %p250
      %p252 = scmp.le.s32.totalorder 1, %s19
      %p253 = scmp.lt.s32.totalorder %s19, 3
      %p254 = pnand %p252, %p253
      %p255 = pneg %p254
      // Predicated region
      $region9: #{_lambda_.1} parent=5 // pred_check
        _
      $region10: #{_lambda_.1} parent=5 // pred_check_branch
        %257 = sbr.rel (%p254) target = $region12
      $region11: #{_lambda_.1} parent=5 // pred_region
        %s258 = ssub.s32 %s19, 1
        // Predicated region
        $region13: #{_lambda_.1} parent=11 // pred_check
          %p259 = pneg %p92
        $region14: #{_lambda_.1} parent=11 // pred_check_branch
          %261 = sbr.rel (%p259) target = $region16
        $region15: #{_lambda_.1} parent=11 // pred_region
          %s263 = ssub.s32 2048, 2048
          %264 = vsyncadd [#allocation3], %s263
          %s265 = sshll.u32 [#allocation2], 4
          %s266 = int_to_ptr.vmem [resolvable:$true] %s265
          %271 = dma.hbm_to_vmem [thread:$0]  %s2, 2048, %s266, [#allocation3], 128, 128, 8
        $region16: #{_lambda_.1} parent=11 // pred_fallthru
          _
        // Predicated region
        $region17: #{_lambda_.1} parent=11 // pred_check
          %p272 = pneg %p113
        $region18: #{_lambda_.1} parent=11 // pred_check_branch
          %274 = sbr.rel (%p272) target = $region20
        $region19: #{_lambda_.1} parent=11 // pred_region
          %s276 = ssub.s32 16, 16
          %277 = vsyncadd [#allocation5], %s276
          %s279 = sshll.u32 [#allocation4], 4
          %s280 = int_to_ptr.vmem [resolvable:$true] %s279
          %282 = dma.hbm_to_vmem [thread:$0]  %s3, 16, %s280, [#allocation5]
        $region20: #{_lambda_.1} parent=11 // pred_fallthru
          _
        // Predicated region
        $region21: #{_lambda_.1} parent=11 // pred_check
          %p283 = pneg %p134
        $region22: #{_lambda_.1} parent=11 // pred_check_branch
          %285 = sbr.rel (%p283) target = $region24
        $region23: #{_lambda_.1} parent=11 // pred_region
          %s287 = ssub.s32 2048, 2048
          %288 = vsyncadd [#allocation5], %s287
          %s289 = sshll.u32 [#allocation6], 4
          %s290 = int_to_ptr.vmem [resolvable:$true] %s289
          %295 = dma.hbm_to_vmem [thread:$0]  %s4, 2048, %s290, [#allocation5], 128, 128, 8
        $region24: #{_lambda_.1} parent=11 // pred_fallthru
          _
        // Predicated region
        $region25: #{_lambda_.1} parent=11 // pred_check
          %p296 = pneg %p155
        $region26: #{_lambda_.1} parent=11 // pred_check_branch
          %298 = sbr.rel (%p296) target = $region28
        $region27: #{_lambda_.1} parent=11 // pred_region
          %s300 = ssub.s32 16, 16
          %301 = vsyncadd [#allocation8], %s300
          %s303 = sshll.u32 [#allocation7], 4
          %s304 = int_to_ptr.vmem [resolvable:$true] %s303
          %306 = dma.hbm_to_vmem [thread:$0]  %s5, 16, %s304, [#allocation8]
        $region28: #{_lambda_.1} parent=11 // pred_fallthru
          _
        // Predicated region
        $region29: #{_lambda_.1} parent=11 // pred_check
          %p307 = pneg %p176
        $region30: #{_lambda_.1} parent=11 // pred_check_branch
          %309 = sbr.rel (%p307) target = $region32
        $region31: #{_lambda_.1} parent=11 // pred_region
          %s311 = ssub.s32 61440, 61440
          %312 = vsyncadd [#allocation8], %s311
          %s313 = sshll.u32 [#allocation9], 4
          %s314 = int_to_ptr.vmem [resolvable:$true] %s313
          %319 = dma.hbm_to_vmem [thread:$0]  %s6, 61440, %s314, [#allocation8], 128, 128, 8
        $region32: #{_lambda_.1} parent=11 // pred_fallthru
          _
        // Predicated region
        $region33: #{_lambda_.1} parent=11 // pred_check
          %p320 = pneg %p197
        $region34: #{_lambda_.1} parent=11 // pred_check_branch
          %322 = sbr.rel (%p320) target = $region36
        $region35: #{_lambda_.1} parent=11 // pred_region
          %s324 = ssub.s32 160, 160
          %325 = vsyncadd [#allocation11], %s324
          %s326 = sshll.u32 [#allocation10], 4
          %s327 = int_to_ptr.vmem [resolvable:$true] %s326
          %332 = dma.hbm_to_vmem [thread:$0]  %s7, 160, %s327, [#allocation11], 16, 16, 1
        $region36: #{_lambda_.1} parent=11 // pred_fallthru
          _
        // Predicated region
        $region37: #{_lambda_.1} parent=11 // pred_check
          %p333 = pneg %p218
        $region38: #{_lambda_.1} parent=11 // pred_check_branch
          %335 = sbr.rel (%p333) target = $region40
        $region39: #{_lambda_.1} parent=11 // pred_region
          %s337 = ssub.s32 512, 512
          %338 = vsyncadd [#allocation11], %s337
          %s339 = sshll.u32 [#allocation12], 4
          %s340 = int_to_ptr.vmem [resolvable:$true] %s339
          %345 = dma.hbm_to_vmem [thread:$0]  %s8, 512, %s340, [#allocation11], 128, 128, 8
        $region40: #{_lambda_.1} parent=11 // pred_fallthru
          _
      $region12: #{_lambda_.1} parent=5 // pred_fallthru
        _
      %p346 = scmp.lt.s32.totalorder %s19, 2
      // Predicated region
      $region41: #{_lambda_.1} parent=5 // pred_check
        %p347 = pneg %p346
      $region42: #{_lambda_.1} parent=5 // pred_check_branch
        %349 = sbr.rel (%p347) target = $region44
      $region43: #{_lambda_.1} parent=5 // pred_region
        // Predicated region
        $region45: #{_lambda_.1} parent=43 // pred_check
          %p350 = pneg %p39
        $region46: #{_lambda_.1} parent=43 // pred_check_branch
          %352 = sbr.rel (%p350) target = $region48
        $region47: #{_lambda_.1} parent=43 // pred_region
          %p353 = scmp.lt.s32.totalorder %s19, 1
          %s354 = scalar_select %p353, %s19, 1
          %s355 = smul.addr %s354, 2
          %s356 = smul.addr %s355, 8
          %s357 = scalar_lea.vmem %s0, %s356
        $region48: #{_lambda_.1} parent=43 // pred_fallthru
          _
        // Predicated region
        $region49: #{_lambda_.1} parent=43 // pred_check
          %p358 = pneg %p65
        $region50: #{_lambda_.1} parent=43 // pred_check_branch
          %360 = sbr.rel (%p358) target = $region52
        $region51: #{_lambda_.1} parent=43 // pred_region
          %p361 = scmp.lt.s32.totalorder %s19, 1
          %s362 = scalar_select %p361, %s19, 1
          %s363 = smul.addr %s362, 2
          %s364 = smul.addr %s363, 8
          %s365 = scalar_lea.vmem %s1, %s364
        $region52: #{_lambda_.1} parent=43 // pred_fallthru
          _
      $region44: #{_lambda_.1} parent=5 // pred_fallthru
        _
      %p366 = scmp.le.s32.totalorder 1, %s19
      %p367 = scmp.lt.s32.totalorder %s19, 3
      %p368 = pnand %p366, %p367
      %p369 = pneg %p368
      // Predicated region
      $region53: #{_lambda_.1} parent=5 // pred_check
        _
      $region54: #{_lambda_.1} parent=5 // pred_check_branch
        %371 = sbr.rel (%p368) target = $region56
      $region55: #{_lambda_.1} parent=5 // pred_region
        %s372 = ssub.s32 %s19, 1
        // Predicated region
        $region57: #{_lambda_.1} parent=55 // pred_check
          %p373 = pneg %p92
        $region58: #{_lambda_.1} parent=55 // pred_check_branch
          %375 = sbr.rel (%p373) target = $region60
        $region59: #{_lambda_.1} parent=55 // pred_region
          %376 = dma.done [#allocation3], 2048
        $region60: #{_lambda_.1} parent=55 // pred_fallthru
          _
        // Predicated region
        $region61: #{_lambda_.1} parent=55 // pred_check
          %p377 = pneg %p113
        $region62: #{_lambda_.1} parent=55 // pred_check_branch
          %379 = sbr.rel (%p377) target = $region64
        $region63: #{_lambda_.1} parent=55 // pred_region
          %380 = dma.done [#allocation5], 16
        $region64: #{_lambda_.1} parent=55 // pred_fallthru
          _
        // Predicated region
        $region65: #{_lambda_.1} parent=55 // pred_check
          %p381 = pneg %p134
        $region66: #{_lambda_.1} parent=55 // pred_check_branch
          %383 = sbr.rel (%p381) target = $region68
        $region67: #{_lambda_.1} parent=55 // pred_region
          %384 = dma.done [#allocation5], 2048
        $region68: #{_lambda_.1} parent=55 // pred_fallthru
          _
        // Predicated region
        $region69: #{_lambda_.1} parent=55 // pred_check
          %p385 = pneg %p155
        $region70: #{_lambda_.1} parent=55 // pred_check_branch
          %387 = sbr.rel (%p385) target = $region72
        $region71: #{_lambda_.1} parent=55 // pred_region
          %388 = dma.done [#allocation8], 16
        $region72: #{_lambda_.1} parent=55 // pred_fallthru
          _
        // Predicated region
        $region73: #{_lambda_.1} parent=55 // pred_check
          %p389 = pneg %p176
        $region74: #{_lambda_.1} parent=55 // pred_check_branch
          %391 = sbr.rel (%p389) target = $region76
        $region75: #{_lambda_.1} parent=55 // pred_region
          %392 = dma.done [#allocation8], 61440
        $region76: #{_lambda_.1} parent=55 // pred_fallthru
          _
        // Predicated region
        $region77: #{_lambda_.1} parent=55 // pred_check
          %p393 = pneg %p197
        $region78: #{_lambda_.1} parent=55 // pred_check_branch
          %395 = sbr.rel (%p393) target = $region80
        $region79: #{_lambda_.1} parent=55 // pred_region
          %396 = dma.done [#allocation11], 160
        $region80: #{_lambda_.1} parent=55 // pred_fallthru
          _
        // Predicated region
        $region81: #{_lambda_.1} parent=55 // pred_check
          %p397 = pneg %p218
        $region82: #{_lambda_.1} parent=55 // pred_check_branch
          %399 = sbr.rel (%p397) target = $region84
        $region83: #{_lambda_.1} parent=55 // pred_region
          %400 = dma.done [#allocation11], 512
        $region84: #{_lambda_.1} parent=55 // pred_fallthru
          _
        %p401 = scmp.lt.s32.totalorder %s24, 1
        %s402 = scalar_select %p401, %s24, 1
        %s403 = smul.addr %s402, 2
        %s404 = smul.addr %s403, 8
        %s405 = scalar_lea.vmem %s0, %s404
        %p406 = pneg %p45
        %p407 = pneg %p42
        %p408 = scmp.lt.s32.totalorder %s24, 1
        %s409 = scalar_select %p408, %s24, 1
        %s410 = smul.addr %s409, 2
        %s411 = smul.addr %s410, 8
        %s412 = scalar_lea.vmem %s1, %s411
        %p413 = pneg %p71
        %p414 = pneg %p68
        %p415 = pneg %p92
        %p416 = pneg %p89
        %p417 = pneg %p113
        %p418 = pneg %p110
        %p419 = pneg %p134
        %p420 = pneg %p131
        %p421 = pneg %p155
        %p422 = pneg %p152
        %p423 = pneg %p176
        %p424 = pneg %p173
        %p425 = pneg %p197
        %p426 = pneg %p194
        %p427 = pneg %p218
        %p428 = pneg %p215
        %p429 = pneg %p244
        %p430 = pneg %p241
        %p431 = scmp.lt.s32.totalorder %s24, 1
        %s432 = scalar_select %p431, %s24, 1
        %s433 = smul.addr %s432, 8
        %s434 = smul.addr %s433, 8
        %s435 = scalar_lea.vmem %s9, %s434
        %p436 = scmp.lt.s32.totalorder %s24, 1
        %s437 = scalar_select %p436, %s24, 1
        %s438 = smul.addr %s437, 2
        %s439 = smul.addr %s438, 8
        %s440 = scalar_lea.vmem %s0, %s439
        %p441 = scmp.lt.s32.totalorder %s24, 1
        %s442 = scalar_select %p441, %s24, 1
        %s443 = smul.addr %s442, 2
        %s444 = smul.addr %s443, 8
        %s445 = scalar_lea.vmem %s1, %s444
        %p446 = scmp.lt.s32.totalorder %s24, 1
        %s447 = scalar_select %p446, %s24, 1
        %s448 = smul.addr %s447, 8
        %s449 = smul.addr %s448, 8
        %s450 = scalar_lea.vmem %s9, %s449
        %v451 = vld [vmem:[#allocation12] sm:$0xff]
        %v452 = vld [vmem:[#allocation12 + $0x8] sm:$0xff]
        %s453 = scalar_lea.vmem [#allocation12], 16
        %v454 = vld [vmem:[%s453] sm:$0xff]
        %v455 = vld [vmem:[%s453 + $0x8] sm:$0xff]
        %v456 = vld [vmem:[%s440] sm:$0xff]
        %v457 = vld [vmem:[%s440 + $0x8] sm:$0xff]
        %v458 = vmax.f32 %v456, 0.0
        %v459 = vmax.f32 %v457, 0.0
        %v460 = vld [vmem:[#allocation2] sm:$0xff]
        %v461 = vld [vmem:[#allocation2 + $0x8] sm:$0xff]
        %v462 = vld [vmem:[#allocation2 + $0x10] sm:$0xff]
        %v463 = vld [vmem:[#allocation2 + $0x18] sm:$0xff]
        %v464 = vld [vmem:[#allocation2 + $0x20] sm:$0xff]
        %v465 = vld [vmem:[#allocation2 + $0x28] sm:$0xff]
        %v466 = vld [vmem:[#allocation2 + $0x30] sm:$0xff]
        %v467 = vld [vmem:[#allocation2 + $0x38] sm:$0xff]
        %v468 = vld [vmem:[#allocation2 + $0x40] sm:$0xff]
        %v469 = vld [vmem:[#allocation2 + $0x48] sm:$0xff]
        %v470 = vld [vmem:[#allocation2 + $0x50] sm:$0xff]
        %v471 = vld [vmem:[#allocation2 + $0x58] sm:$0xff]
        %v472 = vld [vmem:[#allocation2 + $0x60] sm:$0xff]
        %v473 = vld [vmem:[#allocation2 + $0x68] sm:$0xff]
        %v474 = vld [vmem:[#allocation2 + $0x70] sm:$0xff]
        %v475 = vld [vmem:[#allocation2 + $0x78] sm:$0xff]
        %v476 = vld [vmem:[#allocation4] sm:$0x1]
        %v478 = vlaneseq
        %v479 = vshrl.u32 %v478, 7
        %v480 = vsub.s32 0, %v479
        %v481 = vrot.slane %v476, %v480
        %483 = vmatprep.subr.mxu0 0.0
        %484 = vmatpush1.msra.mxu0 %v460
        %485 = vmatprep.subr.mxu0 0.0
        %486 = vmatpush1.msra.mxu0 %v461
        %487 = vmatprep.subr.mxu0 0.0
        %488 = vmatpush1.msra.mxu0 %v462
        %489 = vmatprep.subr.mxu0 0.0
        %490 = vmatpush1.msra.mxu0 %v463
        %491 = vmatprep.subr.mxu0 0.0
        %492 = vmatpush1.msra.mxu0 %v464
        %493 = vmatprep.subr.mxu0 0.0
        %494 = vmatpush1.msra.mxu0 %v465
        %495 = vmatprep.subr.mxu0 0.0
        %496 = vmatpush1.msra.mxu0 %v466
        %497 = vmatprep.subr.mxu0 0.0
        %498 = vmatpush1.msra.mxu0 %v467
        %499 = vmatprep.subr.mxu0 0.0
        %500 = vmatpush1.msra.mxu0 %v468
        %501 = vmatprep.subr.mxu0 0.0
        %502 = vmatpush1.msra.mxu0 %v469
        %503 = vmatprep.subr.mxu0 0.0
        %504 = vmatpush1.msra.mxu0 %v470
        %505 = vmatprep.subr.mxu0 0.0
        %506 = vmatpush1.msra.mxu0 %v471
        %507 = vmatprep.subr.mxu0 0.0
        %508 = vmatpush1.msra.mxu0 %v472
        %509 = vmatprep.subr.mxu0 0.0
        %510 = vmatpush1.msra.mxu0 %v473
        %511 = vmatprep.subr.mxu0 0.0
        %512 = vmatpush1.msra.mxu0 %v474
        %513 = vmatprep.subr.mxu0 0.0
        %514 = vmatpush1.msra.mxu0 %v475
        %515 = vmatprep.subr.mxu0 0.0
        %516 = vmatpush1.msra.mxu0 0.0
        %517 = vmatprep.subr.mxu0 0.0
        %518 = vmatpush1.msra.mxu0 0.0
        %519 = vmatprep.subr.mxu0 0.0
        %520 = vmatpush1.msra.mxu0 0.0
        %521 = vmatprep.subr.mxu0 0.0
        %522 = vmatpush1.msra.mxu0 0.0
        %523 = vmatprep.subr.mxu0 0.0
        %524 = vmatpush1.msra.mxu0 0.0
        %525 = vmatprep.subr.mxu0 0.0
        %526 = vmatpush1.msra.mxu0 0.0
        %527 = vmatprep.subr.mxu0 0.0
        %528 = vmatpush1.msra.mxu0 0.0
        %529 = vmatprep.subr.mxu0 0.0
        %530 = vmatpush1.msra.mxu0 0.0
        %531 = vmatprep.subr.mxu0 0.0
        %532 = vmatpush1.msra.mxu0 0.0
        %533 = vmatprep.subr.mxu0 0.0
        %534 = vmatpush1.msra.mxu0 0.0
        %535 = vmatprep.subr.mxu0 0.0
        %536 = vmatpush1.msra.mxu0 0.0
        %537 = vmatprep.subr.mxu0 0.0
        %538 = vmatpush1.msra.mxu0 0.0
        %539 = vmatprep.subr.mxu0 0.0
        %540 = vmatpush1.msra.mxu0 0.0
        %541 = vmatprep.subr.mxu0 0.0
        %542 = vmatpush1.msra.mxu0 0.0
        %543 = vmatprep.subr.mxu0 0.0
        %544 = vmatpush1.msra.mxu0 0.0
        %545 = vmatprep.subr.mxu0 0.0
        %546 = vmatpush1.msra.mxu0 0.0
        %547 = vmatprep.mubr.f32.mxu0 0.0
        %548 = vmatmul.mubr.f32.gmra.mrb[0].mxu0 %v458
        %v549 = vpop.f32.mrb[0].mxu0
        %v550 = vadd.f32 %v481, %v549
        %v551 = vpop.f32.mrb[0].mxu0
        %552 = vmatprep.mubr.f32.mxu0 0.0
        %553 = vmatmul.mubr.f32.gmra.mrb[0].mxu0 %v459
        %v554 = vpop.f32.mrb[0].mxu0
        %v555 = vadd.f32 %v481, %v554
        %v556 = vpop.f32.mrb[0].mxu0
        %557 = vdwg.mxu0
        %v558 = vld [vmem:[%s445] sm:$0xff]
        %v559 = vld [vmem:[%s445 + $0x8] sm:$0xff]
        %v560 = vmax.f32 %v558, 0.0
        %v561 = vmax.f32 %v559, 0.0
        %v562 = vld [vmem:[#allocation6] sm:$0xff]
        %v563 = vld [vmem:[#allocation6 + $0x8] sm:$0xff]
        %v564 = vld [vmem:[#allocation6 + $0x10] sm:$0xff]
        %v565 = vld [vmem:[#allocation6 + $0x18] sm:$0xff]
        %v566 = vld [vmem:[#allocation6 + $0x20] sm:$0xff]
        %v567 = vld [vmem:[#allocation6 + $0x28] sm:$0xff]
        %v568 = vld [vmem:[#allocation6 + $0x30] sm:$0xff]
        %v569 = vld [vmem:[#allocation6 + $0x38] sm:$0xff]
        %v570 = vld [vmem:[#allocation6 + $0x40] sm:$0xff]
        %v571 = vld [vmem:[#allocation6 + $0x48] sm:$0xff]
        %v572 = vld [vmem:[#allocation6 + $0x50] sm:$0xff]
        %v573 = vld [vmem:[#allocation6 + $0x58] sm:$0xff]
        %v574 = vld [vmem:[#allocation6 + $0x60] sm:$0xff]
        %v575 = vld [vmem:[#allocation6 + $0x68] sm:$0xff]
        %v576 = vld [vmem:[#allocation6 + $0x70] sm:$0xff]
        %v577 = vld [vmem:[#allocation6 + $0x78] sm:$0xff]
        %v578 = vld [vmem:[#allocation7] sm:$0x1]
        %v580 = vlaneseq
        %v581 = vshrl.u32 %v580, 7
        %v582 = vsub.s32 0, %v581
        %v583 = vrot.slane %v578, %v582
        %585 = vmatprep.subr.mxu0 0.0
        %586 = vmatpush1.msra.mxu0 %v562
        %587 = vmatprep.subr.mxu0 0.0
        %588 = vmatpush1.msra.mxu0 %v563
        %589 = vmatprep.subr.mxu0 0.0
        %590 = vmatpush1.msra.mxu0 %v564
        %591 = vmatprep.subr.mxu0 0.0
        %592 = vmatpush1.msra.mxu0 %v565
        %593 = vmatprep.subr.mxu0 0.0
        %594 = vmatpush1.msra.mxu0 %v566
        %595 = vmatprep.subr.mxu0 0.0
        %596 = vmatpush1.msra.mxu0 %v567
        %597 = vmatprep.subr.mxu0 0.0
        %598 = vmatpush1.msra.mxu0 %v568
        %599 = vmatprep.subr.mxu0 0.0
        %600 = vmatpush1.msra.mxu0 %v569
        %601 = vmatprep.subr.mxu0 0.0
        %602 = vmatpush1.msra.mxu0 %v570
        %603 = vmatprep.subr.mxu0 0.0
        %604 = vmatpush1.msra.mxu0 %v571
        %605 = vmatprep.subr.mxu0 0.0
        %606 = vmatpush1.msra.mxu0 %v572
        %607 = vmatprep.subr.mxu0 0.0
        %608 = vmatpush1.msra.mxu0 %v573
        %609 = vmatprep.subr.mxu0 0.0
        %610 = vmatpush1.msra.mxu0 %v574
        %611 = vmatprep.subr.mxu0 0.0
        %612 = vmatpush1.msra.mxu0 %v575
        %613 = vmatprep.subr.mxu0 0.0
        %614 = vmatpush1.msra.mxu0 %v576
        %615 = vmatprep.subr.mxu0 0.0
        %616 = vmatpush1.msra.mxu0 %v577
        %617 = vmatprep.subr.mxu0 0.0
        %618 = vmatpush1.msra.mxu0 0.0
        %619 = vmatprep.subr.mxu0 0.0
        %620 = vmatpush1.msra.mxu0 0.0
        %621 = vmatprep.subr.mxu0 0.0
        %622 = vmatpush1.msra.mxu0 0.0
        %623 = vmatprep.subr.mxu0 0.0
        %624 = vmatpush1.msra.mxu0 0.0
        %625 = vmatprep.subr.mxu0 0.0
        %626 = vmatpush1.msra.mxu0 0.0
        %627 = vmatprep.subr.mxu0 0.0
        %628 = vmatpush1.msra.mxu0 0.0
        %629 = vmatprep.subr.mxu0 0.0
        %630 = vmatpush1.msra.mxu0 0.0
        %631 = vmatprep.subr.mxu0 0.0
        %632 = vmatpush1.msra.mxu0 0.0
        %633 = vmatprep.subr.mxu0 0.0
        %634 = vmatpush1.msra.mxu0 0.0
        %635 = vmatprep.subr.mxu0 0.0
        %636 = vmatpush1.msra.mxu0 0.0
        %637 = vmatprep.subr.mxu0 0.0
        %638 = vmatpush1.msra.mxu0 0.0
        %639 = vmatprep.subr.mxu0 0.0
        %640 = vmatpush1.msra.mxu0 0.0
        %641 = vmatprep.subr.mxu0 0.0
        %642 = vmatpush1.msra.mxu0 0.0
        %643 = vmatprep.subr.mxu0 0.0
        %644 = vmatpush1.msra.mxu0 0.0
        %645 = vmatprep.subr.mxu0 0.0
        %646 = vmatpush1.msra.mxu0 0.0
        %647 = vmatprep.subr.mxu0 0.0
        %648 = vmatpush1.msra.mxu0 0.0
        %649 = vmatprep.mubr.f32.mxu0 0.0
        %650 = vmatmul.mubr.f32.gmra.mrb[0].mxu0 %v560
        %v651 = vpop.f32.mrb[0].mxu0
        %v652 = vadd.f32 %v583, %v651
        %v653 = vpop.f32.mrb[0].mxu0
        %654 = vmatprep.mubr.f32.mxu0 0.0
        %655 = vmatmul.mubr.f32.gmra.mrb[0].mxu0 %v561
        %v656 = vpop.f32.mrb[0].mxu0
        %v657 = vadd.f32 %v583, %v656
        %v658 = vpop.f32.mrb[0].mxu0
        %659 = vdwg.mxu0
        %v660 = vmax.f32 %v652, 0.0
        %v661 = vmax.f32 %v657, 0.0
        %vm662 = vcmask 130048
        %v664 = vsel %vm662, %v451, 0
        %v667 = vsel %vm662, %v452, 0
        %669 = vmatprep.subr.mxu0 0.0
        %670 = vmatpush1.msra.mxu0 %v660
        %671 = vmatprep.subr.mxu0 0.0
        %672 = vmatpush1.msra.mxu0 %v661
        %673 = vmatprep.subr.mxu0 0.0
        %674 = vmatpush1.msra.mxu0 0.0
        %675 = vmatprep.subr.mxu0 0.0
        %676 = vmatpush1.msra.mxu0 0.0
        %677 = vmatprep.subr.mxu0 0.0
        %678 = vmatpush1.msra.mxu0 0.0
        %679 = vmatprep.subr.mxu0 0.0
        %680 = vmatpush1.msra.mxu0 0.0
        %681 = vmatprep.subr.mxu0 0.0
        %682 = vmatpush1.msra.mxu0 0.0
        %683 = vmatprep.subr.mxu0 0.0
        %684 = vmatpush1.msra.mxu0 0.0
        %685 = vmatprep.subr.mxu0 0.0
        %686 = vmatpush1.msra.mxu0 0.0
        %687 = vmatprep.subr.mxu0 0.0
        %688 = vmatpush1.msra.mxu0 0.0
        %689 = vmatprep.subr.mxu0 0.0
        %690 = vmatpush1.msra.mxu0 0.0
        %691 = vmatprep.subr.mxu0 0.0
        %692 = vmatpush1.msra.mxu0 0.0
        %693 = vmatprep.subr.mxu0 0.0
        %694 = vmatpush1.msra.mxu0 0.0
        %695 = vmatprep.subr.mxu0 0.0
        %696 = vmatpush1.msra.mxu0 0.0
        %697 = vmatprep.subr.mxu0 0.0
        %698 = vmatpush1.msra.mxu0 0.0
        %699 = vmatprep.subr.mxu0 0.0
        %700 = vmatpush1.msra.mxu0 0.0
        %701 = vmatprep.subr.mxu0 0.0
        %702 = vmatpush1.msra.mxu0 0.0
        %703 = vmatprep.subr.mxu0 0.0
        %704 = vmatpush1.msra.mxu0 0.0
        %705 = vmatprep.subr.mxu0 0.0
        %706 = vmatpush1.msra.mxu0 0.0
        %707 = vmatprep.subr.mxu0 0.0
        %708 = vmatpush1.msra.mxu0 0.0
        %709 = vmatprep.subr.mxu0 0.0
        %710 = vmatpush1.msra.mxu0 0.0
        %711 = vmatprep.subr.mxu0 0.0
        %712 = vmatpush1.msra.mxu0 0.0
        %713 = vmatprep.subr.mxu0 0.0
        %714 = vmatpush1.msra.mxu0 0.0
        %715 = vmatprep.subr.mxu0 0.0
        %716 = vmatpush1.msra.mxu0 0.0
        %717 = vmatprep.subr.mxu0 0.0
        %718 = vmatpush1.msra.mxu0 0.0
        %719 = vmatprep.subr.mxu0 0.0
        %720 = vmatpush1.msra.mxu0 0.0
        %721 = vmatprep.subr.mxu0 0.0
        %722 = vmatpush1.msra.mxu0 0.0
        %723 = vmatprep.subr.mxu0 0.0
        %724 = vmatpush1.msra.mxu0 0.0
        %725 = vmatprep.subr.mxu0 0.0
        %726 = vmatpush1.msra.mxu0 0.0
        %727 = vmatprep.subr.mxu0 0.0
        %728 = vmatpush1.msra.mxu0 0.0
        %729 = vmatprep.subr.mxu0 0.0
        %730 = vmatpush1.msra.mxu0 0.0
        %731 = vmatprep.subr.mxu0 0.0
        %732 = vmatpush1.msra.mxu0 0.0
        %733 = vmatprep.mubr.f32.mxu0 0.0
        %734 = vmatmul.mubr.f32.gmra.mrb[0].mxu0 %v664
        %v735 = vpop.f32.mrb[0].mxu0
        %v736 = vadd.f32 0.0, %v735
        %v737 = vpop.f32.mrb[0].mxu0
        %738 = vmatprep.mubr.f32.mxu0 0.0
        %739 = vmatmul.mubr.f32.gmra.mrb[0].mxu0 %v667
        %v740 = vpop.f32.mrb[0].mxu0
        %v741 = vadd.f32 0.0, %v740
        %v742 = vpop.f32.mrb[0].mxu0
        %743 = vdwg.mxu0
        %v745 = vsel %vm662, %v454, 0
        %v748 = vsel %vm662, %v455, 0
        %750 = vmatprep.subr.mxu0 0.0
        %751 = vmatpush1.msra.mxu0 %v660
        %752 = vmatprep.subr.mxu0 0.0
        %753 = vmatpush1.msra.mxu0 %v661
        %754 = vmatprep.subr.mxu0 0.0
        %755 = vmatpush1.msra.mxu0 0.0
        %756 = vmatprep.subr.mxu0 0.0
        %757 = vmatpush1.msra.mxu0 0.0
        %758 = vmatprep.subr.mxu0 0.0
        %759 = vmatpush1.msra.mxu0 0.0
        %760 = vmatprep.subr.mxu0 0.0
        %761 = vmatpush1.msra.mxu0 0.0
        %762 = vmatprep.subr.mxu0 0.0
        %763 = vmatpush1.msra.mxu0 0.0
        %764 = vmatprep.subr.mxu0 0.0
        %765 = vmatpush1.msra.mxu0 0.0
        %766 = vmatprep.subr.mxu0 0.0
        %767 = vmatpush1.msra.mxu0 0.0
        %768 = vmatprep.subr.mxu0 0.0
        %769 = vmatpush1.msra.mxu0 0.0
        %770 = vmatprep.subr.mxu0 0.0
        %771 = vmatpush1.msra.mxu0 0.0
        %772 = vmatprep.subr.mxu0 0.0
        %773 = vmatpush1.msra.mxu0 0.0
        %774 = vmatprep.subr.mxu0 0.0
        %775 = vmatpush1.msra.mxu0 0.0
        %776 = vmatprep.subr.mxu0 0.0
        %777 = vmatpush1.msra.mxu0 0.0
        %778 = vmatprep.subr.mxu0 0.0
        %779 = vmatpush1.msra.mxu0 0.0
        %780 = vmatprep.subr.mxu0 0.0
        %781 = vmatpush1.msra.mxu0 0.0
        %782 = vmatprep.subr.mxu0 0.0
        %783 = vmatpush1.msra.mxu0 0.0
        %784 = vmatprep.subr.mxu0 0.0
        %785 = vmatpush1.msra.mxu0 0.0
        %786 = vmatprep.subr.mxu0 0.0
        %787 = vmatpush1.msra.mxu0 0.0
        %788 = vmatprep.subr.mxu0 0.0
        %789 = vmatpush1.msra.mxu0 0.0
        %790 = vmatprep.subr.mxu0 0.0
        %791 = vmatpush1.msra.mxu0 0.0
        %792 = vmatprep.subr.mxu0 0.0
        %793 = vmatpush1.msra.mxu0 0.0
        %794 = vmatprep.subr.mxu0 0.0
        %795 = vmatpush1.msra.mxu0 0.0
        %796 = vmatprep.subr.mxu0 0.0
        %797 = vmatpush1.msra.mxu0 0.0
        %798 = vmatprep.subr.mxu0 0.0
        %799 = vmatpush1.msra.mxu0 0.0
        %800 = vmatprep.subr.mxu0 0.0
        %801 = vmatpush1.msra.mxu0 0.0
        %802 = vmatprep.subr.mxu0 0.0
        %803 = vmatpush1.msra.mxu0 0.0
        %804 = vmatprep.subr.mxu0 0.0
        %805 = vmatpush1.msra.mxu0 0.0
        %806 = vmatprep.subr.mxu0 0.0
        %807 = vmatpush1.msra.mxu0 0.0
        %808 = vmatprep.subr.mxu0 0.0
        %809 = vmatpush1.msra.mxu0 0.0
        %810 = vmatprep.subr.mxu0 0.0
        %811 = vmatpush1.msra.mxu0 0.0
        %812 = vmatprep.subr.mxu0 0.0
        %813 = vmatpush1.msra.mxu0 0.0
        %814 = vmatprep.mubr.f32.mxu0 0.0
        %815 = vmatmul.mubr.f32.gmra.mrb[0].mxu0 %v745
        %v816 = vpop.f32.mrb[0].mxu0
        %v817 = vadd.f32 0.0, %v816
        %v818 = vpop.f32.mrb[0].mxu0
        %819 = vmatprep.mubr.f32.mxu0 0.0
        %820 = vmatmul.mubr.f32.gmra.mrb[0].mxu0 %v748
        %v821 = vpop.f32.mrb[0].mxu0
        %v822 = vadd.f32 0.0, %v821
        %v823 = vpop.f32.mrb[0].mxu0
        %824 = vdwg.mxu0
        %v825 = vld [vmem:[#allocation9] sm:$0xff]
        %v826 = vld [vmem:[#allocation9 + $0x8] sm:$0xff]
        %v827 = vld [vmem:[#allocation9 + $0x10] sm:$0xff]
        %v828 = vld [vmem:[#allocation9 + $0x18] sm:$0xff]
        %v829 = vld [vmem:[#allocation9 + $0x20] sm:$0xff]
        %v830 = vld [vmem:[#allocation9 + $0x28] sm:$0xff]
        %v831 = vld [vmem:[#allocation9 + $0x30] sm:$0xff]
        %v832 = vld [vmem:[#allocation9 + $0x38] sm:$0xff]
        %v833 = vld [vmem:[#allocation9 + $0x40] sm:$0xff]
        %v834 = vld [vmem:[#allocation9 + $0x48] sm:$0xff]
        %v835 = vld [vmem:[#allocation9 + $0x50] sm:$0xff]
        %v836 = vld [vmem:[#allocation9 + $0x58] sm:$0xff]
        %v837 = vld [vmem:[#allocation9 + $0x60] sm:$0xff]
        %v838 = vld [vmem:[#allocation9 + $0x68] sm:$0xff]
        %v839 = vld [vmem:[#allocation9 + $0x70] sm:$0xff]
        %v840 = vld [vmem:[#allocation9 + $0x78] sm:$0xff]
        %s841 = scalar_lea.vmem [#allocation9], 128
        %v842 = vld [vmem:[%s841] sm:$0xff]
        %v843 = vld [vmem:[%s841 + $0x8] sm:$0xff]
        %v844 = vld [vmem:[%s841 + $0x10] sm:$0xff]
        %v845 = vld [vmem:[%s841 + $0x18] sm:$0xff]
        %v846 = vld [vmem:[%s841 + $0x20] sm:$0xff]
        %v847 = vld [vmem:[%s841 + $0x28] sm:$0xff]
        %v848 = vld [vmem:[%s841 + $0x30] sm:$0xff]
        %v849 = vld [vmem:[%s841 + $0x38] sm:$0xff]
        %v850 = vld [vmem:[%s841 + $0x40] sm:$0xff]
        %v851 = vld [vmem:[%s841 + $0x48] sm:$0xff]
        %v852 = vld [vmem:[%s841 + $0x50] sm:$0xff]
        %v853 = vld [vmem:[%s841 + $0x58] sm:$0xff]
        %v854 = vld [vmem:[%s841 + $0x60] sm:$0xff]
        %v855 = vld [vmem:[%s841 + $0x68] sm:$0xff]
        %v856 = vld [vmem:[%s841 + $0x70] sm:$0xff]
        %v857 = vld [vmem:[%s841 + $0x78] sm:$0xff]
        %858 = vmatprep.subr.mxu0 0.0
        %859 = vmatpush1.msra.mxu0 %v842
        %860 = vmatprep.subr.mxu0 0.0
        %861 = vmatpush1.msra.mxu0 %v843
        %862 = vmatprep.subr.mxu0 0.0
        %863 = vmatpush1.msra.mxu0 %v844
        %864 = vmatprep.subr.mxu0 0.0
        %865 = vmatpush1.msra.mxu0 %v845
        %866 = vmatprep.subr.mxu0 0.0
        %867 = vmatpush1.msra.mxu0 %v846
        %868 = vmatprep.subr.mxu0 0.0
        %869 = vmatpush1.msra.mxu0 %v847
        %870 = vmatprep.subr.mxu0 0.0
        %871 = vmatpush1.msra.mxu0 %v848
        %872 = vmatprep.subr.mxu0 0.0
        %873 = vmatpush1.msra.mxu0 %v849
        %874 = vmatprep.subr.mxu0 0.0
        %875 = vmatpush1.msra.mxu0 %v850
        %876 = vmatprep.subr.mxu0 0.0
        %877 = vmatpush1.msra.mxu0 %v851
        %878 = vmatprep.subr.mxu0 0.0
        %879 = vmatpush1.msra.mxu0 %v852
        %880 = vmatprep.subr.mxu0 0.0
        %881 = vmatpush1.msra.mxu0 %v853
        %882 = vmatprep.subr.mxu0 0.0
        %883 = vmatpush1.msra.mxu0 %v854
        %884 = vmatprep.subr.mxu0 0.0
        %885 = vmatpush1.msra.mxu0 %v855
        %886 = vmatprep.subr.mxu0 0.0
        %887 = vmatpush1.msra.mxu0 %v856
        %888 = vmatprep.subr.mxu0 0.0
        %889 = vmatpush1.msra.mxu0 %v857
        %890 = vmatprep.subr.mxu0 0.0
        %891 = vmatpush1.msra.mxu0 0.0
        %892 = vmatprep.subr.mxu0 0.0
        %893 = vmatpush1.msra.mxu0 0.0
        %894 = vmatprep.subr.mxu0 0.0
        %895 = vmatpush1.msra.mxu0 0.0
        %896 = vmatprep.subr.mxu0 0.0
        %897 = vmatpush1.msra.mxu0 0.0
        %898 = vmatprep.subr.mxu0 0.0
        %899 = vmatpush1.msra.mxu0 0.0
        %900 = vmatprep.subr.mxu0 0.0
        %901 = vmatpush1.msra.mxu0 0.0
        %902 = vmatprep.subr.mxu0 0.0
        %903 = vmatpush1.msra.mxu0 0.0
        %904 = vmatprep.subr.mxu0 0.0
        %905 = vmatpush1.msra.mxu0 0.0
        %906 = vmatprep.subr.mxu0 0.0
        %907 = vmatpush1.msra.mxu0 0.0
        %908 = vmatprep.subr.mxu0 0.0
        %909 = vmatpush1.msra.mxu0 0.0
        %910 = vmatprep.subr.mxu0 0.0
        %911 = vmatpush1.msra.mxu0 0.0
        %912 = vmatprep.subr.mxu0 0.0
        %913 = vmatpush1.msra.mxu0 0.0
        %914 = vmatprep.subr.mxu0 0.0
        %915 = vmatpush1.msra.mxu0 0.0
        %916 = vmatprep.subr.mxu0 0.0
        %917 = vmatpush1.msra.mxu0 0.0
        %918 = vmatprep.subr.mxu0 0.0
        %919 = vmatpush1.msra.mxu0 0.0
        %920 = vmatprep.subr.mxu0 0.0
        %921 = vmatpush1.msra.mxu0 0.0
        %922 = vmatprep.mubr.f32.mxu0 0.0
        %923 = vmatmul.mubr.f32.gmra.mrb[0].mxu0 %v660
        %v924 = vpop.f32.mrb[0].mxu0
        %v925 = vadd.f32 0.0, %v924
        %v926 = vpop.f32.mrb[0].mxu0
        %927 = vmatprep.mubr.f32.mxu0 0.0
        %928 = vmatmul.mubr.f32.gmra.mrb[0].mxu0 %v661
        %v929 = vpop.f32.mrb[0].mxu0
        %v930 = vadd.f32 0.0, %v929
        %v931 = vpop.f32.mrb[0].mxu0
        %932 = vdwg.mxu0
        %933 = vmatprep.subr.mxu0 0.0
        %934 = vmatpush1.msra.mxu0 %v825
        %935 = vmatprep.subr.mxu0 0.0
        %936 = vmatpush1.msra.mxu0 %v826
        %937 = vmatprep.subr.mxu0 0.0
        %938 = vmatpush1.msra.mxu0 %v827
        %939 = vmatprep.subr.mxu0 0.0
        %940 = vmatpush1.msra.mxu0 %v828
        %941 = vmatprep.subr.mxu0 0.0
        %942 = vmatpush1.msra.mxu0 %v829
        %943 = vmatprep.subr.mxu0 0.0
        %944 = vmatpush1.msra.mxu0 %v830
        %945 = vmatprep.subr.mxu0 0.0
        %946 = vmatpush1.msra.mxu0 %v831
        %947 = vmatprep.subr.mxu0 0.0
        %948 = vmatpush1.msra.mxu0 %v832
        %949 = vmatprep.subr.mxu0 0.0
        %950 = vmatpush1.msra.mxu0 %v833
        %951 = vmatprep.subr.mxu0 0.0
        %952 = vmatpush1.msra.mxu0 %v834
        %953 = vmatprep.subr.mxu0 0.0
        %954 = vmatpush1.msra.mxu0 %v835
        %955 = vmatprep.subr.mxu0 0.0
        %956 = vmatpush1.msra.mxu0 %v836
        %957 = vmatprep.subr.mxu0 0.0
        %958 = vmatpush1.msra.mxu0 %v837
        %959 = vmatprep.subr.mxu0 0.0
        %960 = vmatpush1.msra.mxu0 %v838
        %961 = vmatprep.subr.mxu0 0.0
        %962 = vmatpush1.msra.mxu0 %v839
        %963 = vmatprep.subr.mxu0 0.0
        %964 = vmatpush1.msra.mxu0 %v840
        %965 = vmatprep.subr.mxu0 0.0
        %966 = vmatpush1.msra.mxu0 0.0
        %967 = vmatprep.subr.mxu0 0.0
        %968 = vmatpush1.msra.mxu0 0.0
        %969 = vmatprep.subr.mxu0 0.0
        %970 = vmatpush1.msra.mxu0 0.0
        %971 = vmatprep.subr.mxu0 0.0
        %972 = vmatpush1.msra.mxu0 0.0
        %973 = vmatprep.subr.mxu0 0.0
        %974 = vmatpush1.msra.mxu0 0.0
        %975 = vmatprep.subr.mxu0 0.0
        %976 = vmatpush1.msra.mxu0 0.0
        %977 = vmatprep.subr.mxu0 0.0
        %978 = vmatpush1.msra.mxu0 0.0
        %979 = vmatprep.subr.mxu0 0.0
        %980 = vmatpush1.msra.mxu0 0.0
        %981 = vmatprep.subr.mxu0 0.0
        %982 = vmatpush1.msra.mxu0 0.0
        %983 = vmatprep.subr.mxu0 0.0
        %984 = vmatpush1.msra.mxu0 0.0
        %985 = vmatprep.subr.mxu0 0.0
        %986 = vmatpush1.msra.mxu0 0.0
        %987 = vmatprep.subr.mxu0 0.0
        %988 = vmatpush1.msra.mxu0 0.0
        %989 = vmatprep.subr.mxu0 0.0
        %990 = vmatpush1.msra.mxu0 0.0
        %991 = vmatprep.subr.mxu0 0.0
        %992 = vmatpush1.msra.mxu0 0.0
        %993 = vmatprep.subr.mxu0 0.0
        %994 = vmatpush1.msra.mxu0 0.0
        %995 = vmatprep.subr.mxu0 0.0
        %996 = vmatpush1.msra.mxu0 0.0
        %997 = vmatprep.mubr.f32.mxu0 0.0
        %998 = vmatmul.mubr.f32.gmra.mrb[0].mxu0 %v736
        %v999 = vpop.f32.mrb[0].mxu0
        %v1000 = vadd.f32 %v925, %v999
        %v1001 = vpop.f32.mrb[0].mxu0
        %1002 = vmatprep.mubr.f32.mxu0 0.0
        %1003 = vmatmul.mubr.f32.gmra.mrb[0].mxu0 %v741
        %v1004 = vpop.f32.mrb[0].mxu0
        %v1005 = vadd.f32 %v930, %v1004
        %v1006 = vpop.f32.mrb[0].mxu0
        %1007 = vdwg.mxu0
        %s1008 = scalar_lea.vmem [#allocation9], 256
        %v1009 = vld [vmem:[%s1008] sm:$0xff]
        %v1010 = vld [vmem:[%s1008 + $0x8] sm:$0xff]
        %v1011 = vld [vmem:[%s1008 + $0x10] sm:$0xff]
        %v1012 = vld [vmem:[%s1008 + $0x18] sm:$0xff]
        %v1013 = vld [vmem:[%s1008 + $0x20] sm:$0xff]
        %v1014 = vld [vmem:[%s1008 + $0x28] sm:$0xff]
        %v1015 = vld [vmem:[%s1008 + $0x30] sm:$0xff]
        %v1016 = vld [vmem:[%s1008 + $0x38] sm:$0xff]
        %v1017 = vld [vmem:[%s1008 + $0x40] sm:$0xff]
        %v1018 = vld [vmem:[%s1008 + $0x48] sm:$0xff]
        %v1019 = vld [vmem:[%s1008 + $0x50] sm:$0xff]
        %v1020 = vld [vmem:[%s1008 + $0x58] sm:$0xff]
        %v1021 = vld [vmem:[%s1008 + $0x60] sm:$0xff]
        %v1022 = vld [vmem:[%s1008 + $0x68] sm:$0xff]
        %v1023 = vld [vmem:[%s1008 + $0x70] sm:$0xff]
        %v1024 = vld [vmem:[%s1008 + $0x78] sm:$0xff]
        %1025 = vmatprep.subr.mxu0 0.0
        %1026 = vmatpush1.msra.mxu0 %v1009
        %1027 = vmatprep.subr.mxu0 0.0
        %1028 = vmatpush1.msra.mxu0 %v1010
        %1029 = vmatprep.subr.mxu0 0.0
        %1030 = vmatpush1.msra.mxu0 %v1011
        %1031 = vmatprep.subr.mxu0 0.0
        %1032 = vmatpush1.msra.mxu0 %v1012
        %1033 = vmatprep.subr.mxu0 0.0
        %1034 = vmatpush1.msra.mxu0 %v1013
        %1035 = vmatprep.subr.mxu0 0.0
        %1036 = vmatpush1.msra.mxu0 %v1014
        %1037 = vmatprep.subr.mxu0 0.0
        %1038 = vmatpush1.msra.mxu0 %v1015
        %1039 = vmatprep.subr.mxu0 0.0
        %1040 = vmatpush1.msra.mxu0 %v1016
        %1041 = vmatprep.subr.mxu0 0.0
        %1042 = vmatpush1.msra.mxu0 %v1017
        %1043 = vmatprep.subr.mxu0 0.0
        %1044 = vmatpush1.msra.mxu0 %v1018
        %1045 = vmatprep.subr.mxu0 0.0
        %1046 = vmatpush1.msra.mxu0 %v1019
        %1047 = vmatprep.subr.mxu0 0.0
        %1048 = vmatpush1.msra.mxu0 %v1020
        %1049 = vmatprep.subr.mxu0 0.0
        %1050 = vmatpush1.msra.mxu0 %v1021
        %1051 = vmatprep.subr.mxu0 0.0
        %1052 = vmatpush1.msra.mxu0 %v1022
        %1053 = vmatprep.subr.mxu0 0.0
        %1054 = vmatpush1.msra.mxu0 %v1023
        %1055 = vmatprep.subr.mxu0 0.0
        %1056 = vmatpush1.msra.mxu0 %v1024
        %1057 = vmatprep.subr.mxu0 0.0
        %1058 = vmatpush1.msra.mxu0 0.0
        %1059 = vmatprep.subr.mxu0 0.0
        %1060 = vmatpush1.msra.mxu0 0.0
        %1061 = vmatprep.subr.mxu0 0.0
        %1062 = vmatpush1.msra.mxu0 0.0
        %1063 = vmatprep.subr.mxu0 0.0
        %1064 = vmatpush1.msra.mxu0 0.0
        %1065 = vmatprep.subr.mxu0 0.0
        %1066 = vmatpush1.msra.mxu0 0.0
        %1067 = vmatprep.subr.mxu0 0.0
        %1068 = vmatpush1.msra.mxu0 0.0
        %1069 = vmatprep.subr.mxu0 0.0
        %1070 = vmatpush1.msra.mxu0 0.0
        %1071 = vmatprep.subr.mxu0 0.0
        %1072 = vmatpush1.msra.mxu0 0.0
        %1073 = vmatprep.subr.mxu0 0.0
        %1074 = vmatpush1.msra.mxu0 0.0
        %1075 = vmatprep.subr.mxu0 0.0
        %1076 = vmatpush1.msra.mxu0 0.0
        %1077 = vmatprep.subr.mxu0 0.0
        %1078 = vmatpush1.msra.mxu0 0.0
        %1079 = vmatprep.subr.mxu0 0.0
        %1080 = vmatpush1.msra.mxu0 0.0
        %1081 = vmatprep.subr.mxu0 0.0
        %1082 = vmatpush1.msra.mxu0 0.0
        %1083 = vmatprep.subr.mxu0 0.0
        %1084 = vmatpush1.msra.mxu0 0.0
        %1085 = vmatprep.subr.mxu0 0.0
        %1086 = vmatpush1.msra.mxu0 0.0
        %1087 = vmatprep.subr.mxu0 0.0
        %1088 = vmatpush1.msra.mxu0 0.0
        %1089 = vmatprep.mubr.f32.mxu0 0.0
        %1090 = vmatmul.mubr.f32.gmra.mrb[0].mxu0 %v817
        %v1091 = vpop.f32.mrb[0].mxu0
        %v1092 = vadd.f32 0.0, %v1091
        %v1093 = vpop.f32.mrb[0].mxu0
        %1094 = vmatprep.mubr.f32.mxu0 0.0
        %1095 = vmatmul.mubr.f32.gmra.mrb[0].mxu0 %v822
        %v1096 = vpop.f32.mrb[0].mxu0
        %v1097 = vadd.f32 0.0, %v1096
        %v1098 = vpop.f32.mrb[0].mxu0
        %1099 = vdwg.mxu0
        %v1100 = vadd.f32 %v1000, %v1092
        %v1101 = vadd.f32 %v1005, %v1097
        %v1102 = vld [vmem:[#allocation10] sm:$0x1]
        %v1104 = vlaneseq
        %v1105 = vshrl.u32 %v1104, 7
        %v1106 = vsub.s32 0, %v1105
        %v1107 = vrot.slane %v1102, %v1106
        %v1109 = vadd.f32 %v1100, %v1107
        %v1110 = vadd.f32 %v1101, %v1107
        %v1111 = vmax.f32 %v1109, 0.0
        %v1112 = vmax.f32 %v1110, 0.0
        %1113 = vmatprep.subr.mxu0 0.0
        %1114 = vmatpush1.msra.mxu0 %v1111
        %1115 = vmatprep.subr.mxu0 0.0
        %1116 = vmatpush1.msra.mxu0 %v1112
        %1117 = vmatprep.subr.mxu0 0.0
        %1118 = vmatpush1.msra.mxu0 0.0
        %1119 = vmatprep.subr.mxu0 0.0
        %1120 = vmatpush1.msra.mxu0 0.0
        %1121 = vmatprep.subr.mxu0 0.0
        %1122 = vmatpush1.msra.mxu0 0.0
        %1123 = vmatprep.subr.mxu0 0.0
        %1124 = vmatpush1.msra.mxu0 0.0
        %1125 = vmatprep.subr.mxu0 0.0
        %1126 = vmatpush1.msra.mxu0 0.0
        %1127 = vmatprep.subr.mxu0 0.0
        %1128 = vmatpush1.msra.mxu0 0.0
        %1129 = vmatprep.subr.mxu0 0.0
        %1130 = vmatpush1.msra.mxu0 0.0
        %1131 = vmatprep.subr.mxu0 0.0
        %1132 = vmatpush1.msra.mxu0 0.0
        %1133 = vmatprep.subr.mxu0 0.0
        %1134 = vmatpush1.msra.mxu0 0.0
        %1135 = vmatprep.subr.mxu0 0.0
        %1136 = vmatpush1.msra.mxu0 0.0
        %1137 = vmatprep.subr.mxu0 0.0
        %1138 = vmatpush1.msra.mxu0 0.0
        %1139 = vmatprep.subr.mxu0 0.0
        %1140 = vmatpush1.msra.mxu0 0.0
        %1141 = vmatprep.subr.mxu0 0.0
        %1142 = vmatpush1.msra.mxu0 0.0
        %1143 = vmatprep.subr.mxu0 0.0
        %1144 = vmatpush1.msra.mxu0 0.0
        %1145 = vmatprep.subr.mxu0 0.0
        %1146 = vmatpush1.msra.mxu0 0.0
        %1147 = vmatprep.subr.mxu0 0.0
        %1148 = vmatpush1.msra.mxu0 0.0
        %1149 = vmatprep.subr.mxu0 0.0
        %1150 = vmatpush1.msra.mxu0 0.0
        %1151 = vmatprep.subr.mxu0 0.0
        %1152 = vmatpush1.msra.mxu0 0.0
        %1153 = vmatprep.subr.mxu0 0.0
        %1154 = vmatpush1.msra.mxu0 0.0
        %1155 = vmatprep.subr.mxu0 0.0
        %1156 = vmatpush1.msra.mxu0 0.0
        %1157 = vmatprep.subr.mxu0 0.0
        %1158 = vmatpush1.msra.mxu0 0.0
        %1159 = vmatprep.subr.mxu0 0.0
        %1160 = vmatpush1.msra.mxu0 0.0
        %1161 = vmatprep.subr.mxu0 0.0
        %1162 = vmatpush1.msra.mxu0 0.0
        %1163 = vmatprep.subr.mxu0 0.0
        %1164 = vmatpush1.msra.mxu0 0.0
        %1165 = vmatprep.subr.mxu0 0.0
        %1166 = vmatpush1.msra.mxu0 0.0
        %1167 = vmatprep.subr.mxu0 0.0
        %1168 = vmatpush1.msra.mxu0 0.0
        %1169 = vmatprep.subr.mxu0 0.0
        %1170 = vmatpush1.msra.mxu0 0.0
        %1171 = vmatprep.subr.mxu0 0.0
        %1172 = vmatpush1.msra.mxu0 0.0
        %1173 = vmatprep.subr.mxu0 0.0
        %1174 = vmatpush1.msra.mxu0 0.0
        %1175 = vmatprep.subr.mxu0 0.0
        %1176 = vmatpush1.msra.mxu0 0.0
        %1177 = vmatprep.mubr.f32.mxu0 0.0
        %1178 = vmatmul.mubr.f32.gmra.mrb[0].mxu0 %v664
        %v1179 = vpop.f32.mrb[0].mxu0
        %v1180 = vadd.f32 0.0, %v1179
        %v1181 = vpop.f32.mrb[0].mxu0
        %1182 = vmatprep.mubr.f32.mxu0 0.0
        %1183 = vmatmul.mubr.f32.gmra.mrb[0].mxu0 %v667
        %v1184 = vpop.f32.mrb[0].mxu0
        %v1185 = vadd.f32 0.0, %v1184
        %v1186 = vpop.f32.mrb[0].mxu0
        %1187 = vdwg.mxu0
        %1188 = vmatprep.subr.mxu0 0.0
        %1189 = vmatpush1.msra.mxu0 %v1111
        %1190 = vmatprep.subr.mxu0 0.0
        %1191 = vmatpush1.msra.mxu0 %v1112
        %1192 = vmatprep.subr.mxu0 0.0
        %1193 = vmatpush1.msra.mxu0 0.0
        %1194 = vmatprep.subr.mxu0 0.0
        %1195 = vmatpush1.msra.mxu0 0.0
        %1196 = vmatprep.subr.mxu0 0.0
        %1197 = vmatpush1.msra.mxu0 0.0
        %1198 = vmatprep.subr.mxu0 0.0
        %1199 = vmatpush1.msra.mxu0 0.0
        %1200 = vmatprep.subr.mxu0 0.0
        %1201 = vmatpush1.msra.mxu0 0.0
        %1202 = vmatprep.subr.mxu0 0.0
        %1203 = vmatpush1.msra.mxu0 0.0
        %1204 = vmatprep.subr.mxu0 0.0
        %1205 = vmatpush1.msra.mxu0 0.0
        %1206 = vmatprep.subr.mxu0 0.0
        %1207 = vmatpush1.msra.mxu0 0.0
        %1208 = vmatprep.subr.mxu0 0.0
        %1209 = vmatpush1.msra.mxu0 0.0
        %1210 = vmatprep.subr.mxu0 0.0
        %1211 = vmatpush1.msra.mxu0 0.0
        %1212 = vmatprep.subr.mxu0 0.0
        %1213 = vmatpush1.msra.mxu0 0.0
        %1214 = vmatprep.subr.mxu0 0.0
        %1215 = vmatpush1.msra.mxu0 0.0
        %1216 = vmatprep.subr.mxu0 0.0
        %1217 = vmatpush1.msra.mxu0 0.0
        %1218 = vmatprep.subr.mxu0 0.0
        %1219 = vmatpush1.msra.mxu0 0.0
        %1220 = vmatprep.subr.mxu0 0.0
        %1221 = vmatpush1.msra.mxu0 0.0
        %1222 = vmatprep.subr.mxu0 0.0
        %1223 = vmatpush1.msra.mxu0 0.0
        %1224 = vmatprep.subr.mxu0 0.0
        %1225 = vmatpush1.msra.mxu0 0.0
        %1226 = vmatprep.subr.mxu0 0.0
        %1227 = vmatpush1.msra.mxu0 0.0
        %1228 = vmatprep.subr.mxu0 0.0
        %1229 = vmatpush1.msra.mxu0 0.0
        %1230 = vmatprep.subr.mxu0 0.0
        %1231 = vmatpush1.msra.mxu0 0.0
        %1232 = vmatprep.subr.mxu0 0.0
        %1233 = vmatpush1.msra.mxu0 0.0
        %1234 = vmatprep.subr.mxu0 0.0
        %1235 = vmatpush1.msra.mxu0 0.0
        %1236 = vmatprep.subr.mxu0 0.0
        %1237 = vmatpush1.msra.mxu0 0.0
        %1238 = vmatprep.subr.mxu0 0.0
        %1239 = vmatpush1.msra.mxu0 0.0
        %1240 = vmatprep.subr.mxu0 0.0
        %1241 = vmatpush1.msra.mxu0 0.0
        %1242 = vmatprep.subr.mxu0 0.0
        %1243 = vmatpush1.msra.mxu0 0.0
        %1244 = vmatprep.subr.mxu0 0.0
        %1245 = vmatpush1.msra.mxu0 0.0
        %1246 = vmatprep.subr.mxu0 0.0
        %1247 = vmatpush1.msra.mxu0 0.0
        %1248 = vmatprep.subr.mxu0 0.0
        %1249 = vmatpush1.msra.mxu0 0.0
        %1250 = vmatprep.subr.mxu0 0.0
        %1251 = vmatpush1.msra.mxu0 0.0
        %1252 = vmatprep.mubr.f32.mxu0 0.0
        %1253 = vmatmul.mubr.f32.gmra.mrb[0].mxu0 %v745
        %v1254 = vpop.f32.mrb[0].mxu0
        %v1255 = vadd.f32 0.0, %v1254
        %v1256 = vpop.f32.mrb[0].mxu0
        %1257 = vmatprep.mubr.f32.mxu0 0.0
        %1258 = vmatmul.mubr.f32.gmra.mrb[0].mxu0 %v748
        %v1259 = vpop.f32.mrb[0].mxu0
        %v1260 = vadd.f32 0.0, %v1259
        %v1261 = vpop.f32.mrb[0].mxu0
        %1262 = vdwg.mxu0
        %s1263 = scalar_lea.vmem [#allocation9], 384
        %v1264 = vld [vmem:[%s1263] sm:$0xff]
        %v1265 = vld [vmem:[%s1263 + $0x8] sm:$0xff]
        %v1266 = vld [vmem:[%s1263 + $0x10] sm:$0xff]
        %v1267 = vld [vmem:[%s1263 + $0x18] sm:$0xff]
        %v1268 = vld [vmem:[%s1263 + $0x20] sm:$0xff]
        %v1269 = vld [vmem:[%s1263 + $0x28] sm:$0xff]
        %v1270 = vld [vmem:[%s1263 + $0x30] sm:$0xff]
        %v1271 = vld [vmem:[%s1263 + $0x38] sm:$0xff]
        %v1272 = vld [vmem:[%s1263 + $0x40] sm:$0xff]
        %v1273 = vld [vmem:[%s1263 + $0x48] sm:$0xff]
        %v1274 = vld [vmem:[%s1263 + $0x50] sm:$0xff]
        %v1275 = vld [vmem:[%s1263 + $0x58] sm:$0xff]
        %v1276 = vld [vmem:[%s1263 + $0x60] sm:$0xff]
        %v1277 = vld [vmem:[%s1263 + $0x68] sm:$0xff]
        %v1278 = vld [vmem:[%s1263 + $0x70] sm:$0xff]
        %v1279 = vld [vmem:[%s1263 + $0x78] sm:$0xff]
        %s1280 = scalar_lea.vmem [#allocation9], 512
        %v1281 = vld [vmem:[%s1280] sm:$0xff]
        %v1282 = vld [vmem:[%s1280 + $0x8] sm:$0xff]
        %v1283 = vld [vmem:[%s1280 + $0x10] sm:$0xff]
        %v1284 = vld [vmem:[%s1280 + $0x18] sm:$0xff]
        %v1285 = vld [vmem:[%s1280 + $0x20] sm:$0xff]
        %v1286 = vld [vmem:[%s1280 + $0x28] sm:$0xff]
        %v1287 = vld [vmem:[%s1280 + $0x30] sm:$0xff]
        %v1288 = vld [vmem:[%s1280 + $0x38] sm:$0xff]
        %v1289 = vld [vmem:[%s1280 + $0x40] sm:$0xff]
        %v1290 = vld [vmem:[%s1280 + $0x48] sm:$0xff]
        %v1291 = vld [vmem:[%s1280 + $0x50] sm:$0xff]
        %v1292 = vld [vmem:[%s1280 + $0x58] sm:$0xff]
        %v1293 = vld [vmem:[%s1280 + $0x60] sm:$0xff]
        %v1294 = vld [vmem:[%s1280 + $0x68] sm:$0xff]
        %v1295 = vld [vmem:[%s1280 + $0x70] sm:$0xff]
        %v1296 = vld [vmem:[%s1280 + $0x78] sm:$0xff]
        %1297 = vmatprep.subr.mxu0 0.0
        %1298 = vmatpush1.msra.mxu0 %v1281
        %1299 = vmatprep.subr.mxu0 0.0
        %1300 = vmatpush1.msra.mxu0 %v1282
        %1301 = vmatprep.subr.mxu0 0.0
        %1302 = vmatpush1.msra.mxu0 %v1283
        %1303 = vmatprep.subr.mxu0 0.0
        %1304 = vmatpush1.msra.mxu0 %v1284
        %1305 = vmatprep.subr.mxu0 0.0
        %1306 = vmatpush1.msra.mxu0 %v1285
        %1307 = vmatprep.subr.mxu0 0.0
        %1308 = vmatpush1.msra.mxu0 %v1286
        %1309 = vmatprep.subr.mxu0 0.0
        %1310 = vmatpush1.msra.mxu0 %v1287
        %1311 = vmatprep.subr.mxu0 0.0
        %1312 = vmatpush1.msra.mxu0 %v1288
        %1313 = vmatprep.subr.mxu0 0.0
        %1314 = vmatpush1.msra.mxu0 %v1289
        %1315 = vmatprep.subr.mxu0 0.0
        %1316 = vmatpush1.msra.mxu0 %v1290
        %1317 = vmatprep.subr.mxu0 0.0
        %1318 = vmatpush1.msra.mxu0 %v1291
        %1319 = vmatprep.subr.mxu0 0.0
        %1320 = vmatpush1.msra.mxu0 %v1292
        %1321 = vmatprep.subr.mxu0 0.0
        %1322 = vmatpush1.msra.mxu0 %v1293
        %1323 = vmatprep.subr.mxu0 0.0
        %1324 = vmatpush1.msra.mxu0 %v1294
        %1325 = vmatprep.subr.mxu0 0.0
        %1326 = vmatpush1.msra.mxu0 %v1295
        %1327 = vmatprep.subr.mxu0 0.0
        %1328 = vmatpush1.msra.mxu0 %v1296
        %1329 = vmatprep.subr.mxu0 0.0
        %1330 = vmatpush1.msra.mxu0 0.0
        %1331 = vmatprep.subr.mxu0 0.0
        %1332 = vmatpush1.msra.mxu0 0.0
        %1333 = vmatprep.subr.mxu0 0.0
        %1334 = vmatpush1.msra.mxu0 0.0
        %1335 = vmatprep.subr.mxu0 0.0
        %1336 = vmatpush1.msra.mxu0 0.0
        %1337 = vmatprep.subr.mxu0 0.0
        %1338 = vmatpush1.msra.mxu0 0.0
        %1339 = vmatprep.subr.mxu0 0.0
        %1340 = vmatpush1.msra.mxu0 0.0
        %1341 = vmatprep.subr.mxu0 0.0
        %1342 = vmatpush1.msra.mxu0 0.0
        %1343 = vmatprep.subr.mxu0 0.0
        %1344 = vmatpush1.msra.mxu0 0.0
        %1345 = vmatprep.subr.mxu0 0.0
        %1346 = vmatpush1.msra.mxu0 0.0
        %1347 = vmatprep.subr.mxu0 0.0
        %1348 = vmatpush1.msra.mxu0 0.0
        %1349 = vmatprep.subr.mxu0 0.0
        %1350 = vmatpush1.msra.mxu0 0.0
        %1351 = vmatprep.subr.mxu0 0.0
        %1352 = vmatpush1.msra.mxu0 0.0
        %1353 = vmatprep.subr.mxu0 0.0
        %1354 = vmatpush1.msra.mxu0 0.0
        %1355 = vmatprep.subr.mxu0 0.0
        %1356 = vmatpush1.msra.mxu0 0.0
        %1357 = vmatprep.subr.mxu0 0.0
        %1358 = vmatpush1.msra.mxu0 0.0
        %1359 = vmatprep.subr.mxu0 0.0
        %1360 = vmatpush1.msra.mxu0 0.0
        %1361 = vmatprep.mubr.f32.mxu0 0.0
        %1362 = vmatmul.mubr.f32.gmra.mrb[0].mxu0 %v1111
        %v1363 = vpop.f32.mrb[0].mxu0
        %v1364 = vadd.f32 0.0, %v1363
        %v1365 = vpop.f32.mrb[0].mxu0
        %1366 = vmatprep.mubr.f32.mxu0 0.0
        %1367 = vmatmul.mubr.f32.gmra.mrb[0].mxu0 %v1112
        %v1368 = vpop.f32.mrb[0].mxu0
        %v1369 = vadd.f32 0.0, %v1368
        %v1370 = vpop.f32.mrb[0].mxu0
        %1371 = vdwg.mxu0
        %1372 = vmatprep.subr.mxu0 0.0
        %1373 = vmatpush1.msra.mxu0 %v1264
        %1374 = vmatprep.subr.mxu0 0.0
        %1375 = vmatpush1.msra.mxu0 %v1265
        %1376 = vmatprep.subr.mxu0 0.0
        %1377 = vmatpush1.msra.mxu0 %v1266
        %1378 = vmatprep.subr.mxu0 0.0
        %1379 = vmatpush1.msra.mxu0 %v1267
        %1380 = vmatprep.subr.mxu0 0.0
        %1381 = vmatpush1.msra.mxu0 %v1268
        %1382 = vmatprep.subr.mxu0 0.0
        %1383 = vmatpush1.msra.mxu0 %v1269
        %1384 = vmatprep.subr.mxu0 0.0
        %1385 = vmatpush1.msra.mxu0 %v1270
        %1386 = vmatprep.subr.mxu0 0.0
        %1387 = vmatpush1.msra.mxu0 %v1271
        %1388 = vmatprep.subr.mxu0 0.0
        %1389 = vmatpush1.msra.mxu0 %v1272
        %1390 = vmatprep.subr.mxu0 0.0
        %1391 = vmatpush1.msra.mxu0 %v1273
        %1392 = vmatprep.subr.mxu0 0.0
        %1393 = vmatpush1.msra.mxu0 %v1274
        %1394 = vmatprep.subr.mxu0 0.0
        %1395 = vmatpush1.msra.mxu0 %v1275
        %1396 = vmatprep.subr.mxu0 0.0
        %1397 = vmatpush1.msra.mxu0 %v1276
        %1398 = vmatprep.subr.mxu0 0.0
        %1399 = vmatpush1.msra.mxu0 %v1277
        %1400 = vmatprep.subr.mxu0 0.0
        %1401 = vmatpush1.msra.mxu0 %v1278
        %1402 = vmatprep.subr.mxu0 0.0
        %1403 = vmatpush1.msra.mxu0 %v1279
        %1404 = vmatprep.subr.mxu0 0.0
        %1405 = vmatpush1.msra.mxu0 0.0
        %1406 = vmatprep.subr.mxu0 0.0
        %1407 = vmatpush1.msra.mxu0 0.0
        %1408 = vmatprep.subr.mxu0 0.0
        %1409 = vmatpush1.msra.mxu0 0.0
        %1410 = vmatprep.subr.mxu0 0.0
        %1411 = vmatpush1.msra.mxu0 0.0
        %1412 = vmatprep.subr.mxu0 0.0
        %1413 = vmatpush1.msra.mxu0 0.0
        %1414 = vmatprep.subr.mxu0 0.0
        %1415 = vmatpush1.msra.mxu0 0.0
        %1416 = vmatprep.subr.mxu0 0.0
        %1417 = vmatpush1.msra.mxu0 0.0
        %1418 = vmatprep.subr.mxu0 0.0
        %1419 = vmatpush1.msra.mxu0 0.0
        %1420 = vmatprep.subr.mxu0 0.0
        %1421 = vmatpush1.msra.mxu0 0.0
        %1422 = vmatprep.subr.mxu0 0.0
        %1423 = vmatpush1.msra.mxu0 0.0
        %1424 = vmatprep.subr.mxu0 0.0
        %1425 = vmatpush1.msra.mxu0 0.0
        %1426 = vmatprep.subr.mxu0 0.0
        %1427 = vmatpush1.msra.mxu0 0.0
        %1428 = vmatprep.subr.mxu0 0.0
        %1429 = vmatpush1.msra.mxu0 0.0
        %1430 = vmatprep.subr.mxu0 0.0
        %1431 = vmatpush1.msra.mxu0 0.0
        %1432 = vmatprep.subr.mxu0 0.0
        %1433 = vmatpush1.msra.mxu0 0.0
        %1434 = vmatprep.subr.mxu0 0.0
        %1435 = vmatpush1.msra.mxu0 0.0
        %1436 = vmatprep.mubr.f32.mxu0 0.0
        %1437 = vmatmul.mubr.f32.gmra.mrb[0].mxu0 %v1180
        %v1438 = vpop.f32.mrb[0].mxu0
        %v1439 = vadd.f32 %v1364, %v1438
        %v1440 = vpop.f32.mrb[0].mxu0
        %1441 = vmatprep.mubr.f32.mxu0 0.0
        %1442 = vmatmul.mubr.f32.gmra.mrb[0].mxu0 %v1185
        %v1443 = vpop.f32.mrb[0].mxu0
        %v1444 = vadd.f32 %v1369, %v1443
        %v1445 = vpop.f32.mrb[0].mxu0
        %1446 = vdwg.mxu0
        %s1447 = scalar_lea.vmem [#allocation9], 640
        %v1448 = vld [vmem:[%s1447] sm:$0xff]
        %v1449 = vld [vmem:[%s1447 + $0x8] sm:$0xff]
        %v1450 = vld [vmem:[%s1447 + $0x10] sm:$0xff]
        %v1451 = vld [vmem:[%s1447 + $0x18] sm:$0xff]
        %v1452 = vld [vmem:[%s1447 + $0x20] sm:$0xff]
        %v1453 = vld [vmem:[%s1447 + $0x28] sm:$0xff]
        %v1454 = vld [vmem:[%s1447 + $0x30] sm:$0xff]
        %v1455 = vld [vmem:[%s1447 + $0x38] sm:$0xff]
        %v1456 = vld [vmem:[%s1447 + $0x40] sm:$0xff]
        %v1457 = vld [vmem:[%s1447 + $0x48] sm:$0xff]
        %v1458 = vld [vmem:[%s1447 + $0x50] sm:$0xff]
        %v1459 = vld [vmem:[%s1447 + $0x58] sm:$0xff]
        %v1460 = vld [vmem:[%s1447 + $0x60] sm:$0xff]
        %v1461 = vld [vmem:[%s1447 + $0x68] sm:$0xff]
        %v1462 = vld [vmem:[%s1447 + $0x70] sm:$0xff]
        %v1463 = vld [vmem:[%s1447 + $0x78] sm:$0xff]
        %1464 = vmatprep.subr.mxu0 0.0
        %1465 = vmatpush1.msra.mxu0 %v1448
        %1466 = vmatprep.subr.mxu0 0.0
        %1467 = vmatpush1.msra.mxu0 %v1449
        %1468 = vmatprep.subr.mxu0 0.0
        %1469 = vmatpush1.msra.mxu0 %v1450
        %1470 = vmatprep.subr.mxu0 0.0
        %1471 = vmatpush1.msra.mxu0 %v1451
        %1472 = vmatprep.subr.mxu0 0.0
        %1473 = vmatpush1.msra.mxu0 %v1452
        %1474 = vmatprep.subr.mxu0 0.0
        %1475 = vmatpush1.msra.mxu0 %v1453
        %1476 = vmatprep.subr.mxu0 0.0
        %1477 = vmatpush1.msra.mxu0 %v1454
        %1478 = vmatprep.subr.mxu0 0.0
        %1479 = vmatpush1.msra.mxu0 %v1455
        %1480 = vmatprep.subr.mxu0 0.0
        %1481 = vmatpush1.msra.mxu0 %v1456
        %1482 = vmatprep.subr.mxu0 0.0
        %1483 = vmatpush1.msra.mxu0 %v1457
        %1484 = vmatprep.subr.mxu0 0.0
        %1485 = vmatpush1.msra.mxu0 %v1458
        %1486 = vmatprep.subr.mxu0 0.0
        %1487 = vmatpush1.msra.mxu0 %v1459
        %1488 = vmatprep.subr.mxu0 0.0
        %1489 = vmatpush1.msra.mxu0 %v1460
        %1490 = vmatprep.subr.mxu0 0.0
        %1491 = vmatpush1.msra.mxu0 %v1461
        %1492 = vmatprep.subr.mxu0 0.0
        %1493 = vmatpush1.msra.mxu0 %v1462
        %1494 = vmatprep.subr.mxu0 0.0
        %1495 = vmatpush1.msra.mxu0 %v1463
        %1496 = vmatprep.subr.mxu0 0.0
        %1497 = vmatpush1.msra.mxu0 0.0
        %1498 = vmatprep.subr.mxu0 0.0
        %1499 = vmatpush1.msra.mxu0 0.0
        %1500 = vmatprep.subr.mxu0 0.0
        %1501 = vmatpush1.msra.mxu0 0.0
        %1502 = vmatprep.subr.mxu0 0.0
        %1503 = vmatpush1.msra.mxu0 0.0
        %1504 = vmatprep.subr.mxu0 0.0
        %1505 = vmatpush1.msra.mxu0 0.0
        %1506 = vmatprep.subr.mxu0 0.0
        %1507 = vmatpush1.msra.mxu0 0.0
        %1508 = vmatprep.subr.mxu0 0.0
        %1509 = vmatpush1.msra.mxu0 0.0
        %1510 = vmatprep.subr.mxu0 0.0
        %1511 = vmatpush1.msra.mxu0 0.0
        %1512 = vmatprep.subr.mxu0 0.0
        %1513 = vmatpush1.msra.mxu0 0.0
        %1514 = vmatprep.subr.mxu0 0.0
        %1515 = vmatpush1.msra.mxu0 0.0
        %1516 = vmatprep.subr.mxu0 0.0
        %1517 = vmatpush1.msra.mxu0 0.0
        %1518 = vmatprep.subr.mxu0 0.0
        %1519 = vmatpush1.msra.mxu0 0.0
        %1520 = vmatprep.subr.mxu0 0.0
        %1521 = vmatpush1.msra.mxu0 0.0
        %1522 = vmatprep.subr.mxu0 0.0
        %1523 = vmatpush1.msra.mxu0 0.0
        %1524 = vmatprep.subr.mxu0 0.0
        %1525 = vmatpush1.msra.mxu0 0.0
        %1526 = vmatprep.subr.mxu0 0.0
        %1527 = vmatpush1.msra.mxu0 0.0
        %1528 = vmatprep.mubr.f32.mxu0 0.0
        %1529 = vmatmul.mubr.f32.gmra.mrb[0].mxu0 %v1255
        %v1530 = vpop.f32.mrb[0].mxu0
        %v1531 = vadd.f32 0.0, %v1530
        %v1532 = vpop.f32.mrb[0].mxu0
        %1533 = vmatprep.mubr.f32.mxu0 0.0
        %1534 = vmatmul.mubr.f32.gmra.mrb[0].mxu0 %v1260
        %v1535 = vpop.f32.mrb[0].mxu0
        %v1536 = vadd.f32 0.0, %v1535
        %v1537 = vpop.f32.mrb[0].mxu0
        %1538 = vdwg.mxu0
        %v1539 = vadd.f32 %v1439, %v1531
        %v1540 = vadd.f32 %v1444, %v1536
        %s1541 = scalar_lea.vmem [#allocation10], 1
        %v1542 = vld [vmem:[%s1541] sm:$0x1]
        %v1544 = vlaneseq
        %v1545 = vshrl.u32 %v1544, 7
        %v1546 = vsub.s32 0, %v1545
        %v1547 = vrot.slane %v1542, %v1546
        %v1549 = vadd.f32 %v1539, %v1547
        %v1550 = vadd.f32 %v1540, %v1547
        %v1551 = vmax.f32 %v550, 0.0
        %v1552 = vmax.f32 %v555, 0.0
        %1553 = vmatprep.subr.mxu0 0.0
        %1554 = vmatpush1.msra.mxu0 %v1551
        %1555 = vmatprep.subr.mxu0 0.0
        %1556 = vmatpush1.msra.mxu0 %v1552
        %1557 = vmatprep.subr.mxu0 0.0
        %1558 = vmatpush1.msra.mxu0 0.0
        %1559 = vmatprep.subr.mxu0 0.0
        %1560 = vmatpush1.msra.mxu0 0.0
        %1561 = vmatprep.subr.mxu0 0.0
        %1562 = vmatpush1.msra.mxu0 0.0
        %1563 = vmatprep.subr.mxu0 0.0
        %1564 = vmatpush1.msra.mxu0 0.0
        %1565 = vmatprep.subr.mxu0 0.0
        %1566 = vmatpush1.msra.mxu0 0.0
        %1567 = vmatprep.subr.mxu0 0.0
        %1568 = vmatpush1.msra.mxu0 0.0
        %1569 = vmatprep.subr.mxu0 0.0
        %1570 = vmatpush1.msra.mxu0 0.0
        %1571 = vmatprep.subr.mxu0 0.0
        %1572 = vmatpush1.msra.mxu0 0.0
        %1573 = vmatprep.subr.mxu0 0.0
        %1574 = vmatpush1.msra.mxu0 0.0
        %1575 = vmatprep.subr.mxu0 0.0
        %1576 = vmatpush1.msra.mxu0 0.0
        %1577 = vmatprep.subr.mxu0 0.0
        %1578 = vmatpush1.msra.mxu0 0.0
        %1579 = vmatprep.subr.mxu0 0.0
        %1580 = vmatpush1.msra.mxu0 0.0
        %1581 = vmatprep.subr.mxu0 0.0
        %1582 = vmatpush1.msra.mxu0 0.0
        %1583 = vmatprep.subr.mxu0 0.0
        %1584 = vmatpush1.msra.mxu0 0.0
        %1585 = vmatprep.subr.mxu0 0.0
        %1586 = vmatpush1.msra.mxu0 0.0
        %1587 = vmatprep.subr.mxu0 0.0
        %1588 = vmatpush1.msra.mxu0 0.0
        %1589 = vmatprep.subr.mxu0 0.0
        %1590 = vmatpush1.msra.mxu0 0.0
        %1591 = vmatprep.subr.mxu0 0.0
        %1592 = vmatpush1.msra.mxu0 0.0
        %1593 = vmatprep.subr.mxu0 0.0
        %1594 = vmatpush1.msra.mxu0 0.0
        %1595 = vmatprep.subr.mxu0 0.0
        %1596 = vmatpush1.msra.mxu0 0.0
        %1597 = vmatprep.subr.mxu0 0.0
        %1598 = vmatpush1.msra.mxu0 0.0
        %1599 = vmatprep.subr.mxu0 0.0
        %1600 = vmatpush1.msra.mxu0 0.0
        %1601 = vmatprep.subr.mxu0 0.0
        %1602 = vmatpush1.msra.mxu0 0.0
        %1603 = vmatprep.subr.mxu0 0.0
        %1604 = vmatpush1.msra.mxu0 0.0
        %1605 = vmatprep.subr.mxu0 0.0
        %1606 = vmatpush1.msra.mxu0 0.0
        %1607 = vmatprep.subr.mxu0 0.0
        %1608 = vmatpush1.msra.mxu0 0.0
        %1609 = vmatprep.subr.mxu0 0.0
        %1610 = vmatpush1.msra.mxu0 0.0
        %1611 = vmatprep.subr.mxu0 0.0
        %1612 = vmatpush1.msra.mxu0 0.0
        %1613 = vmatprep.subr.mxu0 0.0
        %1614 = vmatpush1.msra.mxu0 0.0
        %1615 = vmatprep.subr.mxu0 0.0
        %1616 = vmatpush1.msra.mxu0 0.0
        %1617 = vmatprep.mubr.f32.mxu0 0.0
        %1618 = vmatmul.mubr.f32.gmra.mrb[0].mxu0 %v664
        %v1619 = vpop.f32.mrb[0].mxu0
        %v1620 = vadd.f32 0.0, %v1619
        %v1621 = vpop.f32.mrb[0].mxu0
        %1622 = vmatprep.mubr.f32.mxu0 0.0
        %1623 = vmatmul.mubr.f32.gmra.mrb[0].mxu0 %v667
        %v1624 = vpop.f32.mrb[0].mxu0
        %v1625 = vadd.f32 0.0, %v1624
        %v1626 = vpop.f32.mrb[0].mxu0
        %1627 = vdwg.mxu0
        %1628 = vmatprep.subr.mxu0 0.0
        %1629 = vmatpush1.msra.mxu0 %v1551
        %1630 = vmatprep.subr.mxu0 0.0
        %1631 = vmatpush1.msra.mxu0 %v1552
        %1632 = vmatprep.subr.mxu0 0.0
        %1633 = vmatpush1.msra.mxu0 0.0
        %1634 = vmatprep.subr.mxu0 0.0
        %1635 = vmatpush1.msra.mxu0 0.0
        %1636 = vmatprep.subr.mxu0 0.0
        %1637 = vmatpush1.msra.mxu0 0.0
        %1638 = vmatprep.subr.mxu0 0.0
        %1639 = vmatpush1.msra.mxu0 0.0
        %1640 = vmatprep.subr.mxu0 0.0
        %1641 = vmatpush1.msra.mxu0 0.0
        %1642 = vmatprep.subr.mxu0 0.0
        %1643 = vmatpush1.msra.mxu0 0.0
        %1644 = vmatprep.subr.mxu0 0.0
        %1645 = vmatpush1.msra.mxu0 0.0
        %1646 = vmatprep.subr.mxu0 0.0
        %1647 = vmatpush1.msra.mxu0 0.0
        %1648 = vmatprep.subr.mxu0 0.0
        %1649 = vmatpush1.msra.mxu0 0.0
        %1650 = vmatprep.subr.mxu0 0.0
        %1651 = vmatpush1.msra.mxu0 0.0
        %1652 = vmatprep.subr.mxu0 0.0
        %1653 = vmatpush1.msra.mxu0 0.0
        %1654 = vmatprep.subr.mxu0 0.0
        %1655 = vmatpush1.msra.mxu0 0.0
        %1656 = vmatprep.subr.mxu0 0.0
        %1657 = vmatpush1.msra.mxu0 0.0
        %1658 = vmatprep.subr.mxu0 0.0
        %1659 = vmatpush1.msra.mxu0 0.0
        %1660 = vmatprep.subr.mxu0 0.0
        %1661 = vmatpush1.msra.mxu0 0.0
        %1662 = vmatprep.subr.mxu0 0.0
        %1663 = vmatpush1.msra.mxu0 0.0
        %1664 = vmatprep.subr.mxu0 0.0
        %1665 = vmatpush1.msra.mxu0 0.0
        %1666 = vmatprep.subr.mxu0 0.0
        %1667 = vmatpush1.msra.mxu0 0.0
        %1668 = vmatprep.subr.mxu0 0.0
        %1669 = vmatpush1.msra.mxu0 0.0
        %1670 = vmatprep.subr.mxu0 0.0
        %1671 = vmatpush1.msra.mxu0 0.0
        %1672 = vmatprep.subr.mxu0 0.0
        %1673 = vmatpush1.msra.mxu0 0.0
        %1674 = vmatprep.subr.mxu0 0.0
        %1675 = vmatpush1.msra.mxu0 0.0
        %1676 = vmatprep.subr.mxu0 0.0
        %1677 = vmatpush1.msra.mxu0 0.0
        %1678 = vmatprep.subr.mxu0 0.0
        %1679 = vmatpush1.msra.mxu0 0.0
        %1680 = vmatprep.subr.mxu0 0.0
        %1681 = vmatpush1.msra.mxu0 0.0
        %1682 = vmatprep.subr.mxu0 0.0
        %1683 = vmatpush1.msra.mxu0 0.0
        %1684 = vmatprep.subr.mxu0 0.0
        %1685 = vmatpush1.msra.mxu0 0.0
        %1686 = vmatprep.subr.mxu0 0.0
        %1687 = vmatpush1.msra.mxu0 0.0
        %1688 = vmatprep.subr.mxu0 0.0
        %1689 = vmatpush1.msra.mxu0 0.0
        %1690 = vmatprep.subr.mxu0 0.0
        %1691 = vmatpush1.msra.mxu0 0.0
        %1692 = vmatprep.mubr.f32.mxu0 0.0
        %1693 = vmatmul.mubr.f32.gmra.mrb[0].mxu0 %v745
        %v1694 = vpop.f32.mrb[0].mxu0
        %v1695 = vadd.f32 0.0, %v1694
        %v1696 = vpop.f32.mrb[0].mxu0
        %1697 = vmatprep.mubr.f32.mxu0 0.0
        %1698 = vmatmul.mubr.f32.gmra.mrb[0].mxu0 %v748
        %v1699 = vpop.f32.mrb[0].mxu0
        %v1700 = vadd.f32 0.0, %v1699
        %v1701 = vpop.f32.mrb[0].mxu0
        %1702 = vdwg.mxu0
        %s1703 = scalar_lea.vmem [#allocation9], 768
        %v1704 = vld [vmem:[%s1703] sm:$0xff]
        %v1705 = vld [vmem:[%s1703 + $0x8] sm:$0xff]
        %v1706 = vld [vmem:[%s1703 + $0x10] sm:$0xff]
        %v1707 = vld [vmem:[%s1703 + $0x18] sm:$0xff]
        %v1708 = vld [vmem:[%s1703 + $0x20] sm:$0xff]
        %v1709 = vld [vmem:[%s1703 + $0x28] sm:$0xff]
        %v1710 = vld [vmem:[%s1703 + $0x30] sm:$0xff]
        %v1711 = vld [vmem:[%s1703 + $0x38] sm:$0xff]
        %v1712 = vld [vmem:[%s1703 + $0x40] sm:$0xff]
        %v1713 = vld [vmem:[%s1703 + $0x48] sm:$0xff]
        %v1714 = vld [vmem:[%s1703 + $0x50] sm:$0xff]
        %v1715 = vld [vmem:[%s1703 + $0x58] sm:$0xff]
        %v1716 = vld [vmem:[%s1703 + $0x60] sm:$0xff]
        %v1717 = vld [vmem:[%s1703 + $0x68] sm:$0xff]
        %v1718 = vld [vmem:[%s1703 + $0x70] sm:$0xff]
        %v1719 = vld [vmem:[%s1703 + $0x78] sm:$0xff]
        %s1720 = scalar_lea.vmem [#allocation9], 896
        %v1721 = vld [vmem:[%s1720] sm:$0xff]
        %v1722 = vld [vmem:[%s1720 + $0x8] sm:$0xff]
        %v1723 = vld [vmem:[%s1720 + $0x10] sm:$0xff]
        %v1724 = vld [vmem:[%s1720 + $0x18] sm:$0xff]
        %v1725 = vld [vmem:[%s1720 + $0x20] sm:$0xff]
        %v1726 = vld [vmem:[%s1720 + $0x28] sm:$0xff]
        %v1727 = vld [vmem:[%s1720 + $0x30] sm:$0xff]
        %v1728 = vld [vmem:[%s1720 + $0x38] sm:$0xff]
        %v1729 = vld [vmem:[%s1720 + $0x40] sm:$0xff]
        %v1730 = vld [vmem:[%s1720 + $0x48] sm:$0xff]
        %v1731 = vld [vmem:[%s1720 + $0x50] sm:$0xff]
        %v1732 = vld [vmem:[%s1720 + $0x58] sm:$0xff]
        %v1733 = vld [vmem:[%s1720 + $0x60] sm:$0xff]
        %v1734 = vld [vmem:[%s1720 + $0x68] sm:$0xff]
        %v1735 = vld [vmem:[%s1720 + $0x70] sm:$0xff]
        %v1736 = vld [vmem:[%s1720 + $0x78] sm:$0xff]
        %1737 = vmatprep.subr.mxu0 0.0
        %1738 = vmatpush1.msra.mxu0 %v1721
        %1739 = vmatprep.subr.mxu0 0.0
        %1740 = vmatpush1.msra.mxu0 %v1722
        %1741 = vmatprep.subr.mxu0 0.0
        %1742 = vmatpush1.msra.mxu0 %v1723
        %1743 = vmatprep.subr.mxu0 0.0
        %1744 = vmatpush1.msra.mxu0 %v1724
        %1745 = vmatprep.subr.mxu0 0.0
        %1746 = vmatpush1.msra.mxu0 %v1725
        %1747 = vmatprep.subr.mxu0 0.0
        %1748 = vmatpush1.msra.mxu0 %v1726
        %1749 = vmatprep.subr.mxu0 0.0
        %1750 = vmatpush1.msra.mxu0 %v1727
        %1751 = vmatprep.subr.mxu0 0.0
        %1752 = vmatpush1.msra.mxu0 %v1728
        %1753 = vmatprep.subr.mxu0 0.0
        %1754 = vmatpush1.msra.mxu0 %v1729
        %1755 = vmatprep.subr.mxu0 0.0
        %1756 = vmatpush1.msra.mxu0 %v1730
        %1757 = vmatprep.subr.mxu0 0.0
        %1758 = vmatpush1.msra.mxu0 %v1731
        %1759 = vmatprep.subr.mxu0 0.0
        %1760 = vmatpush1.msra.mxu0 %v1732
        %1761 = vmatprep.subr.mxu0 0.0
        %1762 = vmatpush1.msra.mxu0 %v1733
        %1763 = vmatprep.subr.mxu0 0.0
        %1764 = vmatpush1.msra.mxu0 %v1734
        %1765 = vmatprep.subr.mxu0 0.0
        %1766 = vmatpush1.msra.mxu0 %v1735
        %1767 = vmatprep.subr.mxu0 0.0
        %1768 = vmatpush1.msra.mxu0 %v1736
        %1769 = vmatprep.subr.mxu0 0.0
        %1770 = vmatpush1.msra.mxu0 0.0
        %1771 = vmatprep.subr.mxu0 0.0
        %1772 = vmatpush1.msra.mxu0 0.0
        %1773 = vmatprep.subr.mxu0 0.0
        %1774 = vmatpush1.msra.mxu0 0.0
        %1775 = vmatprep.subr.mxu0 0.0
        %1776 = vmatpush1.msra.mxu0 0.0
        %1777 = vmatprep.subr.mxu0 0.0
        %1778 = vmatpush1.msra.mxu0 0.0
        %1779 = vmatprep.subr.mxu0 0.0
        %1780 = vmatpush1.msra.mxu0 0.0
        %1781 = vmatprep.subr.mxu0 0.0
        %1782 = vmatpush1.msra.mxu0 0.0
        %1783 = vmatprep.subr.mxu0 0.0
        %1784 = vmatpush1.msra.mxu0 0.0
        %1785 = vmatprep.subr.mxu0 0.0
        %1786 = vmatpush1.msra.mxu0 0.0
        %1787 = vmatprep.subr.mxu0 0.0
        %1788 = vmatpush1.msra.mxu0 0.0
        %1789 = vmatprep.subr.mxu0 0.0
        %1790 = vmatpush1.msra.mxu0 0.0
        %1791 = vmatprep.subr.mxu0 0.0
        %1792 = vmatpush1.msra.mxu0 0.0
        %1793 = vmatprep.subr.mxu0 0.0
        %1794 = vmatpush1.msra.mxu0 0.0
        %1795 = vmatprep.subr.mxu0 0.0
        %1796 = vmatpush1.msra.mxu0 0.0
        %1797 = vmatprep.subr.mxu0 0.0
        %1798 = vmatpush1.msra.mxu0 0.0
        %1799 = vmatprep.subr.mxu0 0.0
        %1800 = vmatpush1.msra.mxu0 0.0
        %1801 = vmatprep.mubr.f32.mxu0 0.0
        %1802 = vmatmul.mubr.f32.gmra.mrb[0].mxu0 %v1551
        %v1803 = vpop.f32.mrb[0].mxu0
        %v1804 = vadd.f32 0.0, %v1803
        %v1805 = vpop.f32.mrb[0].mxu0
        %1806 = vmatprep.mubr.f32.mxu0 0.0
        %1807 = vmatmul.mubr.f32.gmra.mrb[0].mxu0 %v1552
        %v1808 = vpop.f32.mrb[0].mxu0
        %v1809 = vadd.f32 0.0, %v1808
        %v1810 = vpop.f32.mrb[0].mxu0
        %1811 = vdwg.mxu0
        %1812 = vmatprep.subr.mxu0 0.0
        %1813 = vmatpush1.msra.mxu0 %v1704
        %1814 = vmatprep.subr.mxu0 0.0
        %1815 = vmatpush1.msra.mxu0 %v1705
        %1816 = vmatprep.subr.mxu0 0.0
        %1817 = vmatpush1.msra.mxu0 %v1706
        %1818 = vmatprep.subr.mxu0 0.0
        %1819 = vmatpush1.msra.mxu0 %v1707
        %1820 = vmatprep.subr.mxu0 0.0
        %1821 = vmatpush1.msra.mxu0 %v1708
        %1822 = vmatprep.subr.mxu0 0.0
        %1823 = vmatpush1.msra.mxu0 %v1709
        %1824 = vmatprep.subr.mxu0 0.0
        %1825 = vmatpush1.msra.mxu0 %v1710
        %1826 = vmatprep.subr.mxu0 0.0
        %1827 = vmatpush1.msra.mxu0 %v1711
        %1828 = vmatprep.subr.mxu0 0.0
        %1829 = vmatpush1.msra.mxu0 %v1712
        %1830 = vmatprep.subr.mxu0 0.0
        %1831 = vmatpush1.msra.mxu0 %v1713
        %1832 = vmatprep.subr.mxu0 0.0
        %1833 = vmatpush1.msra.mxu0 %v1714
        %1834 = vmatprep.subr.mxu0 0.0
        %1835 = vmatpush1.msra.mxu0 %v1715
        %1836 = vmatprep.subr.mxu0 0.0
        %1837 = vmatpush1.msra.mxu0 %v1716
        %1838 = vmatprep.subr.mxu0 0.0
        %1839 = vmatpush1.msra.mxu0 %v1717
        %1840 = vmatprep.subr.mxu0 0.0
        %1841 = vmatpush1.msra.mxu0 %v1718
        %1842 = vmatprep.subr.mxu0 0.0
        %1843 = vmatpush1.msra.mxu0 %v1719
        %1844 = vmatprep.subr.mxu0 0.0
        %1845 = vmatpush1.msra.mxu0 0.0
        %1846 = vmatprep.subr.mxu0 0.0
        %1847 = vmatpush1.msra.mxu0 0.0
        %1848 = vmatprep.subr.mxu0 0.0
        %1849 = vmatpush1.msra.mxu0 0.0
        %1850 = vmatprep.subr.mxu0 0.0
        %1851 = vmatpush1.msra.mxu0 0.0
        %1852 = vmatprep.subr.mxu0 0.0
        %1853 = vmatpush1.msra.mxu0 0.0
        %1854 = vmatprep.subr.mxu0 0.0
        %1855 = vmatpush1.msra.mxu0 0.0
        %1856 = vmatprep.subr.mxu0 0.0
        %1857 = vmatpush1.msra.mxu0 0.0
        %1858 = vmatprep.subr.mxu0 0.0
        %1859 = vmatpush1.msra.mxu0 0.0
        %1860 = vmatprep.subr.mxu0 0.0
        %1861 = vmatpush1.msra.mxu0 0.0
        %1862 = vmatprep.subr.mxu0 0.0
        %1863 = vmatpush1.msra.mxu0 0.0
        %1864 = vmatprep.subr.mxu0 0.0
        %1865 = vmatpush1.msra.mxu0 0.0
        %1866 = vmatprep.subr.mxu0 0.0
        %1867 = vmatpush1.msra.mxu0 0.0
        %1868 = vmatprep.subr.mxu0 0.0
        %1869 = vmatpush1.msra.mxu0 0.0
        %1870 = vmatprep.subr.mxu0 0.0
        %1871 = vmatpush1.msra.mxu0 0.0
        %1872 = vmatprep.subr.mxu0 0.0
        %1873 = vmatpush1.msra.mxu0 0.0
        %1874 = vmatprep.subr.mxu0 0.0
        %1875 = vmatpush1.msra.mxu0 0.0
        %1876 = vmatprep.mubr.f32.mxu0 0.0
        %1877 = vmatmul.mubr.f32.gmra.mrb[0].mxu0 %v1620
        %v1878 = vpop.f32.mrb[0].mxu0
        %v1879 = vadd.f32 %v1804, %v1878
        %v1880 = vpop.f32.mrb[0].mxu0
        %1881 = vmatprep.mubr.f32.mxu0 0.0
        %1882 = vmatmul.mubr.f32.gmra.mrb[0].mxu0 %v1625
        %v1883 = vpop.f32.mrb[0].mxu0
        %v1884 = vadd.f32 %v1809, %v1883
        %v1885 = vpop.f32.mrb[0].mxu0
        %1886 = vdwg.mxu0
        %s1887 = scalar_lea.vmem [#allocation9], 1024
        %v1888 = vld [vmem:[%s1887] sm:$0xff]
        %v1889 = vld [vmem:[%s1887 + $0x8] sm:$0xff]
        %v1890 = vld [vmem:[%s1887 + $0x10] sm:$0xff]
        %v1891 = vld [vmem:[%s1887 + $0x18] sm:$0xff]
        %v1892 = vld [vmem:[%s1887 + $0x20] sm:$0xff]
        %v1893 = vld [vmem:[%s1887 + $0x28] sm:$0xff]
        %v1894 = vld [vmem:[%s1887 + $0x30] sm:$0xff]
        %v1895 = vld [vmem:[%s1887 + $0x38] sm:$0xff]
        %v1896 = vld [vmem:[%s1887 + $0x40] sm:$0xff]
        %v1897 = vld [vmem:[%s1887 + $0x48] sm:$0xff]
        %v1898 = vld [vmem:[%s1887 + $0x50] sm:$0xff]
        %v1899 = vld [vmem:[%s1887 + $0x58] sm:$0xff]
        %v1900 = vld [vmem:[%s1887 + $0x60] sm:$0xff]
        %v1901 = vld [vmem:[%s1887 + $0x68] sm:$0xff]
        %v1902 = vld [vmem:[%s1887 + $0x70] sm:$0xff]
        %v1903 = vld [vmem:[%s1887 + $0x78] sm:$0xff]
        %1904 = vmatprep.subr.mxu0 0.0
        %1905 = vmatpush1.msra.mxu0 %v1888
        %1906 = vmatprep.subr.mxu0 0.0
        %1907 = vmatpush1.msra.mxu0 %v1889
        %1908 = vmatprep.subr.mxu0 0.0
        %1909 = vmatpush1.msra.mxu0 %v1890
        %1910 = vmatprep.subr.mxu0 0.0
        %1911 = vmatpush1.msra.mxu0 %v1891
        %1912 = vmatprep.subr.mxu0 0.0
        %1913 = vmatpush1.msra.mxu0 %v1892
        %1914 = vmatprep.subr.mxu0 0.0
        %1915 = vmatpush1.msra.mxu0 %v1893
        %1916 = vmatprep.subr.mxu0 0.0
        %1917 = vmatpush1.msra.mxu0 %v1894
        %1918 = vmatprep.subr.mxu0 0.0
        %1919 = vmatpush1.msra.mxu0 %v1895
        %1920 = vmatprep.subr.mxu0 0.0
        %1921 = vmatpush1.msra.mxu0 %v1896
        %1922 = vmatprep.subr.mxu0 0.0
        %1923 = vmatpush1.msra.mxu0 %v1897
        %1924 = vmatprep.subr.mxu0 0.0
        %1925 = vmatpush1.msra.mxu0 %v1898
        %1926 = vmatprep.subr.mxu0 0.0
        %1927 = vmatpush1.msra.mxu0 %v1899
        %1928 = vmatprep.subr.mxu0 0.0
        %1929 = vmatpush1.msra.mxu0 %v1900
        %1930 = vmatprep.subr.mxu0 0.0
        %1931 = vmatpush1.msra.mxu0 %v1901
        %1932 = vmatprep.subr.mxu0 0.0
        %1933 = vmatpush1.msra.mxu0 %v1902
        %1934 = vmatprep.subr.mxu0 0.0
        %1935 = vmatpush1.msra.mxu0 %v1903
        %1936 = vmatprep.subr.mxu0 0.0
        %1937 = vmatpush1.msra.mxu0 0.0
        %1938 = vmatprep.subr.mxu0 0.0
        %1939 = vmatpush1.msra.mxu0 0.0
        %1940 = vmatprep.subr.mxu0 0.0
        %1941 = vmatpush1.msra.mxu0 0.0
        %1942 = vmatprep.subr.mxu0 0.0
        %1943 = vmatpush1.msra.mxu0 0.0
        %1944 = vmatprep.subr.mxu0 0.0
        %1945 = vmatpush1.msra.mxu0 0.0
        %1946 = vmatprep.subr.mxu0 0.0
        %1947 = vmatpush1.msra.mxu0 0.0
        %1948 = vmatprep.subr.mxu0 0.0
        %1949 = vmatpush1.msra.mxu0 0.0
        %1950 = vmatprep.subr.mxu0 0.0
        %1951 = vmatpush1.msra.mxu0 0.0
        %1952 = vmatprep.subr.mxu0 0.0
        %1953 = vmatpush1.msra.mxu0 0.0
        %1954 = vmatprep.subr.mxu0 0.0
        %1955 = vmatpush1.msra.mxu0 0.0
        %1956 = vmatprep.subr.mxu0 0.0
        %1957 = vmatpush1.msra.mxu0 0.0
        %1958 = vmatprep.subr.mxu0 0.0
        %1959 = vmatpush1.msra.mxu0 0.0
        %1960 = vmatprep.subr.mxu0 0.0
        %1961 = vmatpush1.msra.mxu0 0.0
        %1962 = vmatprep.subr.mxu0 0.0
        %1963 = vmatpush1.msra.mxu0 0.0
        %1964 = vmatprep.subr.mxu0 0.0
        %1965 = vmatpush1.msra.mxu0 0.0
        %1966 = vmatprep.subr.mxu0 0.0
        %1967 = vmatpush1.msra.mxu0 0.0
        %1968 = vmatprep.mubr.f32.mxu0 0.0
        %1969 = vmatmul.mubr.f32.gmra.mrb[0].mxu0 %v1695
        %v1970 = vpop.f32.mrb[0].mxu0
        %v1971 = vadd.f32 0.0, %v1970
        %v1972 = vpop.f32.mrb[0].mxu0
        %1973 = vmatprep.mubr.f32.mxu0 0.0
        %1974 = vmatmul.mubr.f32.gmra.mrb[0].mxu0 %v1700
        %v1975 = vpop.f32.mrb[0].mxu0
        %v1976 = vadd.f32 0.0, %v1975
        %v1977 = vpop.f32.mrb[0].mxu0
        %1978 = vdwg.mxu0
        %v1979 = vadd.f32 %v1879, %v1971
        %v1980 = vadd.f32 %v1884, %v1976
        %s1981 = scalar_lea.vmem [#allocation10], 2
        %v1982 = vld [vmem:[%s1981] sm:$0x1]
        %v1984 = vlaneseq
        %v1985 = vshrl.u32 %v1984, 7
        %v1986 = vsub.s32 0, %v1985
        %v1987 = vrot.slane %v1982, %v1986
        %v1989 = vadd.f32 %v1979, %v1987
        %v1990 = vadd.f32 %v1980, %v1987
        %v1991 = vmax.f32 %v1989, 0.0
        %v1992 = vmax.f32 %v1990, 0.0
        %1993 = vmatprep.subr.mxu0 0.0
        %1994 = vmatpush1.msra.mxu0 %v1991
        %1995 = vmatprep.subr.mxu0 0.0
        %1996 = vmatpush1.msra.mxu0 %v1992
        %1997 = vmatprep.subr.mxu0 0.0
        %1998 = vmatpush1.msra.mxu0 0.0
        %1999 = vmatprep.subr.mxu0 0.0
        %2000 = vmatpush1.msra.mxu0 0.0
        %2001 = vmatprep.subr.mxu0 0.0
        %2002 = vmatpush1.msra.mxu0 0.0
        %2003 = vmatprep.subr.mxu0 0.0
        %2004 = vmatpush1.msra.mxu0 0.0
        %2005 = vmatprep.subr.mxu0 0.0
        %2006 = vmatpush1.msra.mxu0 0.0
        %2007 = vmatprep.subr.mxu0 0.0
        %2008 = vmatpush1.msra.mxu0 0.0
        %2009 = vmatprep.subr.mxu0 0.0
        %2010 = vmatpush1.msra.mxu0 0.0
        %2011 = vmatprep.subr.mxu0 0.0
        %2012 = vmatpush1.msra.mxu0 0.0
        %2013 = vmatprep.subr.mxu0 0.0
        %2014 = vmatpush1.msra.mxu0 0.0
        %2015 = vmatprep.subr.mxu0 0.0
        %2016 = vmatpush1.msra.mxu0 0.0
        %2017 = vmatprep.subr.mxu0 0.0
        %2018 = vmatpush1.msra.mxu0 0.0
        %2019 = vmatprep.subr.mxu0 0.0
        %2020 = vmatpush1.msra.mxu0 0.0
        %2021 = vmatprep.subr.mxu0 0.0
        %2022 = vmatpush1.msra.mxu0 0.0
        %2023 = vmatprep.subr.mxu0 0.0
        %2024 = vmatpush1.msra.mxu0 0.0
        %2025 = vmatprep.subr.mxu0 0.0
        %2026 = vmatpush1.msra.mxu0 0.0
        %2027 = vmatprep.subr.mxu0 0.0
        %2028 = vmatpush1.msra.mxu0 0.0
        %2029 = vmatprep.subr.mxu0 0.0
        %2030 = vmatpush1.msra.mxu0 0.0
        %2031 = vmatprep.subr.mxu0 0.0
        %2032 = vmatpush1.msra.mxu0 0.0
        %2033 = vmatprep.subr.mxu0 0.0
        %2034 = vmatpush1.msra.mxu0 0.0
        %2035 = vmatprep.subr.mxu0 0.0
        %2036 = vmatpush1.msra.mxu0 0.0
        %2037 = vmatprep.subr.mxu0 0.0
        %2038 = vmatpush1.msra.mxu0 0.0
        %2039 = vmatprep.subr.mxu0 0.0
        %2040 = vmatpush1.msra.mxu0 0.0
        %2041 = vmatprep.subr.mxu0 0.0
        %2042 = vmatpush1.msra.mxu0 0.0
        %2043 = vmatprep.subr.mxu0 0.0
        %2044 = vmatpush1.msra.mxu0 0.0
        %2045 = vmatprep.subr.mxu0 0.0
        %2046 = vmatpush1.msra.mxu0 0.0
        %2047 = vmatprep.subr.mxu0 0.0
        %2048 = vmatpush1.msra.mxu0 0.0
        %2049 = vmatprep.subr.mxu0 0.0
        %2050 = vmatpush1.msra.mxu0 0.0
        %2051 = vmatprep.subr.mxu0 0.0
        %2052 = vmatpush1.msra.mxu0 0.0
        %2053 = vmatprep.subr.mxu0 0.0
        %2054 = vmatpush1.msra.mxu0 0.0
        %2055 = vmatprep.subr.mxu0 0.0
        %2056 = vmatpush1.msra.mxu0 0.0
        %2057 = vmatprep.mubr.f32.mxu0 0.0
        %2058 = vmatmul.mubr.f32.gmra.mrb[0].mxu0 %v664
        %v2059 = vpop.f32.mrb[0].mxu0
        %v2060 = vadd.f32 0.0, %v2059
        %v2061 = vpop.f32.mrb[0].mxu0
        %2062 = vmatprep.mubr.f32.mxu0 0.0
        %2063 = vmatmul.mubr.f32.gmra.mrb[0].mxu0 %v667
        %v2064 = vpop.f32.mrb[0].mxu0
        %v2065 = vadd.f32 0.0, %v2064
        %v2066 = vpop.f32.mrb[0].mxu0
        %2067 = vdwg.mxu0
        %2068 = vmatprep.subr.mxu0 0.0
        %2069 = vmatpush1.msra.mxu0 %v1991
        %2070 = vmatprep.subr.mxu0 0.0
        %2071 = vmatpush1.msra.mxu0 %v1992
        %2072 = vmatprep.subr.mxu0 0.0
        %2073 = vmatpush1.msra.mxu0 0.0
        %2074 = vmatprep.subr.mxu0 0.0
        %2075 = vmatpush1.msra.mxu0 0.0
        %2076 = vmatprep.subr.mxu0 0.0
        %2077 = vmatpush1.msra.mxu0 0.0
        %2078 = vmatprep.subr.mxu0 0.0
        %2079 = vmatpush1.msra.mxu0 0.0
        %2080 = vmatprep.subr.mxu0 0.0
        %2081 = vmatpush1.msra.mxu0 0.0
        %2082 = vmatprep.subr.mxu0 0.0
        %2083 = vmatpush1.msra.mxu0 0.0
        %2084 = vmatprep.subr.mxu0 0.0
        %2085 = vmatpush1.msra.mxu0 0.0
        %2086 = vmatprep.subr.mxu0 0.0
        %2087 = vmatpush1.msra.mxu0 0.0
        %2088 = vmatprep.subr.mxu0 0.0
        %2089 = vmatpush1.msra.mxu0 0.0
        %2090 = vmatprep.subr.mxu0 0.0
        %2091 = vmatpush1.msra.mxu0 0.0
        %2092 = vmatprep.subr.mxu0 0.0
        %2093 = vmatpush1.msra.mxu0 0.0
        %2094 = vmatprep.subr.mxu0 0.0
        %2095 = vmatpush1.msra.mxu0 0.0
        %2096 = vmatprep.subr.mxu0 0.0
        %2097 = vmatpush1.msra.mxu0 0.0
        %2098 = vmatprep.subr.mxu0 0.0
        %2099 = vmatpush1.msra.mxu0 0.0
        %2100 = vmatprep.subr.mxu0 0.0
        %2101 = vmatpush1.msra.mxu0 0.0
        %2102 = vmatprep.subr.mxu0 0.0
        %2103 = vmatpush1.msra.mxu0 0.0
        %2104 = vmatprep.subr.mxu0 0.0
        %2105 = vmatpush1.msra.mxu0 0.0
        %2106 = vmatprep.subr.mxu0 0.0
        %2107 = vmatpush1.msra.mxu0 0.0
        %2108 = vmatprep.subr.mxu0 0.0
        %2109 = vmatpush1.msra.mxu0 0.0
        %2110 = vmatprep.subr.mxu0 0.0
        %2111 = vmatpush1.msra.mxu0 0.0
        %2112 = vmatprep.subr.mxu0 0.0
        %2113 = vmatpush1.msra.mxu0 0.0
        %2114 = vmatprep.subr.mxu0 0.0
        %2115 = vmatpush1.msra.mxu0 0.0
        %2116 = vmatprep.subr.mxu0 0.0
        %2117 = vmatpush1.msra.mxu0 0.0
        %2118 = vmatprep.subr.mxu0 0.0
        %2119 = vmatpush1.msra.mxu0 0.0
        %2120 = vmatprep.subr.mxu0 0.0
        %2121 = vmatpush1.msra.mxu0 0.0
        %2122 = vmatprep.subr.mxu0 0.0
        %2123 = vmatpush1.msra.mxu0 0.0
        %2124 = vmatprep.subr.mxu0 0.0
        %2125 = vmatpush1.msra.mxu0 0.0
        %2126 = vmatprep.subr.mxu0 0.0
        %2127 = vmatpush1.msra.mxu0 0.0
        %2128 = vmatprep.subr.mxu0 0.0
        %2129 = vmatpush1.msra.mxu0 0.0
        %2130 = vmatprep.subr.mxu0 0.0
        %2131 = vmatpush1.msra.mxu0 0.0
        %2132 = vmatprep.mubr.f32.mxu0 0.0
        %2133 = vmatmul.mubr.f32.gmra.mrb[0].mxu0 %v745
        %v2134 = vpop.f32.mrb[0].mxu0
        %v2135 = vadd.f32 0.0, %v2134
        %v2136 = vpop.f32.mrb[0].mxu0
        %2137 = vmatprep.mubr.f32.mxu0 0.0
        %2138 = vmatmul.mubr.f32.gmra.mrb[0].mxu0 %v748
        %v2139 = vpop.f32.mrb[0].mxu0
        %v2140 = vadd.f32 0.0, %v2139
        %v2141 = vpop.f32.mrb[0].mxu0
        %2142 = vdwg.mxu0
        %s2143 = scalar_lea.vmem [#allocation9], 1152
        %v2144 = vld [vmem:[%s2143] sm:$0xff]
        %v2145 = vld [vmem:[%s2143 + $0x8] sm:$0xff]
        %v2146 = vld [vmem:[%s2143 + $0x10] sm:$0xff]
        %v2147 = vld [vmem:[%s2143 + $0x18] sm:$0xff]
        %v2148 = vld [vmem:[%s2143 + $0x20] sm:$0xff]
        %v2149 = vld [vmem:[%s2143 + $0x28] sm:$0xff]
        %v2150 = vld [vmem:[%s2143 + $0x30] sm:$0xff]
        %v2151 = vld [vmem:[%s2143 + $0x38] sm:$0xff]
        %v2152 = vld [vmem:[%s2143 + $0x40] sm:$0xff]
        %v2153 = vld [vmem:[%s2143 + $0x48] sm:$0xff]
        %v2154 = vld [vmem:[%s2143 + $0x50] sm:$0xff]
        %v2155 = vld [vmem:[%s2143 + $0x58] sm:$0xff]
        %v2156 = vld [vmem:[%s2143 + $0x60] sm:$0xff]
        %v2157 = vld [vmem:[%s2143 + $0x68] sm:$0xff]
        %v2158 = vld [vmem:[%s2143 + $0x70] sm:$0xff]
        %v2159 = vld [vmem:[%s2143 + $0x78] sm:$0xff]
        %s2160 = scalar_lea.vmem [#allocation9], 1280
        %v2161 = vld [vmem:[%s2160] sm:$0xff]
        %v2162 = vld [vmem:[%s2160 + $0x8] sm:$0xff]
        %v2163 = vld [vmem:[%s2160 + $0x10] sm:$0xff]
        %v2164 = vld [vmem:[%s2160 + $0x18] sm:$0xff]
        %v2165 = vld [vmem:[%s2160 + $0x20] sm:$0xff]
        %v2166 = vld [vmem:[%s2160 + $0x28] sm:$0xff]
        %v2167 = vld [vmem:[%s2160 + $0x30] sm:$0xff]
        %v2168 = vld [vmem:[%s2160 + $0x38] sm:$0xff]
        %v2169 = vld [vmem:[%s2160 + $0x40] sm:$0xff]
        %v2170 = vld [vmem:[%s2160 + $0x48] sm:$0xff]
        %v2171 = vld [vmem:[%s2160 + $0x50] sm:$0xff]
        %v2172 = vld [vmem:[%s2160 + $0x58] sm:$0xff]
        %v2173 = vld [vmem:[%s2160 + $0x60] sm:$0xff]
        %v2174 = vld [vmem:[%s2160 + $0x68] sm:$0xff]
        %v2175 = vld [vmem:[%s2160 + $0x70] sm:$0xff]
        %v2176 = vld [vmem:[%s2160 + $0x78] sm:$0xff]
        %2177 = vmatprep.subr.mxu0 0.0
        %2178 = vmatpush1.msra.mxu0 %v2161
        %2179 = vmatprep.subr.mxu0 0.0
        %2180 = vmatpush1.msra.mxu0 %v2162
        %2181 = vmatprep.subr.mxu0 0.0
        %2182 = vmatpush1.msra.mxu0 %v2163
        %2183 = vmatprep.subr.mxu0 0.0
        %2184 = vmatpush1.msra.mxu0 %v2164
        %2185 = vmatprep.subr.mxu0 0.0
        %2186 = vmatpush1.msra.mxu0 %v2165
        %2187 = vmatprep.subr.mxu0 0.0
        %2188 = vmatpush1.msra.mxu0 %v2166
        %2189 = vmatprep.subr.mxu0 0.0
        %2190 = vmatpush1.msra.mxu0 %v2167
        %2191 = vmatprep.subr.mxu0 0.0
        %2192 = vmatpush1.msra.mxu0 %v2168
        %2193 = vmatprep.subr.mxu0 0.0
        %2194 = vmatpush1.msra.mxu0 %v2169
        %2195 = vmatprep.subr.mxu0 0.0
        %2196 = vmatpush1.msra.mxu0 %v2170
        %2197 = vmatprep.subr.mxu0 0.0
        %2198 = vmatpush1.msra.mxu0 %v2171
        %2199 = vmatprep.subr.mxu0 0.0
        %2200 = vmatpush1.msra.mxu0 %v2172
        %2201 = vmatprep.subr.mxu0 0.0
        %2202 = vmatpush1.msra.mxu0 %v2173
        %2203 = vmatprep.subr.mxu0 0.0
        %2204 = vmatpush1.msra.mxu0 %v2174
        %2205 = vmatprep.subr.mxu0 0.0
        %2206 = vmatpush1.msra.mxu0 %v2175
        %2207 = vmatprep.subr.mxu0 0.0
        %2208 = vmatpush1.msra.mxu0 %v2176
        %2209 = vmatprep.subr.mxu0 0.0
        %2210 = vmatpush1.msra.mxu0 0.0
        %2211 = vmatprep.subr.mxu0 0.0
        %2212 = vmatpush1.msra.mxu0 0.0
        %2213 = vmatprep.subr.mxu0 0.0
        %2214 = vmatpush1.msra.mxu0 0.0
        %2215 = vmatprep.subr.mxu0 0.0
        %2216 = vmatpush1.msra.mxu0 0.0
        %2217 = vmatprep.subr.mxu0 0.0
        %2218 = vmatpush1.msra.mxu0 0.0
        %2219 = vmatprep.subr.mxu0 0.0
        %2220 = vmatpush1.msra.mxu0 0.0
        %2221 = vmatprep.subr.mxu0 0.0
        %2222 = vmatpush1.msra.mxu0 0.0
        %2223 = vmatprep.subr.mxu0 0.0
        %2224 = vmatpush1.msra.mxu0 0.0
        %2225 = vmatprep.subr.mxu0 0.0
        %2226 = vmatpush1.msra.mxu0 0.0
        %2227 = vmatprep.subr.mxu0 0.0
        %2228 = vmatpush1.msra.mxu0 0.0
        %2229 = vmatprep.subr.mxu0 0.0
        %2230 = vmatpush1.msra.mxu0 0.0
        %2231 = vmatprep.subr.mxu0 0.0
        %2232 = vmatpush1.msra.mxu0 0.0
        %2233 = vmatprep.subr.mxu0 0.0
        %2234 = vmatpush1.msra.mxu0 0.0
        %2235 = vmatprep.subr.mxu0 0.0
        %2236 = vmatpush1.msra.mxu0 0.0
        %2237 = vmatprep.subr.mxu0 0.0
        %2238 = vmatpush1.msra.mxu0 0.0
        %2239 = vmatprep.subr.mxu0 0.0
        %2240 = vmatpush1.msra.mxu0 0.0
        %2241 = vmatprep.mubr.f32.mxu0 0.0
        %2242 = vmatmul.mubr.f32.gmra.mrb[0].mxu0 %v1991
        %v2243 = vpop.f32.mrb[0].mxu0
        %v2244 = vadd.f32 0.0, %v2243
        %v2245 = vpop.f32.mrb[0].mxu0
        %2246 = vmatprep.mubr.f32.mxu0 0.0
        %2247 = vmatmul.mubr.f32.gmra.mrb[0].mxu0 %v1992
        %v2248 = vpop.f32.mrb[0].mxu0
        %v2249 = vadd.f32 0.0, %v2248
        %v2250 = vpop.f32.mrb[0].mxu0
        %2251 = vdwg.mxu0
        %2252 = vmatprep.subr.mxu0 0.0
        %2253 = vmatpush1.msra.mxu0 %v2144
        %2254 = vmatprep.subr.mxu0 0.0
        %2255 = vmatpush1.msra.mxu0 %v2145
        %2256 = vmatprep.subr.mxu0 0.0
        %2257 = vmatpush1.msra.mxu0 %v2146
        %2258 = vmatprep.subr.mxu0 0.0
        %2259 = vmatpush1.msra.mxu0 %v2147
        %2260 = vmatprep.subr.mxu0 0.0
        %2261 = vmatpush1.msra.mxu0 %v2148
        %2262 = vmatprep.subr.mxu0 0.0
        %2263 = vmatpush1.msra.mxu0 %v2149
        %2264 = vmatprep.subr.mxu0 0.0
        %2265 = vmatpush1.msra.mxu0 %v2150
        %2266 = vmatprep.subr.mxu0 0.0
        %2267 = vmatpush1.msra.mxu0 %v2151
        %2268 = vmatprep.subr.mxu0 0.0
        %2269 = vmatpush1.msra.mxu0 %v2152
        %2270 = vmatprep.subr.mxu0 0.0
        %2271 = vmatpush1.msra.mxu0 %v2153
        %2272 = vmatprep.subr.mxu0 0.0
        %2273 = vmatpush1.msra.mxu0 %v2154
        %2274 = vmatprep.subr.mxu0 0.0
        %2275 = vmatpush1.msra.mxu0 %v2155
        %2276 = vmatprep.subr.mxu0 0.0
        %2277 = vmatpush1.msra.mxu0 %v2156
        %2278 = vmatprep.subr.mxu0 0.0
        %2279 = vmatpush1.msra.mxu0 %v2157
        %2280 = vmatprep.subr.mxu0 0.0
        %2281 = vmatpush1.msra.mxu0 %v2158
        %2282 = vmatprep.subr.mxu0 0.0
        %2283 = vmatpush1.msra.mxu0 %v2159
        %2284 = vmatprep.subr.mxu0 0.0
        %2285 = vmatpush1.msra.mxu0 0.0
        %2286 = vmatprep.subr.mxu0 0.0
        %2287 = vmatpush1.msra.mxu0 0.0
        %2288 = vmatprep.subr.mxu0 0.0
        %2289 = vmatpush1.msra.mxu0 0.0
        %2290 = vmatprep.subr.mxu0 0.0
        %2291 = vmatpush1.msra.mxu0 0.0
        %2292 = vmatprep.subr.mxu0 0.0
        %2293 = vmatpush1.msra.mxu0 0.0
        %2294 = vmatprep.subr.mxu0 0.0
        %2295 = vmatpush1.msra.mxu0 0.0
        %2296 = vmatprep.subr.mxu0 0.0
        %2297 = vmatpush1.msra.mxu0 0.0
        %2298 = vmatprep.subr.mxu0 0.0
        %2299 = vmatpush1.msra.mxu0 0.0
        %2300 = vmatprep.subr.mxu0 0.0
        %2301 = vmatpush1.msra.mxu0 0.0
        %2302 = vmatprep.subr.mxu0 0.0
        %2303 = vmatpush1.msra.mxu0 0.0
        %2304 = vmatprep.subr.mxu0 0.0
        %2305 = vmatpush1.msra.mxu0 0.0
        %2306 = vmatprep.subr.mxu0 0.0
        %2307 = vmatpush1.msra.mxu0 0.0
        %2308 = vmatprep.subr.mxu0 0.0
        %2309 = vmatpush1.msra.mxu0 0.0
        %2310 = vmatprep.subr.mxu0 0.0
        %2311 = vmatpush1.msra.mxu0 0.0
        %2312 = vmatprep.subr.mxu0 0.0
        %2313 = vmatpush1.msra.mxu0 0.0
        %2314 = vmatprep.subr.mxu0 0.0
        %2315 = vmatpush1.msra.mxu0 0.0
        %2316 = vmatprep.mubr.f32.mxu0 0.0
        %2317 = vmatmul.mubr.f32.gmra.mrb[0].mxu0 %v2060
        %v2318 = vpop.f32.mrb[0].mxu0
        %v2319 = vadd.f32 %v2244, %v2318
        %v2320 = vpop.f32.mrb[0].mxu0
        %2321 = vmatprep.mubr.f32.mxu0 0.0
        %2322 = vmatmul.mubr.f32.gmra.mrb[0].mxu0 %v2065
        %v2323 = vpop.f32.mrb[0].mxu0
        %v2324 = vadd.f32 %v2249, %v2323
        %v2325 = vpop.f32.mrb[0].mxu0
        %2326 = vdwg.mxu0
        %s2327 = scalar_lea.vmem [#allocation9], 1408
        %v2328 = vld [vmem:[%s2327] sm:$0xff]
        %v2329 = vld [vmem:[%s2327 + $0x8] sm:$0xff]
        %v2330 = vld [vmem:[%s2327 + $0x10] sm:$0xff]
        %v2331 = vld [vmem:[%s2327 + $0x18] sm:$0xff]
        %v2332 = vld [vmem:[%s2327 + $0x20] sm:$0xff]
        %v2333 = vld [vmem:[%s2327 + $0x28] sm:$0xff]
        %v2334 = vld [vmem:[%s2327 + $0x30] sm:$0xff]
        %v2335 = vld [vmem:[%s2327 + $0x38] sm:$0xff]
        %v2336 = vld [vmem:[%s2327 + $0x40] sm:$0xff]
        %v2337 = vld [vmem:[%s2327 + $0x48] sm:$0xff]
        %v2338 = vld [vmem:[%s2327 + $0x50] sm:$0xff]
        %v2339 = vld [vmem:[%s2327 + $0x58] sm:$0xff]
        %v2340 = vld [vmem:[%s2327 + $0x60] sm:$0xff]
        %v2341 = vld [vmem:[%s2327 + $0x68] sm:$0xff]
        %v2342 = vld [vmem:[%s2327 + $0x70] sm:$0xff]
        %v2343 = vld [vmem:[%s2327 + $0x78] sm:$0xff]
        %2344 = vmatprep.subr.mxu0 0.0
        %2345 = vmatpush1.msra.mxu0 %v2328
        %2346 = vmatprep.subr.mxu0 0.0
        %2347 = vmatpush1.msra.mxu0 %v2329
        %2348 = vmatprep.subr.mxu0 0.0
        %2349 = vmatpush1.msra.mxu0 %v2330
        %2350 = vmatprep.subr.mxu0 0.0
        %2351 = vmatpush1.msra.mxu0 %v2331
        %2352 = vmatprep.subr.mxu0 0.0
        %2353 = vmatpush1.msra.mxu0 %v2332
        %2354 = vmatprep.subr.mxu0 0.0
        %2355 = vmatpush1.msra.mxu0 %v2333
        %2356 = vmatprep.subr.mxu0 0.0
        %2357 = vmatpush1.msra.mxu0 %v2334
        %2358 = vmatprep.subr.mxu0 0.0
        %2359 = vmatpush1.msra.mxu0 %v2335
        %2360 = vmatprep.subr.mxu0 0.0
        %2361 = vmatpush1.msra.mxu0 %v2336
        %2362 = vmatprep.subr.mxu0 0.0
        %2363 = vmatpush1.msra.mxu0 %v2337
        %2364 = vmatprep.subr.mxu0 0.0
        %2365 = vmatpush1.msra.mxu0 %v2338
        %2366 = vmatprep.subr.mxu0 0.0
        %2367 = vmatpush1.msra.mxu0 %v2339
        %2368 = vmatprep.subr.mxu0 0.0
        %2369 = vmatpush1.msra.mxu0 %v2340
        %2370 = vmatprep.subr.mxu0 0.0
        %2371 = vmatpush1.msra.mxu0 %v2341
        %2372 = vmatprep.subr.mxu0 0.0
        %2373 = vmatpush1.msra.mxu0 %v2342
        %2374 = vmatprep.subr.mxu0 0.0
        %2375 = vmatpush1.msra.mxu0 %v2343
        %2376 = vmatprep.subr.mxu0 0.0
        %2377 = vmatpush1.msra.mxu0 0.0
        %2378 = vmatprep.subr.mxu0 0.0
        %2379 = vmatpush1.msra.mxu0 0.0
        %2380 = vmatprep.subr.mxu0 0.0
        %2381 = vmatpush1.msra.mxu0 0.0
        %2382 = vmatprep.subr.mxu0 0.0
        %2383 = vmatpush1.msra.mxu0 0.0
        %2384 = vmatprep.subr.mxu0 0.0
        %2385 = vmatpush1.msra.mxu0 0.0
        %2386 = vmatprep.subr.mxu0 0.0
        %2387 = vmatpush1.msra.mxu0 0.0
        %2388 = vmatprep.subr.mxu0 0.0
        %2389 = vmatpush1.msra.mxu0 0.0
        %2390 = vmatprep.subr.mxu0 0.0
        %2391 = vmatpush1.msra.mxu0 0.0
        %2392 = vmatprep.subr.mxu0 0.0
        %2393 = vmatpush1.msra.mxu0 0.0
        %2394 = vmatprep.subr.mxu0 0.0
        %2395 = vmatpush1.msra.mxu0 0.0
        %2396 = vmatprep.subr.mxu0 0.0
        %2397 = vmatpush1.msra.mxu0 0.0
        %2398 = vmatprep.subr.mxu0 0.0
        %2399 = vmatpush1.msra.mxu0 0.0
        %2400 = vmatprep.subr.mxu0 0.0
        %2401 = vmatpush1.msra.mxu0 0.0
        %2402 = vmatprep.subr.mxu0 0.0
        %2403 = vmatpush1.msra.mxu0 0.0
        %2404 = vmatprep.subr.mxu0 0.0
        %2405 = vmatpush1.msra.mxu0 0.0
        %2406 = vmatprep.subr.mxu0 0.0
        %2407 = vmatpush1.msra.mxu0 0.0
        %2408 = vmatprep.mubr.f32.mxu0 0.0
        %2409 = vmatmul.mubr.f32.gmra.mrb[0].mxu0 %v2135
        %v2410 = vpop.f32.mrb[0].mxu0
        %v2411 = vadd.f32 0.0, %v2410
        %v2412 = vpop.f32.mrb[0].mxu0
        %2413 = vmatprep.mubr.f32.mxu0 0.0
        %2414 = vmatmul.mubr.f32.gmra.mrb[0].mxu0 %v2140
        %v2415 = vpop.f32.mrb[0].mxu0
        %v2416 = vadd.f32 0.0, %v2415
        %v2417 = vpop.f32.mrb[0].mxu0
        %2418 = vdwg.mxu0
        %v2419 = vadd.f32 %v2319, %v2411
        %v2420 = vadd.f32 %v2324, %v2416
        %s2421 = scalar_lea.vmem [#allocation10], 3
        %v2422 = vld [vmem:[%s2421] sm:$0x1]
        %v2424 = vlaneseq
        %v2425 = vshrl.u32 %v2424, 7
        %v2426 = vsub.s32 0, %v2425
        %v2427 = vrot.slane %v2422, %v2426
        %v2429 = vadd.f32 %v2419, %v2427
        %v2430 = vadd.f32 %v2420, %v2427
        %v2431 = vadd.f32 %v1549, %v2429
        %v2432 = vadd.f32 %v1550, %v2430
        %s2433 = scalar_lea.vmem [#allocation9], 1536
        %v2434 = vld [vmem:[%s2433] sm:$0xff]
        %v2435 = vld [vmem:[%s2433 + $0x8] sm:$0xff]
        %v2436 = vld [vmem:[%s2433 + $0x10] sm:$0xff]
        %v2437 = vld [vmem:[%s2433 + $0x18] sm:$0xff]
        %v2438 = vld [vmem:[%s2433 + $0x20] sm:$0xff]
        %v2439 = vld [vmem:[%s2433 + $0x28] sm:$0xff]
        %v2440 = vld [vmem:[%s2433 + $0x30] sm:$0xff]
        %v2441 = vld [vmem:[%s2433 + $0x38] sm:$0xff]
        %v2442 = vld [vmem:[%s2433 + $0x40] sm:$0xff]
        %v2443 = vld [vmem:[%s2433 + $0x48] sm:$0xff]
        %v2444 = vld [vmem:[%s2433 + $0x50] sm:$0xff]
        %v2445 = vld [vmem:[%s2433 + $0x58] sm:$0xff]
        %v2446 = vld [vmem:[%s2433 + $0x60] sm:$0xff]
        %v2447 = vld [vmem:[%s2433 + $0x68] sm:$0xff]
        %v2448 = vld [vmem:[%s2433 + $0x70] sm:$0xff]
        %v2449 = vld [vmem:[%s2433 + $0x78] sm:$0xff]
        %s2450 = scalar_lea.vmem [#allocation9], 1664
        %v2451 = vld [vmem:[%s2450] sm:$0xff]
        %v2452 = vld [vmem:[%s2450 + $0x8] sm:$0xff]
        %v2453 = vld [vmem:[%s2450 + $0x10] sm:$0xff]
        %v2454 = vld [vmem:[%s2450 + $0x18] sm:$0xff]
        %v2455 = vld [vmem:[%s2450 + $0x20] sm:$0xff]
        %v2456 = vld [vmem:[%s2450 + $0x28] sm:$0xff]
        %v2457 = vld [vmem:[%s2450 + $0x30] sm:$0xff]
        %v2458 = vld [vmem:[%s2450 + $0x38] sm:$0xff]
        %v2459 = vld [vmem:[%s2450 + $0x40] sm:$0xff]
        %v2460 = vld [vmem:[%s2450 + $0x48] sm:$0xff]
        %v2461 = vld [vmem:[%s2450 + $0x50] sm:$0xff]
        %v2462 = vld [vmem:[%s2450 + $0x58] sm:$0xff]
        %v2463 = vld [vmem:[%s2450 + $0x60] sm:$0xff]
        %v2464 = vld [vmem:[%s2450 + $0x68] sm:$0xff]
        %v2465 = vld [vmem:[%s2450 + $0x70] sm:$0xff]
        %v2466 = vld [vmem:[%s2450 + $0x78] sm:$0xff]
        %2467 = vmatprep.subr.mxu0 0.0
        %2468 = vmatpush1.msra.mxu0 %v2451
        %2469 = vmatprep.subr.mxu0 0.0
        %2470 = vmatpush1.msra.mxu0 %v2452
        %2471 = vmatprep.subr.mxu0 0.0
        %2472 = vmatpush1.msra.mxu0 %v2453
        %2473 = vmatprep.subr.mxu0 0.0
        %2474 = vmatpush1.msra.mxu0 %v2454
        %2475 = vmatprep.subr.mxu0 0.0
        %2476 = vmatpush1.msra.mxu0 %v2455
        %2477 = vmatprep.subr.mxu0 0.0
        %2478 = vmatpush1.msra.mxu0 %v2456
        %2479 = vmatprep.subr.mxu0 0.0
        %2480 = vmatpush1.msra.mxu0 %v2457
        %2481 = vmatprep.subr.mxu0 0.0
        %2482 = vmatpush1.msra.mxu0 %v2458
        %2483 = vmatprep.subr.mxu0 0.0
        %2484 = vmatpush1.msra.mxu0 %v2459
        %2485 = vmatprep.subr.mxu0 0.0
        %2486 = vmatpush1.msra.mxu0 %v2460
        %2487 = vmatprep.subr.mxu0 0.0
        %2488 = vmatpush1.msra.mxu0 %v2461
        %2489 = vmatprep.subr.mxu0 0.0
        %2490 = vmatpush1.msra.mxu0 %v2462
        %2491 = vmatprep.subr.mxu0 0.0
        %2492 = vmatpush1.msra.mxu0 %v2463
        %2493 = vmatprep.subr.mxu0 0.0
        %2494 = vmatpush1.msra.mxu0 %v2464
        %2495 = vmatprep.subr.mxu0 0.0
        %2496 = vmatpush1.msra.mxu0 %v2465
        %2497 = vmatprep.subr.mxu0 0.0
        %2498 = vmatpush1.msra.mxu0 %v2466
        %2499 = vmatprep.subr.mxu0 0.0
        %2500 = vmatpush1.msra.mxu0 0.0
        %2501 = vmatprep.subr.mxu0 0.0
        %2502 = vmatpush1.msra.mxu0 0.0
        %2503 = vmatprep.subr.mxu0 0.0
        %2504 = vmatpush1.msra.mxu0 0.0
        %2505 = vmatprep.subr.mxu0 0.0
        %2506 = vmatpush1.msra.mxu0 0.0
        %2507 = vmatprep.subr.mxu0 0.0
        %2508 = vmatpush1.msra.mxu0 0.0
        %2509 = vmatprep.subr.mxu0 0.0
        %2510 = vmatpush1.msra.mxu0 0.0
        %2511 = vmatprep.subr.mxu0 0.0
        %2512 = vmatpush1.msra.mxu0 0.0
        %2513 = vmatprep.subr.mxu0 0.0
        %2514 = vmatpush1.msra.mxu0 0.0
        %2515 = vmatprep.subr.mxu0 0.0
        %2516 = vmatpush1.msra.mxu0 0.0
        %2517 = vmatprep.subr.mxu0 0.0
        %2518 = vmatpush1.msra.mxu0 0.0
        %2519 = vmatprep.subr.mxu0 0.0
        %2520 = vmatpush1.msra.mxu0 0.0
        %2521 = vmatprep.subr.mxu0 0.0
        %2522 = vmatpush1.msra.mxu0 0.0
        %2523 = vmatprep.subr.mxu0 0.0
        %2524 = vmatpush1.msra.mxu0 0.0
        %2525 = vmatprep.subr.mxu0 0.0
        %2526 = vmatpush1.msra.mxu0 0.0
        %2527 = vmatprep.subr.mxu0 0.0
        %2528 = vmatpush1.msra.mxu0 0.0
        %2529 = vmatprep.subr.mxu0 0.0
        %2530 = vmatpush1.msra.mxu0 0.0
        %2531 = vmatprep.mubr.f32.mxu0 0.0
        %2532 = vmatmul.mubr.f32.gmra.mrb[0].mxu0 %v660
        %v2533 = vpop.f32.mrb[0].mxu0
        %v2534 = vadd.f32 0.0, %v2533
        %v2535 = vpop.f32.mrb[0].mxu0
        %2536 = vmatprep.mubr.f32.mxu0 0.0
        %2537 = vmatmul.mubr.f32.gmra.mrb[0].mxu0 %v661
        %v2538 = vpop.f32.mrb[0].mxu0
        %v2539 = vadd.f32 0.0, %v2538
        %v2540 = vpop.f32.mrb[0].mxu0
        %2541 = vdwg.mxu0
        %2542 = vmatprep.subr.mxu0 0.0
        %2543 = vmatpush1.msra.mxu0 %v2434
        %2544 = vmatprep.subr.mxu0 0.0
        %2545 = vmatpush1.msra.mxu0 %v2435
        %2546 = vmatprep.subr.mxu0 0.0
        %2547 = vmatpush1.msra.mxu0 %v2436
        %2548 = vmatprep.subr.mxu0 0.0
        %2549 = vmatpush1.msra.mxu0 %v2437
        %2550 = vmatprep.subr.mxu0 0.0
        %2551 = vmatpush1.msra.mxu0 %v2438
        %2552 = vmatprep.subr.mxu0 0.0
        %2553 = vmatpush1.msra.mxu0 %v2439
        %2554 = vmatprep.subr.mxu0 0.0
        %2555 = vmatpush1.msra.mxu0 %v2440
        %2556 = vmatprep.subr.mxu0 0.0
        %2557 = vmatpush1.msra.mxu0 %v2441
        %2558 = vmatprep.subr.mxu0 0.0
        %2559 = vmatpush1.msra.mxu0 %v2442
        %2560 = vmatprep.subr.mxu0 0.0
        %2561 = vmatpush1.msra.mxu0 %v2443
        %2562 = vmatprep.subr.mxu0 0.0
        %2563 = vmatpush1.msra.mxu0 %v2444
        %2564 = vmatprep.subr.mxu0 0.0
        %2565 = vmatpush1.msra.mxu0 %v2445
        %2566 = vmatprep.subr.mxu0 0.0
        %2567 = vmatpush1.msra.mxu0 %v2446
        %2568 = vmatprep.subr.mxu0 0.0
        %2569 = vmatpush1.msra.mxu0 %v2447
        %2570 = vmatprep.subr.mxu0 0.0
        %2571 = vmatpush1.msra.mxu0 %v2448
        %2572 = vmatprep.subr.mxu0 0.0
        %2573 = vmatpush1.msra.mxu0 %v2449
        %2574 = vmatprep.subr.mxu0 0.0
        %2575 = vmatpush1.msra.mxu0 0.0
        %2576 = vmatprep.subr.mxu0 0.0
        %2577 = vmatpush1.msra.mxu0 0.0
        %2578 = vmatprep.subr.mxu0 0.0
        %2579 = vmatpush1.msra.mxu0 0.0
        %2580 = vmatprep.subr.mxu0 0.0
        %2581 = vmatpush1.msra.mxu0 0.0
        %2582 = vmatprep.subr.mxu0 0.0
        %2583 = vmatpush1.msra.mxu0 0.0
        %2584 = vmatprep.subr.mxu0 0.0
        %2585 = vmatpush1.msra.mxu0 0.0
        %2586 = vmatprep.subr.mxu0 0.0
        %2587 = vmatpush1.msra.mxu0 0.0
        %2588 = vmatprep.subr.mxu0 0.0
        %2589 = vmatpush1.msra.mxu0 0.0
        %2590 = vmatprep.subr.mxu0 0.0
        %2591 = vmatpush1.msra.mxu0 0.0
        %2592 = vmatprep.subr.mxu0 0.0
        %2593 = vmatpush1.msra.mxu0 0.0
        %2594 = vmatprep.subr.mxu0 0.0
        %2595 = vmatpush1.msra.mxu0 0.0
        %2596 = vmatprep.subr.mxu0 0.0
        %2597 = vmatpush1.msra.mxu0 0.0
        %2598 = vmatprep.subr.mxu0 0.0
        %2599 = vmatpush1.msra.mxu0 0.0
        %2600 = vmatprep.subr.mxu0 0.0
        %2601 = vmatpush1.msra.mxu0 0.0
        %2602 = vmatprep.subr.mxu0 0.0
        %2603 = vmatpush1.msra.mxu0 0.0
        %2604 = vmatprep.subr.mxu0 0.0
        %2605 = vmatpush1.msra.mxu0 0.0
        %2606 = vmatprep.mubr.f32.mxu0 0.0
        %2607 = vmatmul.mubr.f32.gmra.mrb[0].mxu0 %v736
        %v2608 = vpop.f32.mrb[0].mxu0
        %v2609 = vadd.f32 %v2534, %v2608
        %v2610 = vpop.f32.mrb[0].mxu0
        %2611 = vmatprep.mubr.f32.mxu0 0.0
        %2612 = vmatmul.mubr.f32.gmra.mrb[0].mxu0 %v741
        %v2613 = vpop.f32.mrb[0].mxu0
        %v2614 = vadd.f32 %v2539, %v2613
        %v2615 = vpop.f32.mrb[0].mxu0
        %2616 = vdwg.mxu0
        %s2617 = scalar_lea.vmem [#allocation9], 1792
        %v2618 = vld [vmem:[%s2617] sm:$0xff]
        %v2619 = vld [vmem:[%s2617 + $0x8] sm:$0xff]
        %v2620 = vld [vmem:[%s2617 + $0x10] sm:$0xff]
        %v2621 = vld [vmem:[%s2617 + $0x18] sm:$0xff]
        %v2622 = vld [vmem:[%s2617 + $0x20] sm:$0xff]
        %v2623 = vld [vmem:[%s2617 + $0x28] sm:$0xff]
        %v2624 = vld [vmem:[%s2617 + $0x30] sm:$0xff]
        %v2625 = vld [vmem:[%s2617 + $0x38] sm:$0xff]
        %v2626 = vld [vmem:[%s2617 + $0x40] sm:$0xff]
        %v2627 = vld [vmem:[%s2617 + $0x48] sm:$0xff]
        %v2628 = vld [vmem:[%s2617 + $0x50] sm:$0xff]
        %v2629 = vld [vmem:[%s2617 + $0x58] sm:$0xff]
        %v2630 = vld [vmem:[%s2617 + $0x60] sm:$0xff]
        %v2631 = vld [vmem:[%s2617 + $0x68] sm:$0xff]
        %v2632 = vld [vmem:[%s2617 + $0x70] sm:$0xff]
        %v2633 = vld [vmem:[%s2617 + $0x78] sm:$0xff]
        %2634 = vmatprep.subr.mxu0 0.0
        %2635 = vmatpush1.msra.mxu0 %v2618
        %2636 = vmatprep.subr.mxu0 0.0
        %2637 = vmatpush1.msra.mxu0 %v2619
        %2638 = vmatprep.subr.mxu0 0.0
        %2639 = vmatpush1.msra.mxu0 %v2620
        %2640 = vmatprep.subr.mxu0 0.0
        %2641 = vmatpush1.msra.mxu0 %v2621
        %2642 = vmatprep.subr.mxu0 0.0
        %2643 = vmatpush1.msra.mxu0 %v2622
        %2644 = vmatprep.subr.mxu0 0.0
        %2645 = vmatpush1.msra.mxu0 %v2623
        %2646 = vmatprep.subr.mxu0 0.0
        %2647 = vmatpush1.msra.mxu0 %v2624
        %2648 = vmatprep.subr.mxu0 0.0
        %2649 = vmatpush1.msra.mxu0 %v2625
        %2650 = vmatprep.subr.mxu0 0.0
        %2651 = vmatpush1.msra.mxu0 %v2626
        %2652 = vmatprep.subr.mxu0 0.0
        %2653 = vmatpush1.msra.mxu0 %v2627
        %2654 = vmatprep.subr.mxu0 0.0
        %2655 = vmatpush1.msra.mxu0 %v2628
        %2656 = vmatprep.subr.mxu0 0.0
        %2657 = vmatpush1.msra.mxu0 %v2629
        %2658 = vmatprep.subr.mxu0 0.0
        %2659 = vmatpush1.msra.mxu0 %v2630
        %2660 = vmatprep.subr.mxu0 0.0
        %2661 = vmatpush1.msra.mxu0 %v2631
        %2662 = vmatprep.subr.mxu0 0.0
        %2663 = vmatpush1.msra.mxu0 %v2632
        %2664 = vmatprep.subr.mxu0 0.0
        %2665 = vmatpush1.msra.mxu0 %v2633
        %2666 = vmatprep.subr.mxu0 0.0
        %2667 = vmatpush1.msra.mxu0 0.0
        %2668 = vmatprep.subr.mxu0 0.0
        %2669 = vmatpush1.msra.mxu0 0.0
        %2670 = vmatprep.subr.mxu0 0.0
        %2671 = vmatpush1.msra.mxu0 0.0
        %2672 = vmatprep.subr.mxu0 0.0
        %2673 = vmatpush1.msra.mxu0 0.0
        %2674 = vmatprep.subr.mxu0 0.0
        %2675 = vmatpush1.msra.mxu0 0.0
        %2676 = vmatprep.subr.mxu0 0.0
        %2677 = vmatpush1.msra.mxu0 0.0
        %2678 = vmatprep.subr.mxu0 0.0
        %2679 = vmatpush1.msra.mxu0 0.0
        %2680 = vmatprep.subr.mxu0 0.0
        %2681 = vmatpush1.msra.mxu0 0.0
        %2682 = vmatprep.subr.mxu0 0.0
        %2683 = vmatpush1.msra.mxu0 0.0
        %2684 = vmatprep.subr.mxu0 0.0
        %2685 = vmatpush1.msra.mxu0 0.0
        %2686 = vmatprep.subr.mxu0 0.0
        %2687 = vmatpush1.msra.mxu0 0.0
        %2688 = vmatprep.subr.mxu0 0.0
        %2689 = vmatpush1.msra.mxu0 0.0
        %2690 = vmatprep.subr.mxu0 0.0
        %2691 = vmatpush1.msra.mxu0 0.0
        %2692 = vmatprep.subr.mxu0 0.0
        %2693 = vmatpush1.msra.mxu0 0.0
        %2694 = vmatprep.subr.mxu0 0.0
        %2695 = vmatpush1.msra.mxu0 0.0
        %2696 = vmatprep.subr.mxu0 0.0
        %2697 = vmatpush1.msra.mxu0 0.0
        %2698 = vmatprep.mubr.f32.mxu0 0.0
        %2699 = vmatmul.mubr.f32.gmra.mrb[0].mxu0 %v817
        %v2700 = vpop.f32.mrb[0].mxu0
        %v2701 = vadd.f32 0.0, %v2700
        %v2702 = vpop.f32.mrb[0].mxu0
        %2703 = vmatprep.mubr.f32.mxu0 0.0
        %2704 = vmatmul.mubr.f32.gmra.mrb[0].mxu0 %v822
        %v2705 = vpop.f32.mrb[0].mxu0
        %v2706 = vadd.f32 0.0, %v2705
        %v2707 = vpop.f32.mrb[0].mxu0
        %2708 = vdwg.mxu0
        %v2709 = vadd.f32 %v2609, %v2701
        %v2710 = vadd.f32 %v2614, %v2706
        %s2711 = scalar_lea.vmem [#allocation10], 4
        %v2712 = vld [vmem:[%s2711] sm:$0x1]
        %v2714 = vlaneseq
        %v2715 = vshrl.u32 %v2714, 7
        %v2716 = vsub.s32 0, %v2715
        %v2717 = vrot.slane %v2712, %v2716
        %v2719 = vadd.f32 %v2709, %v2717
        %v2720 = vadd.f32 %v2710, %v2717
        %v2721 = vmax.f32 %v2719, 0.0
        %v2722 = vmax.f32 %v2720, 0.0
        %2723 = vmatprep.subr.mxu0 0.0
        %2724 = vmatpush1.msra.mxu0 %v2721
        %2725 = vmatprep.subr.mxu0 0.0
        %2726 = vmatpush1.msra.mxu0 %v2722
        %2727 = vmatprep.subr.mxu0 0.0
        %2728 = vmatpush1.msra.mxu0 0.0
        %2729 = vmatprep.subr.mxu0 0.0
        %2730 = vmatpush1.msra.mxu0 0.0
        %2731 = vmatprep.subr.mxu0 0.0
        %2732 = vmatpush1.msra.mxu0 0.0
        %2733 = vmatprep.subr.mxu0 0.0
        %2734 = vmatpush1.msra.mxu0 0.0
        %2735 = vmatprep.subr.mxu0 0.0
        %2736 = vmatpush1.msra.mxu0 0.0
        %2737 = vmatprep.subr.mxu0 0.0
        %2738 = vmatpush1.msra.mxu0 0.0
        %2739 = vmatprep.subr.mxu0 0.0
        %2740 = vmatpush1.msra.mxu0 0.0
        %2741 = vmatprep.subr.mxu0 0.0
        %2742 = vmatpush1.msra.mxu0 0.0
        %2743 = vmatprep.subr.mxu0 0.0
        %2744 = vmatpush1.msra.mxu0 0.0
        %2745 = vmatprep.subr.mxu0 0.0
        %2746 = vmatpush1.msra.mxu0 0.0
        %2747 = vmatprep.subr.mxu0 0.0
        %2748 = vmatpush1.msra.mxu0 0.0
        %2749 = vmatprep.subr.mxu0 0.0
        %2750 = vmatpush1.msra.mxu0 0.0
        %2751 = vmatprep.subr.mxu0 0.0
        %2752 = vmatpush1.msra.mxu0 0.0
        %2753 = vmatprep.subr.mxu0 0.0
        %2754 = vmatpush1.msra.mxu0 0.0
        %2755 = vmatprep.subr.mxu0 0.0
        %2756 = vmatpush1.msra.mxu0 0.0
        %2757 = vmatprep.subr.mxu0 0.0
        %2758 = vmatpush1.msra.mxu0 0.0
        %2759 = vmatprep.subr.mxu0 0.0
        %2760 = vmatpush1.msra.mxu0 0.0
        %2761 = vmatprep.subr.mxu0 0.0
        %2762 = vmatpush1.msra.mxu0 0.0
        %2763 = vmatprep.subr.mxu0 0.0
        %2764 = vmatpush1.msra.mxu0 0.0
        %2765 = vmatprep.subr.mxu0 0.0
        %2766 = vmatpush1.msra.mxu0 0.0
        %2767 = vmatprep.subr.mxu0 0.0
        %2768 = vmatpush1.msra.mxu0 0.0
        %2769 = vmatprep.subr.mxu0 0.0
        %2770 = vmatpush1.msra.mxu0 0.0
        %2771 = vmatprep.subr.mxu0 0.0
        %2772 = vmatpush1.msra.mxu0 0.0
        %2773 = vmatprep.subr.mxu0 0.0
        %2774 = vmatpush1.msra.mxu0 0.0
        %2775 = vmatprep.subr.mxu0 0.0
        %2776 = vmatpush1.msra.mxu0 0.0
        %2777 = vmatprep.subr.mxu0 0.0
        %2778 = vmatpush1.msra.mxu0 0.0
        %2779 = vmatprep.subr.mxu0 0.0
        %2780 = vmatpush1.msra.mxu0 0.0
        %2781 = vmatprep.subr.mxu0 0.0
        %2782 = vmatpush1.msra.mxu0 0.0
        %2783 = vmatprep.subr.mxu0 0.0
        %2784 = vmatpush1.msra.mxu0 0.0
        %2785 = vmatprep.subr.mxu0 0.0
        %2786 = vmatpush1.msra.mxu0 0.0
        %2787 = vmatprep.mubr.f32.mxu0 0.0
        %2788 = vmatmul.mubr.f32.gmra.mrb[0].mxu0 %v664
        %v2789 = vpop.f32.mrb[0].mxu0
        %v2790 = vadd.f32 0.0, %v2789
        %v2791 = vpop.f32.mrb[0].mxu0
        %2792 = vmatprep.mubr.f32.mxu0 0.0
        %2793 = vmatmul.mubr.f32.gmra.mrb[0].mxu0 %v667
        %v2794 = vpop.f32.mrb[0].mxu0
        %v2795 = vadd.f32 0.0, %v2794
        %v2796 = vpop.f32.mrb[0].mxu0
        %2797 = vdwg.mxu0
        %2798 = vmatprep.subr.mxu0 0.0
        %2799 = vmatpush1.msra.mxu0 %v2721
        %2800 = vmatprep.subr.mxu0 0.0
        %2801 = vmatpush1.msra.mxu0 %v2722
        %2802 = vmatprep.subr.mxu0 0.0
        %2803 = vmatpush1.msra.mxu0 0.0
        %2804 = vmatprep.subr.mxu0 0.0
        %2805 = vmatpush1.msra.mxu0 0.0
        %2806 = vmatprep.subr.mxu0 0.0
        %2807 = vmatpush1.msra.mxu0 0.0
        %2808 = vmatprep.subr.mxu0 0.0
        %2809 = vmatpush1.msra.mxu0 0.0
        %2810 = vmatprep.subr.mxu0 0.0
        %2811 = vmatpush1.msra.mxu0 0.0
        %2812 = vmatprep.subr.mxu0 0.0
        %2813 = vmatpush1.msra.mxu0 0.0
        %2814 = vmatprep.subr.mxu0 0.0
        %2815 = vmatpush1.msra.mxu0 0.0
        %2816 = vmatprep.subr.mxu0 0.0
        %2817 = vmatpush1.msra.mxu0 0.0
        %2818 = vmatprep.subr.mxu0 0.0
        %2819 = vmatpush1.msra.mxu0 0.0
        %2820 = vmatprep.subr.mxu0 0.0
        %2821 = vmatpush1.msra.mxu0 0.0
        %2822 = vmatprep.subr.mxu0 0.0
        %2823 = vmatpush1.msra.mxu0 0.0
        %2824 = vmatprep.subr.mxu0 0.0
        %2825 = vmatpush1.msra.mxu0 0.0
        %2826 = vmatprep.subr.mxu0 0.0
        %2827 = vmatpush1.msra.mxu0 0.0
        %2828 = vmatprep.subr.mxu0 0.0
        %2829 = vmatpush1.msra.mxu0 0.0
        %2830 = vmatprep.subr.mxu0 0.0
        %2831 = vmatpush1.msra.mxu0 0.0
        %2832 = vmatprep.subr.mxu0 0.0
        %2833 = vmatpush1.msra.mxu0 0.0
        %2834 = vmatprep.subr.mxu0 0.0
        %2835 = vmatpush1.msra.mxu0 0.0
        %2836 = vmatprep.subr.mxu0 0.0
        %2837 = vmatpush1.msra.mxu0 0.0
        %2838 = vmatprep.subr.mxu0 0.0
        %2839 = vmatpush1.msra.mxu0 0.0
        %2840 = vmatprep.subr.mxu0 0.0
        %2841 = vmatpush1.msra.mxu0 0.0
        %2842 = vmatprep.subr.mxu0 0.0
        %2843 = vmatpush1.msra.mxu0 0.0
        %2844 = vmatprep.subr.mxu0 0.0
        %2845 = vmatpush1.msra.mxu0 0.0
        %2846 = vmatprep.subr.mxu0 0.0
        %2847 = vmatpush1.msra.mxu0 0.0
        %2848 = vmatprep.subr.mxu0 0.0
        %2849 = vmatpush1.msra.mxu0 0.0
        %2850 = vmatprep.subr.mxu0 0.0
        %2851 = vmatpush1.msra.mxu0 0.0
        %2852 = vmatprep.subr.mxu0 0.0
        %2853 = vmatpush1.msra.mxu0 0.0
        %2854 = vmatprep.subr.mxu0 0.0
        %2855 = vmatpush1.msra.mxu0 0.0
        %2856 = vmatprep.subr.mxu0 0.0
        %2857 = vmatpush1.msra.mxu0 0.0
        %2858 = vmatprep.subr.mxu0 0.0
        %2859 = vmatpush1.msra.mxu0 0.0
        %2860 = vmatprep.subr.mxu0 0.0
        %2861 = vmatpush1.msra.mxu0 0.0
        %2862 = vmatprep.mubr.f32.mxu0 0.0
        %2863 = vmatmul.mubr.f32.gmra.mrb[0].mxu0 %v745
        %v2864 = vpop.f32.mrb[0].mxu0
        %v2865 = vadd.f32 0.0, %v2864
        %v2866 = vpop.f32.mrb[0].mxu0
        %2867 = vmatprep.mubr.f32.mxu0 0.0
        %2868 = vmatmul.mubr.f32.gmra.mrb[0].mxu0 %v748
        %v2869 = vpop.f32.mrb[0].mxu0
        %v2870 = vadd.f32 0.0, %v2869
        %v2871 = vpop.f32.mrb[0].mxu0
        %2872 = vdwg.mxu0
        %s2873 = scalar_lea.vmem [#allocation9], 1920
        %v2874 = vld [vmem:[%s2873] sm:$0xff]
        %v2875 = vld [vmem:[%s2873 + $0x8] sm:$0xff]
        %v2876 = vld [vmem:[%s2873 + $0x10] sm:$0xff]
        %v2877 = vld [vmem:[%s2873 + $0x18] sm:$0xff]
        %v2878 = vld [vmem:[%s2873 + $0x20] sm:$0xff]
        %v2879 = vld [vmem:[%s2873 + $0x28] sm:$0xff]
        %v2880 = vld [vmem:[%s2873 + $0x30] sm:$0xff]
        %v2881 = vld [vmem:[%s2873 + $0x38] sm:$0xff]
        %v2882 = vld [vmem:[%s2873 + $0x40] sm:$0xff]
        %v2883 = vld [vmem:[%s2873 + $0x48] sm:$0xff]
        %v2884 = vld [vmem:[%s2873 + $0x50] sm:$0xff]
        %v2885 = vld [vmem:[%s2873 + $0x58] sm:$0xff]
        %v2886 = vld [vmem:[%s2873 + $0x60] sm:$0xff]
        %v2887 = vld [vmem:[%s2873 + $0x68] sm:$0xff]
        %v2888 = vld [vmem:[%s2873 + $0x70] sm:$0xff]
        %v2889 = vld [vmem:[%s2873 + $0x78] sm:$0xff]
        %s2890 = scalar_lea.vmem [#allocation9], 2048
        %v2891 = vld [vmem:[%s2890] sm:$0xff]
        %v2892 = vld [vmem:[%s2890 + $0x8] sm:$0xff]
        %v2893 = vld [vmem:[%s2890 + $0x10] sm:$0xff]
        %v2894 = vld [vmem:[%s2890 + $0x18] sm:$0xff]
        %v2895 = vld [vmem:[%s2890 + $0x20] sm:$0xff]
        %v2896 = vld [vmem:[%s2890 + $0x28] sm:$0xff]
        %v2897 = vld [vmem:[%s2890 + $0x30] sm:$0xff]
        %v2898 = vld [vmem:[%s2890 + $0x38] sm:$0xff]
        %v2899 = vld [vmem:[%s2890 + $0x40] sm:$0xff]
        %v2900 = vld [vmem:[%s2890 + $0x48] sm:$0xff]
        %v2901 = vld [vmem:[%s2890 + $0x50] sm:$0xff]
        %v2902 = vld [vmem:[%s2890 + $0x58] sm:$0xff]
        %v2903 = vld [vmem:[%s2890 + $0x60] sm:$0xff]
        %v2904 = vld [vmem:[%s2890 + $0x68] sm:$0xff]
        %v2905 = vld [vmem:[%s2890 + $0x70] sm:$0xff]
        %v2906 = vld [vmem:[%s2890 + $0x78] sm:$0xff]
        %2907 = vmatprep.subr.mxu0 0.0
        %2908 = vmatpush1.msra.mxu0 %v2891
        %2909 = vmatprep.subr.mxu0 0.0
        %2910 = vmatpush1.msra.mxu0 %v2892
        %2911 = vmatprep.subr.mxu0 0.0
        %2912 = vmatpush1.msra.mxu0 %v2893
        %2913 = vmatprep.subr.mxu0 0.0
        %2914 = vmatpush1.msra.mxu0 %v2894
        %2915 = vmatprep.subr.mxu0 0.0
        %2916 = vmatpush1.msra.mxu0 %v2895
        %2917 = vmatprep.subr.mxu0 0.0
        %2918 = vmatpush1.msra.mxu0 %v2896
        %2919 = vmatprep.subr.mxu0 0.0
        %2920 = vmatpush1.msra.mxu0 %v2897
        %2921 = vmatprep.subr.mxu0 0.0
        %2922 = vmatpush1.msra.mxu0 %v2898
        %2923 = vmatprep.subr.mxu0 0.0
        %2924 = vmatpush1.msra.mxu0 %v2899
        %2925 = vmatprep.subr.mxu0 0.0
        %2926 = vmatpush1.msra.mxu0 %v2900
        %2927 = vmatprep.subr.mxu0 0.0
        %2928 = vmatpush1.msra.mxu0 %v2901
        %2929 = vmatprep.subr.mxu0 0.0
        %2930 = vmatpush1.msra.mxu0 %v2902
        %2931 = vmatprep.subr.mxu0 0.0
        %2932 = vmatpush1.msra.mxu0 %v2903
        %2933 = vmatprep.subr.mxu0 0.0
        %2934 = vmatpush1.msra.mxu0 %v2904
        %2935 = vmatprep.subr.mxu0 0.0
        %2936 = vmatpush1.msra.mxu0 %v2905
        %2937 = vmatprep.subr.mxu0 0.0
        %2938 = vmatpush1.msra.mxu0 %v2906
        %2939 = vmatprep.subr.mxu0 0.0
        %2940 = vmatpush1.msra.mxu0 0.0
        %2941 = vmatprep.subr.mxu0 0.0
        %2942 = vmatpush1.msra.mxu0 0.0
        %2943 = vmatprep.subr.mxu0 0.0
        %2944 = vmatpush1.msra.mxu0 0.0
        %2945 = vmatprep.subr.mxu0 0.0
        %2946 = vmatpush1.msra.mxu0 0.0
        %2947 = vmatprep.subr.mxu0 0.0
        %2948 = vmatpush1.msra.mxu0 0.0
        %2949 = vmatprep.subr.mxu0 0.0
        %2950 = vmatpush1.msra.mxu0 0.0
        %2951 = vmatprep.subr.mxu0 0.0
        %2952 = vmatpush1.msra.mxu0 0.0
        %2953 = vmatprep.subr.mxu0 0.0
        %2954 = vmatpush1.msra.mxu0 0.0
        %2955 = vmatprep.subr.mxu0 0.0
        %2956 = vmatpush1.msra.mxu0 0.0
        %2957 = vmatprep.subr.mxu0 0.0
        %2958 = vmatpush1.msra.mxu0 0.0
        %2959 = vmatprep.subr.mxu0 0.0
        %2960 = vmatpush1.msra.mxu0 0.0
        %2961 = vmatprep.subr.mxu0 0.0
        %2962 = vmatpush1.msra.mxu0 0.0
        %2963 = vmatprep.subr.mxu0 0.0
        %2964 = vmatpush1.msra.mxu0 0.0
        %2965 = vmatprep.subr.mxu0 0.0
        %2966 = vmatpush1.msra.mxu0 0.0
        %2967 = vmatprep.subr.mxu0 0.0
        %2968 = vmatpush1.msra.mxu0 0.0
        %2969 = vmatprep.subr.mxu0 0.0
        %2970 = vmatpush1.msra.mxu0 0.0
        %2971 = vmatprep.mubr.f32.mxu0 0.0
        %2972 = vmatmul.mubr.f32.gmra.mrb[0].mxu0 %v2721
        %v2973 = vpop.f32.mrb[0].mxu0
        %v2974 = vadd.f32 0.0, %v2973
        %v2975 = vpop.f32.mrb[0].mxu0
        %2976 = vmatprep.mubr.f32.mxu0 0.0
        %2977 = vmatmul.mubr.f32.gmra.mrb[0].mxu0 %v2722
        %v2978 = vpop.f32.mrb[0].mxu0
        %v2979 = vadd.f32 0.0, %v2978
        %v2980 = vpop.f32.mrb[0].mxu0
        %2981 = vdwg.mxu0
        %2982 = vmatprep.subr.mxu0 0.0
        %2983 = vmatpush1.msra.mxu0 %v2874
        %2984 = vmatprep.subr.mxu0 0.0
        %2985 = vmatpush1.msra.mxu0 %v2875
        %2986 = vmatprep.subr.mxu0 0.0
        %2987 = vmatpush1.msra.mxu0 %v2876
        %2988 = vmatprep.subr.mxu0 0.0
        %2989 = vmatpush1.msra.mxu0 %v2877
        %2990 = vmatprep.subr.mxu0 0.0
        %2991 = vmatpush1.msra.mxu0 %v2878
        %2992 = vmatprep.subr.mxu0 0.0
        %2993 = vmatpush1.msra.mxu0 %v2879
        %2994 = vmatprep.subr.mxu0 0.0
        %2995 = vmatpush1.msra.mxu0 %v2880
        %2996 = vmatprep.subr.mxu0 0.0
        %2997 = vmatpush1.msra.mxu0 %v2881
        %2998 = vmatprep.subr.mxu0 0.0
        %2999 = vmatpush1.msra.mxu0 %v2882
        %3000 = vmatprep.subr.mxu0 0.0
        %3001 = vmatpush1.msra.mxu0 %v2883
        %3002 = vmatprep.subr.mxu0 0.0
        %3003 = vmatpush1.msra.mxu0 %v2884
        %3004 = vmatprep.subr.mxu0 0.0
        %3005 = vmatpush1.msra.mxu0 %v2885
        %3006 = vmatprep.subr.mxu0 0.0
        %3007 = vmatpush1.msra.mxu0 %v2886
        %3008 = vmatprep.subr.mxu0 0.0
        %3009 = vmatpush1.msra.mxu0 %v2887
        %3010 = vmatprep.subr.mxu0 0.0
        %3011 = vmatpush1.msra.mxu0 %v2888
        %3012 = vmatprep.subr.mxu0 0.0
        %3013 = vmatpush1.msra.mxu0 %v2889
        %3014 = vmatprep.subr.mxu0 0.0
        %3015 = vmatpush1.msra.mxu0 0.0
        %3016 = vmatprep.subr.mxu0 0.0
        %3017 = vmatpush1.msra.mxu0 0.0
        %3018 = vmatprep.subr.mxu0 0.0
        %3019 = vmatpush1.msra.mxu0 0.0
        %3020 = vmatprep.subr.mxu0 0.0
        %3021 = vmatpush1.msra.mxu0 0.0
        %3022 = vmatprep.subr.mxu0 0.0
        %3023 = vmatpush1.msra.mxu0 0.0
        %3024 = vmatprep.subr.mxu0 0.0
        %3025 = vmatpush1.msra.mxu0 0.0
        %3026 = vmatprep.subr.mxu0 0.0
        %3027 = vmatpush1.msra.mxu0 0.0
        %3028 = vmatprep.subr.mxu0 0.0
        %3029 = vmatpush1.msra.mxu0 0.0
        %3030 = vmatprep.subr.mxu0 0.0
        %3031 = vmatpush1.msra.mxu0 0.0
        %3032 = vmatprep.subr.mxu0 0.0
        %3033 = vmatpush1.msra.mxu0 0.0
        %3034 = vmatprep.subr.mxu0 0.0
        %3035 = vmatpush1.msra.mxu0 0.0
        %3036 = vmatprep.subr.mxu0 0.0
        %3037 = vmatpush1.msra.mxu0 0.0
        %3038 = vmatprep.subr.mxu0 0.0
        %3039 = vmatpush1.msra.mxu0 0.0
        %3040 = vmatprep.subr.mxu0 0.0
        %3041 = vmatpush1.msra.mxu0 0.0
        %3042 = vmatprep.subr.mxu0 0.0
        %3043 = vmatpush1.msra.mxu0 0.0
        %3044 = vmatprep.subr.mxu0 0.0
        %3045 = vmatpush1.msra.mxu0 0.0
        %3046 = vmatprep.mubr.f32.mxu0 0.0
        %3047 = vmatmul.mubr.f32.gmra.mrb[0].mxu0 %v2790
        %v3048 = vpop.f32.mrb[0].mxu0
        %v3049 = vadd.f32 %v2974, %v3048
        %v3050 = vpop.f32.mrb[0].mxu0
        %3051 = vmatprep.mubr.f32.mxu0 0.0
        %3052 = vmatmul.mubr.f32.gmra.mrb[0].mxu0 %v2795
        %v3053 = vpop.f32.mrb[0].mxu0
        %v3054 = vadd.f32 %v2979, %v3053
        %v3055 = vpop.f32.mrb[0].mxu0
        %3056 = vdwg.mxu0
        %s3057 = scalar_lea.vmem [#allocation9], 2176
        %v3058 = vld [vmem:[%s3057] sm:$0xff]
        %v3059 = vld [vmem:[%s3057 + $0x8] sm:$0xff]
        %v3060 = vld [vmem:[%s3057 + $0x10] sm:$0xff]
        %v3061 = vld [vmem:[%s3057 + $0x18] sm:$0xff]
        %v3062 = vld [vmem:[%s3057 + $0x20] sm:$0xff]
        %v3063 = vld [vmem:[%s3057 + $0x28] sm:$0xff]
        %v3064 = vld [vmem:[%s3057 + $0x30] sm:$0xff]
        %v3065 = vld [vmem:[%s3057 + $0x38] sm:$0xff]
        %v3066 = vld [vmem:[%s3057 + $0x40] sm:$0xff]
        %v3067 = vld [vmem:[%s3057 + $0x48] sm:$0xff]
        %v3068 = vld [vmem:[%s3057 + $0x50] sm:$0xff]
        %v3069 = vld [vmem:[%s3057 + $0x58] sm:$0xff]
        %v3070 = vld [vmem:[%s3057 + $0x60] sm:$0xff]
        %v3071 = vld [vmem:[%s3057 + $0x68] sm:$0xff]
        %v3072 = vld [vmem:[%s3057 + $0x70] sm:$0xff]
        %v3073 = vld [vmem:[%s3057 + $0x78] sm:$0xff]
        %3074 = vmatprep.subr.mxu0 0.0
        %3075 = vmatpush1.msra.mxu0 %v3058
        %3076 = vmatprep.subr.mxu0 0.0
        %3077 = vmatpush1.msra.mxu0 %v3059
        %3078 = vmatprep.subr.mxu0 0.0
        %3079 = vmatpush1.msra.mxu0 %v3060
        %3080 = vmatprep.subr.mxu0 0.0
        %3081 = vmatpush1.msra.mxu0 %v3061
        %3082 = vmatprep.subr.mxu0 0.0
        %3083 = vmatpush1.msra.mxu0 %v3062
        %3084 = vmatprep.subr.mxu0 0.0
        %3085 = vmatpush1.msra.mxu0 %v3063
        %3086 = vmatprep.subr.mxu0 0.0
        %3087 = vmatpush1.msra.mxu0 %v3064
        %3088 = vmatprep.subr.mxu0 0.0
        %3089 = vmatpush1.msra.mxu0 %v3065
        %3090 = vmatprep.subr.mxu0 0.0
        %3091 = vmatpush1.msra.mxu0 %v3066
        %3092 = vmatprep.subr.mxu0 0.0
        %3093 = vmatpush1.msra.mxu0 %v3067
        %3094 = vmatprep.subr.mxu0 0.0
        %3095 = vmatpush1.msra.mxu0 %v3068
        %3096 = vmatprep.subr.mxu0 0.0
        %3097 = vmatpush1.msra.mxu0 %v3069
        %3098 = vmatprep.subr.mxu0 0.0
        %3099 = vmatpush1.msra.mxu0 %v3070
        %3100 = vmatprep.subr.mxu0 0.0
        %3101 = vmatpush1.msra.mxu0 %v3071
        %3102 = vmatprep.subr.mxu0 0.0
        %3103 = vmatpush1.msra.mxu0 %v3072
        %3104 = vmatprep.subr.mxu0 0.0
        %3105 = vmatpush1.msra.mxu0 %v3073
        %3106 = vmatprep.subr.mxu0 0.0
        %3107 = vmatpush1.msra.mxu0 0.0
        %3108 = vmatprep.subr.mxu0 0.0
        %3109 = vmatpush1.msra.mxu0 0.0
        %3110 = vmatprep.subr.mxu0 0.0
        %3111 = vmatpush1.msra.mxu0 0.0
        %3112 = vmatprep.subr.mxu0 0.0
        %3113 = vmatpush1.msra.mxu0 0.0
        %3114 = vmatprep.subr.mxu0 0.0
        %3115 = vmatpush1.msra.mxu0 0.0
        %3116 = vmatprep.subr.mxu0 0.0
        %3117 = vmatpush1.msra.mxu0 0.0
        %3118 = vmatprep.subr.mxu0 0.0
        %3119 = vmatpush1.msra.mxu0 0.0
        %3120 = vmatprep.subr.mxu0 0.0
        %3121 = vmatpush1.msra.mxu0 0.0
        %3122 = vmatprep.subr.mxu0 0.0
        %3123 = vmatpush1.msra.mxu0 0.0
        %3124 = vmatprep.subr.mxu0 0.0
        %3125 = vmatpush1.msra.mxu0 0.0
        %3126 = vmatprep.subr.mxu0 0.0
        %3127 = vmatpush1.msra.mxu0 0.0
        %3128 = vmatprep.subr.mxu0 0.0
        %3129 = vmatpush1.msra.mxu0 0.0
        %3130 = vmatprep.subr.mxu0 0.0
        %3131 = vmatpush1.msra.mxu0 0.0
        %3132 = vmatprep.subr.mxu0 0.0
        %3133 = vmatpush1.msra.mxu0 0.0
        %3134 = vmatprep.subr.mxu0 0.0
        %3135 = vmatpush1.msra.mxu0 0.0
        %3136 = vmatprep.subr.mxu0 0.0
        %3137 = vmatpush1.msra.mxu0 0.0
        %3138 = vmatprep.mubr.f32.mxu0 0.0
        %3139 = vmatmul.mubr.f32.gmra.mrb[0].mxu0 %v2865
        %v3140 = vpop.f32.mrb[0].mxu0
        %v3141 = vadd.f32 0.0, %v3140
        %v3142 = vpop.f32.mrb[0].mxu0
        %3143 = vmatprep.mubr.f32.mxu0 0.0
        %3144 = vmatmul.mubr.f32.gmra.mrb[0].mxu0 %v2870
        %v3145 = vpop.f32.mrb[0].mxu0
        %v3146 = vadd.f32 0.0, %v3145
        %v3147 = vpop.f32.mrb[0].mxu0
        %3148 = vdwg.mxu0
        %v3149 = vadd.f32 %v3049, %v3141
        %v3150 = vadd.f32 %v3054, %v3146
        %s3151 = scalar_lea.vmem [#allocation10], 5
        %v3152 = vld [vmem:[%s3151] sm:$0x1]
        %v3154 = vlaneseq
        %v3155 = vshrl.u32 %v3154, 7
        %v3156 = vsub.s32 0, %v3155
        %v3157 = vrot.slane %v3152, %v3156
        %v3159 = vadd.f32 %v3149, %v3157
        %v3160 = vadd.f32 %v3150, %v3157
        %v3161 = vadd.f32 %v550, %v3159
        %v3162 = vadd.f32 %v555, %v3160
        %s3163 = scalar_lea.vmem [#allocation9], 2304
        %v3164 = vld [vmem:[%s3163] sm:$0xff]
        %v3165 = vld [vmem:[%s3163 + $0x8] sm:$0xff]
        %v3166 = vld [vmem:[%s3163 + $0x10] sm:$0xff]
        %v3167 = vld [vmem:[%s3163 + $0x18] sm:$0xff]
        %v3168 = vld [vmem:[%s3163 + $0x20] sm:$0xff]
        %v3169 = vld [vmem:[%s3163 + $0x28] sm:$0xff]
        %v3170 = vld [vmem:[%s3163 + $0x30] sm:$0xff]
        %v3171 = vld [vmem:[%s3163 + $0x38] sm:$0xff]
        %v3172 = vld [vmem:[%s3163 + $0x40] sm:$0xff]
        %v3173 = vld [vmem:[%s3163 + $0x48] sm:$0xff]
        %v3174 = vld [vmem:[%s3163 + $0x50] sm:$0xff]
        %v3175 = vld [vmem:[%s3163 + $0x58] sm:$0xff]
        %v3176 = vld [vmem:[%s3163 + $0x60] sm:$0xff]
        %v3177 = vld [vmem:[%s3163 + $0x68] sm:$0xff]
        %v3178 = vld [vmem:[%s3163 + $0x70] sm:$0xff]
        %v3179 = vld [vmem:[%s3163 + $0x78] sm:$0xff]
        %s3180 = scalar_lea.vmem [#allocation9], 2432
        %v3181 = vld [vmem:[%s3180] sm:$0xff]
        %v3182 = vld [vmem:[%s3180 + $0x8] sm:$0xff]
        %v3183 = vld [vmem:[%s3180 + $0x10] sm:$0xff]
        %v3184 = vld [vmem:[%s3180 + $0x18] sm:$0xff]
        %v3185 = vld [vmem:[%s3180 + $0x20] sm:$0xff]
        %v3186 = vld [vmem:[%s3180 + $0x28] sm:$0xff]
        %v3187 = vld [vmem:[%s3180 + $0x30] sm:$0xff]
        %v3188 = vld [vmem:[%s3180 + $0x38] sm:$0xff]
        %v3189 = vld [vmem:[%s3180 + $0x40] sm:$0xff]
        %v3190 = vld [vmem:[%s3180 + $0x48] sm:$0xff]
        %v3191 = vld [vmem:[%s3180 + $0x50] sm:$0xff]
        %v3192 = vld [vmem:[%s3180 + $0x58] sm:$0xff]
        %v3193 = vld [vmem:[%s3180 + $0x60] sm:$0xff]
        %v3194 = vld [vmem:[%s3180 + $0x68] sm:$0xff]
        %v3195 = vld [vmem:[%s3180 + $0x70] sm:$0xff]
        %v3196 = vld [vmem:[%s3180 + $0x78] sm:$0xff]
        %3197 = vmatprep.subr.mxu0 0.0
        %3198 = vmatpush1.msra.mxu0 %v3181
        %3199 = vmatprep.subr.mxu0 0.0
        %3200 = vmatpush1.msra.mxu0 %v3182
        %3201 = vmatprep.subr.mxu0 0.0
        %3202 = vmatpush1.msra.mxu0 %v3183
        %3203 = vmatprep.subr.mxu0 0.0
        %3204 = vmatpush1.msra.mxu0 %v3184
        %3205 = vmatprep.subr.mxu0 0.0
        %3206 = vmatpush1.msra.mxu0 %v3185
        %3207 = vmatprep.subr.mxu0 0.0
        %3208 = vmatpush1.msra.mxu0 %v3186
        %3209 = vmatprep.subr.mxu0 0.0
        %3210 = vmatpush1.msra.mxu0 %v3187
        %3211 = vmatprep.subr.mxu0 0.0
        %3212 = vmatpush1.msra.mxu0 %v3188
        %3213 = vmatprep.subr.mxu0 0.0
        %3214 = vmatpush1.msra.mxu0 %v3189
        %3215 = vmatprep.subr.mxu0 0.0
        %3216 = vmatpush1.msra.mxu0 %v3190
        %3217 = vmatprep.subr.mxu0 0.0
        %3218 = vmatpush1.msra.mxu0 %v3191
        %3219 = vmatprep.subr.mxu0 0.0
        %3220 = vmatpush1.msra.mxu0 %v3192
        %3221 = vmatprep.subr.mxu0 0.0
        %3222 = vmatpush1.msra.mxu0 %v3193
        %3223 = vmatprep.subr.mxu0 0.0
        %3224 = vmatpush1.msra.mxu0 %v3194
        %3225 = vmatprep.subr.mxu0 0.0
        %3226 = vmatpush1.msra.mxu0 %v3195
        %3227 = vmatprep.subr.mxu0 0.0
        %3228 = vmatpush1.msra.mxu0 %v3196
        %3229 = vmatprep.subr.mxu0 0.0
        %3230 = vmatpush1.msra.mxu0 0.0
        %3231 = vmatprep.subr.mxu0 0.0
        %3232 = vmatpush1.msra.mxu0 0.0
        %3233 = vmatprep.subr.mxu0 0.0
        %3234 = vmatpush1.msra.mxu0 0.0
        %3235 = vmatprep.subr.mxu0 0.0
        %3236 = vmatpush1.msra.mxu0 0.0
        %3237 = vmatprep.subr.mxu0 0.0
        %3238 = vmatpush1.msra.mxu0 0.0
        %3239 = vmatprep.subr.mxu0 0.0
        %3240 = vmatpush1.msra.mxu0 0.0
        %3241 = vmatprep.subr.mxu0 0.0
        %3242 = vmatpush1.msra.mxu0 0.0
        %3243 = vmatprep.subr.mxu0 0.0
        %3244 = vmatpush1.msra.mxu0 0.0
        %3245 = vmatprep.subr.mxu0 0.0
        %3246 = vmatpush1.msra.mxu0 0.0
        %3247 = vmatprep.subr.mxu0 0.0
        %3248 = vmatpush1.msra.mxu0 0.0
        %3249 = vmatprep.subr.mxu0 0.0
        %3250 = vmatpush1.msra.mxu0 0.0
        %3251 = vmatprep.subr.mxu0 0.0
        %3252 = vmatpush1.msra.mxu0 0.0
        %3253 = vmatprep.subr.mxu0 0.0
        %3254 = vmatpush1.msra.mxu0 0.0
        %3255 = vmatprep.subr.mxu0 0.0
        %3256 = vmatpush1.msra.mxu0 0.0
        %3257 = vmatprep.subr.mxu0 0.0
        %3258 = vmatpush1.msra.mxu0 0.0
        %3259 = vmatprep.subr.mxu0 0.0
        %3260 = vmatpush1.msra.mxu0 0.0
        %3261 = vmatprep.mubr.f32.mxu0 0.0
        %3262 = vmatmul.mubr.f32.gmra.mrb[0].mxu0 %v660
        %v3263 = vpop.f32.mrb[0].mxu0
        %v3264 = vadd.f32 0.0, %v3263
        %v3265 = vpop.f32.mrb[0].mxu0
        %3266 = vmatprep.mubr.f32.mxu0 0.0
        %3267 = vmatmul.mubr.f32.gmra.mrb[0].mxu0 %v661
        %v3268 = vpop.f32.mrb[0].mxu0
        %v3269 = vadd.f32 0.0, %v3268
        %v3270 = vpop.f32.mrb[0].mxu0
        %3271 = vdwg.mxu0
        %3272 = vmatprep.subr.mxu0 0.0
        %3273 = vmatpush1.msra.mxu0 %v3164
        %3274 = vmatprep.subr.mxu0 0.0
        %3275 = vmatpush1.msra.mxu0 %v3165
        %3276 = vmatprep.subr.mxu0 0.0
        %3277 = vmatpush1.msra.mxu0 %v3166
        %3278 = vmatprep.subr.mxu0 0.0
        %3279 = vmatpush1.msra.mxu0 %v3167
        %3280 = vmatprep.subr.mxu0 0.0
        %3281 = vmatpush1.msra.mxu0 %v3168
        %3282 = vmatprep.subr.mxu0 0.0
        %3283 = vmatpush1.msra.mxu0 %v3169
        %3284 = vmatprep.subr.mxu0 0.0
        %3285 = vmatpush1.msra.mxu0 %v3170
        %3286 = vmatprep.subr.mxu0 0.0
        %3287 = vmatpush1.msra.mxu0 %v3171
        %3288 = vmatprep.subr.mxu0 0.0
        %3289 = vmatpush1.msra.mxu0 %v3172
        %3290 = vmatprep.subr.mxu0 0.0
        %3291 = vmatpush1.msra.mxu0 %v3173
        %3292 = vmatprep.subr.mxu0 0.0
        %3293 = vmatpush1.msra.mxu0 %v3174
        %3294 = vmatprep.subr.mxu0 0.0
        %3295 = vmatpush1.msra.mxu0 %v3175
        %3296 = vmatprep.subr.mxu0 0.0
        %3297 = vmatpush1.msra.mxu0 %v3176
        %3298 = vmatprep.subr.mxu0 0.0
        %3299 = vmatpush1.msra.mxu0 %v3177
        %3300 = vmatprep.subr.mxu0 0.0
        %3301 = vmatpush1.msra.mxu0 %v3178
        %3302 = vmatprep.subr.mxu0 0.0
        %3303 = vmatpush1.msra.mxu0 %v3179
        %3304 = vmatprep.subr.mxu0 0.0
        %3305 = vmatpush1.msra.mxu0 0.0
        %3306 = vmatprep.subr.mxu0 0.0
        %3307 = vmatpush1.msra.mxu0 0.0
        %3308 = vmatprep.subr.mxu0 0.0
        %3309 = vmatpush1.msra.mxu0 0.0
        %3310 = vmatprep.subr.mxu0 0.0
        %3311 = vmatpush1.msra.mxu0 0.0
        %3312 = vmatprep.subr.mxu0 0.0
        %3313 = vmatpush1.msra.mxu0 0.0
        %3314 = vmatprep.subr.mxu0 0.0
        %3315 = vmatpush1.msra.mxu0 0.0
        %3316 = vmatprep.subr.mxu0 0.0
        %3317 = vmatpush1.msra.mxu0 0.0
        %3318 = vmatprep.subr.mxu0 0.0
        %3319 = vmatpush1.msra.mxu0 0.0
        %3320 = vmatprep.subr.mxu0 0.0
        %3321 = vmatpush1.msra.mxu0 0.0
        %3322 = vmatprep.subr.mxu0 0.0
        %3323 = vmatpush1.msra.mxu0 0.0
        %3324 = vmatprep.subr.mxu0 0.0
        %3325 = vmatpush1.msra.mxu0 0.0
        %3326 = vmatprep.subr.mxu0 0.0
        %3327 = vmatpush1.msra.mxu0 0.0
        %3328 = vmatprep.subr.mxu0 0.0
        %3329 = vmatpush1.msra.mxu0 0.0
        %3330 = vmatprep.subr.mxu0 0.0
        %3331 = vmatpush1.msra.mxu0 0.0
        %3332 = vmatprep.subr.mxu0 0.0
        %3333 = vmatpush1.msra.mxu0 0.0
        %3334 = vmatprep.subr.mxu0 0.0
        %3335 = vmatpush1.msra.mxu0 0.0
        %3336 = vmatprep.mubr.f32.mxu0 0.0
        %3337 = vmatmul.mubr.f32.gmra.mrb[0].mxu0 %v736
        %v3338 = vpop.f32.mrb[0].mxu0
        %v3339 = vadd.f32 %v3264, %v3338
        %v3340 = vpop.f32.mrb[0].mxu0
        %3341 = vmatprep.mubr.f32.mxu0 0.0
        %3342 = vmatmul.mubr.f32.gmra.mrb[0].mxu0 %v741
        %v3343 = vpop.f32.mrb[0].mxu0
        %v3344 = vadd.f32 %v3269, %v3343
        %v3345 = vpop.f32.mrb[0].mxu0
        %3346 = vdwg.mxu0
        %s3347 = scalar_lea.vmem [#allocation9], 2560
        %v3348 = vld [vmem:[%s3347] sm:$0xff]
        %v3349 = vld [vmem:[%s3347 + $0x8] sm:$0xff]
        %v3350 = vld [vmem:[%s3347 + $0x10] sm:$0xff]
        %v3351 = vld [vmem:[%s3347 + $0x18] sm:$0xff]
        %v3352 = vld [vmem:[%s3347 + $0x20] sm:$0xff]
        %v3353 = vld [vmem:[%s3347 + $0x28] sm:$0xff]
        %v3354 = vld [vmem:[%s3347 + $0x30] sm:$0xff]
        %v3355 = vld [vmem:[%s3347 + $0x38] sm:$0xff]
        %v3356 = vld [vmem:[%s3347 + $0x40] sm:$0xff]
        %v3357 = vld [vmem:[%s3347 + $0x48] sm:$0xff]
        %v3358 = vld [vmem:[%s3347 + $0x50] sm:$0xff]
        %v3359 = vld [vmem:[%s3347 + $0x58] sm:$0xff]
        %v3360 = vld [vmem:[%s3347 + $0x60] sm:$0xff]
        %v3361 = vld [vmem:[%s3347 + $0x68] sm:$0xff]
        %v3362 = vld [vmem:[%s3347 + $0x70] sm:$0xff]
        %v3363 = vld [vmem:[%s3347 + $0x78] sm:$0xff]
        %3364 = vmatprep.subr.mxu0 0.0
        %3365 = vmatpush1.msra.mxu0 %v3348
        %3366 = vmatprep.subr.mxu0 0.0
        %3367 = vmatpush1.msra.mxu0 %v3349
        %3368 = vmatprep.subr.mxu0 0.0
        %3369 = vmatpush1.msra.mxu0 %v3350
        %3370 = vmatprep.subr.mxu0 0.0
        %3371 = vmatpush1.msra.mxu0 %v3351
        %3372 = vmatprep.subr.mxu0 0.0
        %3373 = vmatpush1.msra.mxu0 %v3352
        %3374 = vmatprep.subr.mxu0 0.0
        %3375 = vmatpush1.msra.mxu0 %v3353
        %3376 = vmatprep.subr.mxu0 0.0
        %3377 = vmatpush1.msra.mxu0 %v3354
        %3378 = vmatprep.subr.mxu0 0.0
        %3379 = vmatpush1.msra.mxu0 %v3355
        %3380 = vmatprep.subr.mxu0 0.0
        %3381 = vmatpush1.msra.mxu0 %v3356
        %3382 = vmatprep.subr.mxu0 0.0
        %3383 = vmatpush1.msra.mxu0 %v3357
        %3384 = vmatprep.subr.mxu0 0.0
        %3385 = vmatpush1.msra.mxu0 %v3358
        %3386 = vmatprep.subr.mxu0 0.0
        %3387 = vmatpush1.msra.mxu0 %v3359
        %3388 = vmatprep.subr.mxu0 0.0
        %3389 = vmatpush1.msra.mxu0 %v3360
        %3390 = vmatprep.subr.mxu0 0.0
        %3391 = vmatpush1.msra.mxu0 %v3361
        %3392 = vmatprep.subr.mxu0 0.0
        %3393 = vmatpush1.msra.mxu0 %v3362
        %3394 = vmatprep.subr.mxu0 0.0
        %3395 = vmatpush1.msra.mxu0 %v3363
        %3396 = vmatprep.subr.mxu0 0.0
        %3397 = vmatpush1.msra.mxu0 0.0
        %3398 = vmatprep.subr.mxu0 0.0
        %3399 = vmatpush1.msra.mxu0 0.0
        %3400 = vmatprep.subr.mxu0 0.0
        %3401 = vmatpush1.msra.mxu0 0.0
        %3402 = vmatprep.subr.mxu0 0.0
        %3403 = vmatpush1.msra.mxu0 0.0
        %3404 = vmatprep.subr.mxu0 0.0
        %3405 = vmatpush1.msra.mxu0 0.0
        %3406 = vmatprep.subr.mxu0 0.0
        %3407 = vmatpush1.msra.mxu0 0.0
        %3408 = vmatprep.subr.mxu0 0.0
        %3409 = vmatpush1.msra.mxu0 0.0
        %3410 = vmatprep.subr.mxu0 0.0
        %3411 = vmatpush1.msra.mxu0 0.0
        %3412 = vmatprep.subr.mxu0 0.0
        %3413 = vmatpush1.msra.mxu0 0.0
        %3414 = vmatprep.subr.mxu0 0.0
        %3415 = vmatpush1.msra.mxu0 0.0
        %3416 = vmatprep.subr.mxu0 0.0
        %3417 = vmatpush1.msra.mxu0 0.0
        %3418 = vmatprep.subr.mxu0 0.0
        %3419 = vmatpush1.msra.mxu0 0.0
        %3420 = vmatprep.subr.mxu0 0.0
        %3421 = vmatpush1.msra.mxu0 0.0
        %3422 = vmatprep.subr.mxu0 0.0
        %3423 = vmatpush1.msra.mxu0 0.0
        %3424 = vmatprep.subr.mxu0 0.0
        %3425 = vmatpush1.msra.mxu0 0.0
        %3426 = vmatprep.subr.mxu0 0.0
        %3427 = vmatpush1.msra.mxu0 0.0
        %3428 = vmatprep.mubr.f32.mxu0 0.0
        %3429 = vmatmul.mubr.f32.gmra.mrb[0].mxu0 %v817
        %v3430 = vpop.f32.mrb[0].mxu0
        %v3431 = vadd.f32 0.0, %v3430
        %v3432 = vpop.f32.mrb[0].mxu0
        %3433 = vmatprep.mubr.f32.mxu0 0.0
        %3434 = vmatmul.mubr.f32.gmra.mrb[0].mxu0 %v822
        %v3435 = vpop.f32.mrb[0].mxu0
        %v3436 = vadd.f32 0.0, %v3435
        %v3437 = vpop.f32.mrb[0].mxu0
        %3438 = vdwg.mxu0
        %v3439 = vadd.f32 %v3339, %v3431
        %v3440 = vadd.f32 %v3344, %v3436
        %s3441 = scalar_lea.vmem [#allocation10], 6
        %v3442 = vld [vmem:[%s3441] sm:$0x1]
        %v3444 = vlaneseq
        %v3445 = vshrl.u32 %v3444, 7
        %v3446 = vsub.s32 0, %v3445
        %v3447 = vrot.slane %v3442, %v3446
        %v3449 = vadd.f32 %v3439, %v3447
        %v3450 = vadd.f32 %v3440, %v3447
        %v3451 = vmax.f32 %v3449, 0.0
        %v3452 = vmax.f32 %v3450, 0.0
        %3453 = vmatprep.subr.mxu0 0.0
        %3454 = vmatpush1.msra.mxu0 %v3451
        %3455 = vmatprep.subr.mxu0 0.0
        %3456 = vmatpush1.msra.mxu0 %v3452
        %3457 = vmatprep.subr.mxu0 0.0
        %3458 = vmatpush1.msra.mxu0 0.0
        %3459 = vmatprep.subr.mxu0 0.0
        %3460 = vmatpush1.msra.mxu0 0.0
        %3461 = vmatprep.subr.mxu0 0.0
        %3462 = vmatpush1.msra.mxu0 0.0
        %3463 = vmatprep.subr.mxu0 0.0
        %3464 = vmatpush1.msra.mxu0 0.0
        %3465 = vmatprep.subr.mxu0 0.0
        %3466 = vmatpush1.msra.mxu0 0.0
        %3467 = vmatprep.subr.mxu0 0.0
        %3468 = vmatpush1.msra.mxu0 0.0
        %3469 = vmatprep.subr.mxu0 0.0
        %3470 = vmatpush1.msra.mxu0 0.0
        %3471 = vmatprep.subr.mxu0 0.0
        %3472 = vmatpush1.msra.mxu0 0.0
        %3473 = vmatprep.subr.mxu0 0.0
        %3474 = vmatpush1.msra.mxu0 0.0
        %3475 = vmatprep.subr.mxu0 0.0
        %3476 = vmatpush1.msra.mxu0 0.0
        %3477 = vmatprep.subr.mxu0 0.0
        %3478 = vmatpush1.msra.mxu0 0.0
        %3479 = vmatprep.subr.mxu0 0.0
        %3480 = vmatpush1.msra.mxu0 0.0
        %3481 = vmatprep.subr.mxu0 0.0
        %3482 = vmatpush1.msra.mxu0 0.0
        %3483 = vmatprep.subr.mxu0 0.0
        %3484 = vmatpush1.msra.mxu0 0.0
        %3485 = vmatprep.subr.mxu0 0.0
        %3486 = vmatpush1.msra.mxu0 0.0
        %3487 = vmatprep.subr.mxu0 0.0
        %3488 = vmatpush1.msra.mxu0 0.0
        %3489 = vmatprep.subr.mxu0 0.0
        %3490 = vmatpush1.msra.mxu0 0.0
        %3491 = vmatprep.subr.mxu0 0.0
        %3492 = vmatpush1.msra.mxu0 0.0
        %3493 = vmatprep.subr.mxu0 0.0
        %3494 = vmatpush1.msra.mxu0 0.0
        %3495 = vmatprep.subr.mxu0 0.0
        %3496 = vmatpush1.msra.mxu0 0.0
        %3497 = vmatprep.subr.mxu0 0.0
        %3498 = vmatpush1.msra.mxu0 0.0
        %3499 = vmatprep.subr.mxu0 0.0
        %3500 = vmatpush1.msra.mxu0 0.0
        %3501 = vmatprep.subr.mxu0 0.0
        %3502 = vmatpush1.msra.mxu0 0.0
        %3503 = vmatprep.subr.mxu0 0.0
        %3504 = vmatpush1.msra.mxu0 0.0
        %3505 = vmatprep.subr.mxu0 0.0
        %3506 = vmatpush1.msra.mxu0 0.0
        %3507 = vmatprep.subr.mxu0 0.0
        %3508 = vmatpush1.msra.mxu0 0.0
        %3509 = vmatprep.subr.mxu0 0.0
        %3510 = vmatpush1.msra.mxu0 0.0
        %3511 = vmatprep.subr.mxu0 0.0
        %3512 = vmatpush1.msra.mxu0 0.0
        %3513 = vmatprep.subr.mxu0 0.0
        %3514 = vmatpush1.msra.mxu0 0.0
        %3515 = vmatprep.subr.mxu0 0.0
        %3516 = vmatpush1.msra.mxu0 0.0
        %3517 = vmatprep.mubr.f32.mxu0 0.0
        %3518 = vmatmul.mubr.f32.gmra.mrb[0].mxu0 %v664
        %v3519 = vpop.f32.mrb[0].mxu0
        %v3520 = vadd.f32 0.0, %v3519
        %v3521 = vpop.f32.mrb[0].mxu0
        %3522 = vmatprep.mubr.f32.mxu0 0.0
        %3523 = vmatmul.mubr.f32.gmra.mrb[0].mxu0 %v667
        %v3524 = vpop.f32.mrb[0].mxu0
        %v3525 = vadd.f32 0.0, %v3524
        %v3526 = vpop.f32.mrb[0].mxu0
        %3527 = vdwg.mxu0
        %3528 = vmatprep.subr.mxu0 0.0
        %3529 = vmatpush1.msra.mxu0 %v3451
        %3530 = vmatprep.subr.mxu0 0.0
        %3531 = vmatpush1.msra.mxu0 %v3452
        %3532 = vmatprep.subr.mxu0 0.0
        %3533 = vmatpush1.msra.mxu0 0.0
        %3534 = vmatprep.subr.mxu0 0.0
        %3535 = vmatpush1.msra.mxu0 0.0
        %3536 = vmatprep.subr.mxu0 0.0
        %3537 = vmatpush1.msra.mxu0 0.0
        %3538 = vmatprep.subr.mxu0 0.0
        %3539 = vmatpush1.msra.mxu0 0.0
        %3540 = vmatprep.subr.mxu0 0.0
        %3541 = vmatpush1.msra.mxu0 0.0
        %3542 = vmatprep.subr.mxu0 0.0
        %3543 = vmatpush1.msra.mxu0 0.0
        %3544 = vmatprep.subr.mxu0 0.0
        %3545 = vmatpush1.msra.mxu0 0.0
        %3546 = vmatprep.subr.mxu0 0.0
        %3547 = vmatpush1.msra.mxu0 0.0
        %3548 = vmatprep.subr.mxu0 0.0
        %3549 = vmatpush1.msra.mxu0 0.0
        %3550 = vmatprep.subr.mxu0 0.0
        %3551 = vmatpush1.msra.mxu0 0.0
        %3552 = vmatprep.subr.mxu0 0.0
        %3553 = vmatpush1.msra.mxu0 0.0
        %3554 = vmatprep.subr.mxu0 0.0
        %3555 = vmatpush1.msra.mxu0 0.0
        %3556 = vmatprep.subr.mxu0 0.0
        %3557 = vmatpush1.msra.mxu0 0.0
        %3558 = vmatprep.subr.mxu0 0.0
        %3559 = vmatpush1.msra.mxu0 0.0
        %3560 = vmatprep.subr.mxu0 0.0
        %3561 = vmatpush1.msra.mxu0 0.0
        %3562 = vmatprep.subr.mxu0 0.0
        %3563 = vmatpush1.msra.mxu0 0.0
        %3564 = vmatprep.subr.mxu0 0.0
        %3565 = vmatpush1.msra.mxu0 0.0
        %3566 = vmatprep.subr.mxu0 0.0
        %3567 = vmatpush1.msra.mxu0 0.0
        %3568 = vmatprep.subr.mxu0 0.0
        %3569 = vmatpush1.msra.mxu0 0.0
        %3570 = vmatprep.subr.mxu0 0.0
        %3571 = vmatpush1.msra.mxu0 0.0
        %3572 = vmatprep.subr.mxu0 0.0
        %3573 = vmatpush1.msra.mxu0 0.0
        %3574 = vmatprep.subr.mxu0 0.0
        %3575 = vmatpush1.msra.mxu0 0.0
        %3576 = vmatprep.subr.mxu0 0.0
        %3577 = vmatpush1.msra.mxu0 0.0
        %3578 = vmatprep.subr.mxu0 0.0
        %3579 = vmatpush1.msra.mxu0 0.0
        %3580 = vmatprep.subr.mxu0 0.0
        %3581 = vmatpush1.msra.mxu0 0.0
        %3582 = vmatprep.subr.mxu0 0.0
        %3583 = vmatpush1.msra.mxu0 0.0
        %3584 = vmatprep.subr.mxu0 0.0
        %3585 = vmatpush1.msra.mxu0 0.0
        %3586 = vmatprep.subr.mxu0 0.0
        %3587 = vmatpush1.msra.mxu0 0.0
        %3588 = vmatprep.subr.mxu0 0.0
        %3589 = vmatpush1.msra.mxu0 0.0
        %3590 = vmatprep.subr.mxu0 0.0
        %3591 = vmatpush1.msra.mxu0 0.0
        %3592 = vmatprep.mubr.f32.mxu0 0.0
        %3593 = vmatmul.mubr.f32.gmra.mrb[0].mxu0 %v745
        %v3594 = vpop.f32.mrb[0].mxu0
        %v3595 = vadd.f32 0.0, %v3594
        %v3596 = vpop.f32.mrb[0].mxu0
        %3597 = vmatprep.mubr.f32.mxu0 0.0
        %3598 = vmatmul.mubr.f32.gmra.mrb[0].mxu0 %v748
        %v3599 = vpop.f32.mrb[0].mxu0
        %v3600 = vadd.f32 0.0, %v3599
        %v3601 = vpop.f32.mrb[0].mxu0
        %3602 = vdwg.mxu0
        %s3603 = scalar_lea.vmem [#allocation9], 2688
        %v3604 = vld [vmem:[%s3603] sm:$0xff]
        %v3605 = vld [vmem:[%s3603 + $0x8] sm:$0xff]
        %v3606 = vld [vmem:[%s3603 + $0x10] sm:$0xff]
        %v3607 = vld [vmem:[%s3603 + $0x18] sm:$0xff]
        %v3608 = vld [vmem:[%s3603 + $0x20] sm:$0xff]
        %v3609 = vld [vmem:[%s3603 + $0x28] sm:$0xff]
        %v3610 = vld [vmem:[%s3603 + $0x30] sm:$0xff]
        %v3611 = vld [vmem:[%s3603 + $0x38] sm:$0xff]
        %v3612 = vld [vmem:[%s3603 + $0x40] sm:$0xff]
        %v3613 = vld [vmem:[%s3603 + $0x48] sm:$0xff]
        %v3614 = vld [vmem:[%s3603 + $0x50] sm:$0xff]
        %v3615 = vld [vmem:[%s3603 + $0x58] sm:$0xff]
        %v3616 = vld [vmem:[%s3603 + $0x60] sm:$0xff]
        %v3617 = vld [vmem:[%s3603 + $0x68] sm:$0xff]
        %v3618 = vld [vmem:[%s3603 + $0x70] sm:$0xff]
        %v3619 = vld [vmem:[%s3603 + $0x78] sm:$0xff]
        %s3620 = scalar_lea.vmem [#allocation9], 2816
        %v3621 = vld [vmem:[%s3620] sm:$0xff]
        %v3622 = vld [vmem:[%s3620 + $0x8] sm:$0xff]
        %v3623 = vld [vmem:[%s3620 + $0x10] sm:$0xff]
        %v3624 = vld [vmem:[%s3620 + $0x18] sm:$0xff]
        %v3625 = vld [vmem:[%s3620 + $0x20] sm:$0xff]
        %v3626 = vld [vmem:[%s3620 + $0x28] sm:$0xff]
        %v3627 = vld [vmem:[%s3620 + $0x30] sm:$0xff]
        %v3628 = vld [vmem:[%s3620 + $0x38] sm:$0xff]
        %v3629 = vld [vmem:[%s3620 + $0x40] sm:$0xff]
        %v3630 = vld [vmem:[%s3620 + $0x48] sm:$0xff]
        %v3631 = vld [vmem:[%s3620 + $0x50] sm:$0xff]
        %v3632 = vld [vmem:[%s3620 + $0x58] sm:$0xff]
        %v3633 = vld [vmem:[%s3620 + $0x60] sm:$0xff]
        %v3634 = vld [vmem:[%s3620 + $0x68] sm:$0xff]
        %v3635 = vld [vmem:[%s3620 + $0x70] sm:$0xff]
        %v3636 = vld [vmem:[%s3620 + $0x78] sm:$0xff]
        %3637 = vmatprep.subr.mxu0 0.0
        %3638 = vmatpush1.msra.mxu0 %v3621
        %3639 = vmatprep.subr.mxu0 0.0
        %3640 = vmatpush1.msra.mxu0 %v3622
        %3641 = vmatprep.subr.mxu0 0.0
        %3642 = vmatpush1.msra.mxu0 %v3623
        %3643 = vmatprep.subr.mxu0 0.0
        %3644 = vmatpush1.msra.mxu0 %v3624
        %3645 = vmatprep.subr.mxu0 0.0
        %3646 = vmatpush1.msra.mxu0 %v3625
        %3647 = vmatprep.subr.mxu0 0.0
        %3648 = vmatpush1.msra.mxu0 %v3626
        %3649 = vmatprep.subr.mxu0 0.0
        %3650 = vmatpush1.msra.mxu0 %v3627
        %3651 = vmatprep.subr.mxu0 0.0
        %3652 = vmatpush1.msra.mxu0 %v3628
        %3653 = vmatprep.subr.mxu0 0.0
        %3654 = vmatpush1.msra.mxu0 %v3629
        %3655 = vmatprep.subr.mxu0 0.0
        %3656 = vmatpush1.msra.mxu0 %v3630
        %3657 = vmatprep.subr.mxu0 0.0
        %3658 = vmatpush1.msra.mxu0 %v3631
        %3659 = vmatprep.subr.mxu0 0.0
        %3660 = vmatpush1.msra.mxu0 %v3632
        %3661 = vmatprep.subr.mxu0 0.0
        %3662 = vmatpush1.msra.mxu0 %v3633
        %3663 = vmatprep.subr.mxu0 0.0
        %3664 = vmatpush1.msra.mxu0 %v3634
        %3665 = vmatprep.subr.mxu0 0.0
        %3666 = vmatpush1.msra.mxu0 %v3635
        %3667 = vmatprep.subr.mxu0 0.0
        %3668 = vmatpush1.msra.mxu0 %v3636
        %3669 = vmatprep.subr.mxu0 0.0
        %3670 = vmatpush1.msra.mxu0 0.0
        %3671 = vmatprep.subr.mxu0 0.0
        %3672 = vmatpush1.msra.mxu0 0.0
        %3673 = vmatprep.subr.mxu0 0.0
        %3674 = vmatpush1.msra.mxu0 0.0
        %3675 = vmatprep.subr.mxu0 0.0
        %3676 = vmatpush1.msra.mxu0 0.0
        %3677 = vmatprep.subr.mxu0 0.0
        %3678 = vmatpush1.msra.mxu0 0.0
        %3679 = vmatprep.subr.mxu0 0.0
        %3680 = vmatpush1.msra.mxu0 0.0
        %3681 = vmatprep.subr.mxu0 0.0
        %3682 = vmatpush1.msra.mxu0 0.0
        %3683 = vmatprep.subr.mxu0 0.0
        %3684 = vmatpush1.msra.mxu0 0.0
        %3685 = vmatprep.subr.mxu0 0.0
        %3686 = vmatpush1.msra.mxu0 0.0
        %3687 = vmatprep.subr.mxu0 0.0
        %3688 = vmatpush1.msra.mxu0 0.0
        %3689 = vmatprep.subr.mxu0 0.0
        %3690 = vmatpush1.msra.mxu0 0.0
        %3691 = vmatprep.subr.mxu0 0.0
        %3692 = vmatpush1.msra.mxu0 0.0
        %3693 = vmatprep.subr.mxu0 0.0
        %3694 = vmatpush1.msra.mxu0 0.0
        %3695 = vmatprep.subr.mxu0 0.0
        %3696 = vmatpush1.msra.mxu0 0.0
        %3697 = vmatprep.subr.mxu0 0.0
        %3698 = vmatpush1.msra.mxu0 0.0
        %3699 = vmatprep.subr.mxu0 0.0
        %3700 = vmatpush1.msra.mxu0 0.0
        %3701 = vmatprep.mubr.f32.mxu0 0.0
        %3702 = vmatmul.mubr.f32.gmra.mrb[0].mxu0 %v3451
        %v3703 = vpop.f32.mrb[0].mxu0
        %v3704 = vadd.f32 0.0, %v3703
        %v3705 = vpop.f32.mrb[0].mxu0
        %3706 = vmatprep.mubr.f32.mxu0 0.0
        %3707 = vmatmul.mubr.f32.gmra.mrb[0].mxu0 %v3452
        %v3708 = vpop.f32.mrb[0].mxu0
        %v3709 = vadd.f32 0.0, %v3708
        %v3710 = vpop.f32.mrb[0].mxu0
        %3711 = vdwg.mxu0
        %3712 = vmatprep.subr.mxu0 0.0
        %3713 = vmatpush1.msra.mxu0 %v3604
        %3714 = vmatprep.subr.mxu0 0.0
        %3715 = vmatpush1.msra.mxu0 %v3605
        %3716 = vmatprep.subr.mxu0 0.0
        %3717 = vmatpush1.msra.mxu0 %v3606
        %3718 = vmatprep.subr.mxu0 0.0
        %3719 = vmatpush1.msra.mxu0 %v3607
        %3720 = vmatprep.subr.mxu0 0.0
        %3721 = vmatpush1.msra.mxu0 %v3608
        %3722 = vmatprep.subr.mxu0 0.0
        %3723 = vmatpush1.msra.mxu0 %v3609
        %3724 = vmatprep.subr.mxu0 0.0
        %3725 = vmatpush1.msra.mxu0 %v3610
        %3726 = vmatprep.subr.mxu0 0.0
        %3727 = vmatpush1.msra.mxu0 %v3611
        %3728 = vmatprep.subr.mxu0 0.0
        %3729 = vmatpush1.msra.mxu0 %v3612
        %3730 = vmatprep.subr.mxu0 0.0
        %3731 = vmatpush1.msra.mxu0 %v3613
        %3732 = vmatprep.subr.mxu0 0.0
        %3733 = vmatpush1.msra.mxu0 %v3614
        %3734 = vmatprep.subr.mxu0 0.0
        %3735 = vmatpush1.msra.mxu0 %v3615
        %3736 = vmatprep.subr.mxu0 0.0
        %3737 = vmatpush1.msra.mxu0 %v3616
        %3738 = vmatprep.subr.mxu0 0.0
        %3739 = vmatpush1.msra.mxu0 %v3617
        %3740 = vmatprep.subr.mxu0 0.0
        %3741 = vmatpush1.msra.mxu0 %v3618
        %3742 = vmatprep.subr.mxu0 0.0
        %3743 = vmatpush1.msra.mxu0 %v3619
        %3744 = vmatprep.subr.mxu0 0.0
        %3745 = vmatpush1.msra.mxu0 0.0
        %3746 = vmatprep.subr.mxu0 0.0
        %3747 = vmatpush1.msra.mxu0 0.0
        %3748 = vmatprep.subr.mxu0 0.0
        %3749 = vmatpush1.msra.mxu0 0.0
        %3750 = vmatprep.subr.mxu0 0.0
        %3751 = vmatpush1.msra.mxu0 0.0
        %3752 = vmatprep.subr.mxu0 0.0
        %3753 = vmatpush1.msra.mxu0 0.0
        %3754 = vmatprep.subr.mxu0 0.0
        %3755 = vmatpush1.msra.mxu0 0.0
        %3756 = vmatprep.subr.mxu0 0.0
        %3757 = vmatpush1.msra.mxu0 0.0
        %3758 = vmatprep.subr.mxu0 0.0
        %3759 = vmatpush1.msra.mxu0 0.0
        %3760 = vmatprep.subr.mxu0 0.0
        %3761 = vmatpush1.msra.mxu0 0.0
        %3762 = vmatprep.subr.mxu0 0.0
        %3763 = vmatpush1.msra.mxu0 0.0
        %3764 = vmatprep.subr.mxu0 0.0
        %3765 = vmatpush1.msra.mxu0 0.0
        %3766 = vmatprep.subr.mxu0 0.0
        %3767 = vmatpush1.msra.mxu0 0.0
        %3768 = vmatprep.subr.mxu0 0.0
        %3769 = vmatpush1.msra.mxu0 0.0
        %3770 = vmatprep.subr.mxu0 0.0
        %3771 = vmatpush1.msra.mxu0 0.0
        %3772 = vmatprep.subr.mxu0 0.0
        %3773 = vmatpush1.msra.mxu0 0.0
        %3774 = vmatprep.subr.mxu0 0.0
        %3775 = vmatpush1.msra.mxu0 0.0
        %3776 = vmatprep.mubr.f32.mxu0 0.0
        %3777 = vmatmul.mubr.f32.gmra.mrb[0].mxu0 %v3520
        %v3778 = vpop.f32.mrb[0].mxu0
        %v3779 = vadd.f32 %v3704, %v3778
        %v3780 = vpop.f32.mrb[0].mxu0
        %3781 = vmatprep.mubr.f32.mxu0 0.0
        %3782 = vmatmul.mubr.f32.gmra.mrb[0].mxu0 %v3525
        %v3783 = vpop.f32.mrb[0].mxu0
        %v3784 = vadd.f32 %v3709, %v3783
        %v3785 = vpop.f32.mrb[0].mxu0
        %3786 = vdwg.mxu0
        %s3787 = scalar_lea.vmem [#allocation9], 2944
        %v3788 = vld [vmem:[%s3787] sm:$0xff]
        %v3789 = vld [vmem:[%s3787 + $0x8] sm:$0xff]
        %v3790 = vld [vmem:[%s3787 + $0x10] sm:$0xff]
        %v3791 = vld [vmem:[%s3787 + $0x18] sm:$0xff]
        %v3792 = vld [vmem:[%s3787 + $0x20] sm:$0xff]
        %v3793 = vld [vmem:[%s3787 + $0x28] sm:$0xff]
        %v3794 = vld [vmem:[%s3787 + $0x30] sm:$0xff]
        %v3795 = vld [vmem:[%s3787 + $0x38] sm:$0xff]
        %v3796 = vld [vmem:[%s3787 + $0x40] sm:$0xff]
        %v3797 = vld [vmem:[%s3787 + $0x48] sm:$0xff]
        %v3798 = vld [vmem:[%s3787 + $0x50] sm:$0xff]
        %v3799 = vld [vmem:[%s3787 + $0x58] sm:$0xff]
        %v3800 = vld [vmem:[%s3787 + $0x60] sm:$0xff]
        %v3801 = vld [vmem:[%s3787 + $0x68] sm:$0xff]
        %v3802 = vld [vmem:[%s3787 + $0x70] sm:$0xff]
        %v3803 = vld [vmem:[%s3787 + $0x78] sm:$0xff]
        %3804 = vmatprep.subr.mxu0 0.0
        %3805 = vmatpush1.msra.mxu0 %v3788
        %3806 = vmatprep.subr.mxu0 0.0
        %3807 = vmatpush1.msra.mxu0 %v3789
        %3808 = vmatprep.subr.mxu0 0.0
        %3809 = vmatpush1.msra.mxu0 %v3790
        %3810 = vmatprep.subr.mxu0 0.0
        %3811 = vmatpush1.msra.mxu0 %v3791
        %3812 = vmatprep.subr.mxu0 0.0
        %3813 = vmatpush1.msra.mxu0 %v3792
        %3814 = vmatprep.subr.mxu0 0.0
        %3815 = vmatpush1.msra.mxu0 %v3793
        %3816 = vmatprep.subr.mxu0 0.0
        %3817 = vmatpush1.msra.mxu0 %v3794
        %3818 = vmatprep.subr.mxu0 0.0
        %3819 = vmatpush1.msra.mxu0 %v3795
        %3820 = vmatprep.subr.mxu0 0.0
        %3821 = vmatpush1.msra.mxu0 %v3796
        %3822 = vmatprep.subr.mxu0 0.0
        %3823 = vmatpush1.msra.mxu0 %v3797
        %3824 = vmatprep.subr.mxu0 0.0
        %3825 = vmatpush1.msra.mxu0 %v3798
        %3826 = vmatprep.subr.mxu0 0.0
        %3827 = vmatpush1.msra.mxu0 %v3799
        %3828 = vmatprep.subr.mxu0 0.0
        %3829 = vmatpush1.msra.mxu0 %v3800
        %3830 = vmatprep.subr.mxu0 0.0
        %3831 = vmatpush1.msra.mxu0 %v3801
        %3832 = vmatprep.subr.mxu0 0.0
        %3833 = vmatpush1.msra.mxu0 %v3802
        %3834 = vmatprep.subr.mxu0 0.0
        %3835 = vmatpush1.msra.mxu0 %v3803
        %3836 = vmatprep.subr.mxu0 0.0
        %3837 = vmatpush1.msra.mxu0 0.0
        %3838 = vmatprep.subr.mxu0 0.0
        %3839 = vmatpush1.msra.mxu0 0.0
        %3840 = vmatprep.subr.mxu0 0.0
        %3841 = vmatpush1.msra.mxu0 0.0
        %3842 = vmatprep.subr.mxu0 0.0
        %3843 = vmatpush1.msra.mxu0 0.0
        %3844 = vmatprep.subr.mxu0 0.0
        %3845 = vmatpush1.msra.mxu0 0.0
        %3846 = vmatprep.subr.mxu0 0.0
        %3847 = vmatpush1.msra.mxu0 0.0
        %3848 = vmatprep.subr.mxu0 0.0
        %3849 = vmatpush1.msra.mxu0 0.0
        %3850 = vmatprep.subr.mxu0 0.0
        %3851 = vmatpush1.msra.mxu0 0.0
        %3852 = vmatprep.subr.mxu0 0.0
        %3853 = vmatpush1.msra.mxu0 0.0
        %3854 = vmatprep.subr.mxu0 0.0
        %3855 = vmatpush1.msra.mxu0 0.0
        %3856 = vmatprep.subr.mxu0 0.0
        %3857 = vmatpush1.msra.mxu0 0.0
        %3858 = vmatprep.subr.mxu0 0.0
        %3859 = vmatpush1.msra.mxu0 0.0
        %3860 = vmatprep.subr.mxu0 0.0
        %3861 = vmatpush1.msra.mxu0 0.0
        %3862 = vmatprep.subr.mxu0 0.0
        %3863 = vmatpush1.msra.mxu0 0.0
        %3864 = vmatprep.subr.mxu0 0.0
        %3865 = vmatpush1.msra.mxu0 0.0
        %3866 = vmatprep.subr.mxu0 0.0
        %3867 = vmatpush1.msra.mxu0 0.0
        %3868 = vmatprep.mubr.f32.mxu0 0.0
        %3869 = vmatmul.mubr.f32.gmra.mrb[0].mxu0 %v3595
        %v3870 = vpop.f32.mrb[0].mxu0
        %v3871 = vadd.f32 0.0, %v3870
        %v3872 = vpop.f32.mrb[0].mxu0
        %3873 = vmatprep.mubr.f32.mxu0 0.0
        %3874 = vmatmul.mubr.f32.gmra.mrb[0].mxu0 %v3600
        %v3875 = vpop.f32.mrb[0].mxu0
        %v3876 = vadd.f32 0.0, %v3875
        %v3877 = vpop.f32.mrb[0].mxu0
        %3878 = vdwg.mxu0
        %v3879 = vadd.f32 %v3779, %v3871
        %v3880 = vadd.f32 %v3784, %v3876
        %s3881 = scalar_lea.vmem [#allocation10], 7
        %v3882 = vld [vmem:[%s3881] sm:$0x1]
        %v3884 = vlaneseq
        %v3885 = vshrl.u32 %v3884, 7
        %v3886 = vsub.s32 0, %v3885
        %v3887 = vrot.slane %v3882, %v3886
        %v3889 = vadd.f32 %v3879, %v3887
        %v3890 = vadd.f32 %v3880, %v3887
        %v3891 = vadd.f32 %v550, %v3889
        %v3892 = vadd.f32 %v555, %v3890
        %s3893 = scalar_lea.vmem [#allocation9], 3072
        %v3894 = vld [vmem:[%s3893] sm:$0xff]
        %v3895 = vld [vmem:[%s3893 + $0x8] sm:$0xff]
        %v3896 = vld [vmem:[%s3893 + $0x10] sm:$0xff]
        %v3897 = vld [vmem:[%s3893 + $0x18] sm:$0xff]
        %v3898 = vld [vmem:[%s3893 + $0x20] sm:$0xff]
        %v3899 = vld [vmem:[%s3893 + $0x28] sm:$0xff]
        %v3900 = vld [vmem:[%s3893 + $0x30] sm:$0xff]
        %v3901 = vld [vmem:[%s3893 + $0x38] sm:$0xff]
        %v3902 = vld [vmem:[%s3893 + $0x40] sm:$0xff]
        %v3903 = vld [vmem:[%s3893 + $0x48] sm:$0xff]
        %v3904 = vld [vmem:[%s3893 + $0x50] sm:$0xff]
        %v3905 = vld [vmem:[%s3893 + $0x58] sm:$0xff]
        %v3906 = vld [vmem:[%s3893 + $0x60] sm:$0xff]
        %v3907 = vld [vmem:[%s3893 + $0x68] sm:$0xff]
        %v3908 = vld [vmem:[%s3893 + $0x70] sm:$0xff]
        %v3909 = vld [vmem:[%s3893 + $0x78] sm:$0xff]
        %s3910 = scalar_lea.vmem [#allocation9], 3200
        %v3911 = vld [vmem:[%s3910] sm:$0xff]
        %v3912 = vld [vmem:[%s3910 + $0x8] sm:$0xff]
        %v3913 = vld [vmem:[%s3910 + $0x10] sm:$0xff]
        %v3914 = vld [vmem:[%s3910 + $0x18] sm:$0xff]
        %v3915 = vld [vmem:[%s3910 + $0x20] sm:$0xff]
        %v3916 = vld [vmem:[%s3910 + $0x28] sm:$0xff]
        %v3917 = vld [vmem:[%s3910 + $0x30] sm:$0xff]
        %v3918 = vld [vmem:[%s3910 + $0x38] sm:$0xff]
        %v3919 = vld [vmem:[%s3910 + $0x40] sm:$0xff]
        %v3920 = vld [vmem:[%s3910 + $0x48] sm:$0xff]
        %v3921 = vld [vmem:[%s3910 + $0x50] sm:$0xff]
        %v3922 = vld [vmem:[%s3910 + $0x58] sm:$0xff]
        %v3923 = vld [vmem:[%s3910 + $0x60] sm:$0xff]
        %v3924 = vld [vmem:[%s3910 + $0x68] sm:$0xff]
        %v3925 = vld [vmem:[%s3910 + $0x70] sm:$0xff]
        %v3926 = vld [vmem:[%s3910 + $0x78] sm:$0xff]
        %3927 = vmatprep.subr.mxu0 0.0
        %3928 = vmatpush1.msra.mxu0 %v3911
        %3929 = vmatprep.subr.mxu0 0.0
        %3930 = vmatpush1.msra.mxu0 %v3912
        %3931 = vmatprep.subr.mxu0 0.0
        %3932 = vmatpush1.msra.mxu0 %v3913
        %3933 = vmatprep.subr.mxu0 0.0
        %3934 = vmatpush1.msra.mxu0 %v3914
        %3935 = vmatprep.subr.mxu0 0.0
        %3936 = vmatpush1.msra.mxu0 %v3915
        %3937 = vmatprep.subr.mxu0 0.0
        %3938 = vmatpush1.msra.mxu0 %v3916
        %3939 = vmatprep.subr.mxu0 0.0
        %3940 = vmatpush1.msra.mxu0 %v3917
        %3941 = vmatprep.subr.mxu0 0.0
        %3942 = vmatpush1.msra.mxu0 %v3918
        %3943 = vmatprep.subr.mxu0 0.0
        %3944 = vmatpush1.msra.mxu0 %v3919
        %3945 = vmatprep.subr.mxu0 0.0
        %3946 = vmatpush1.msra.mxu0 %v3920
        %3947 = vmatprep.subr.mxu0 0.0
        %3948 = vmatpush1.msra.mxu0 %v3921
        %3949 = vmatprep.subr.mxu0 0.0
        %3950 = vmatpush1.msra.mxu0 %v3922
        %3951 = vmatprep.subr.mxu0 0.0
        %3952 = vmatpush1.msra.mxu0 %v3923
        %3953 = vmatprep.subr.mxu0 0.0
        %3954 = vmatpush1.msra.mxu0 %v3924
        %3955 = vmatprep.subr.mxu0 0.0
        %3956 = vmatpush1.msra.mxu0 %v3925
        %3957 = vmatprep.subr.mxu0 0.0
        %3958 = vmatpush1.msra.mxu0 %v3926
        %3959 = vmatprep.subr.mxu0 0.0
        %3960 = vmatpush1.msra.mxu0 0.0
        %3961 = vmatprep.subr.mxu0 0.0
        %3962 = vmatpush1.msra.mxu0 0.0
        %3963 = vmatprep.subr.mxu0 0.0
        %3964 = vmatpush1.msra.mxu0 0.0
        %3965 = vmatprep.subr.mxu0 0.0
        %3966 = vmatpush1.msra.mxu0 0.0
        %3967 = vmatprep.subr.mxu0 0.0
        %3968 = vmatpush1.msra.mxu0 0.0
        %3969 = vmatprep.subr.mxu0 0.0
        %3970 = vmatpush1.msra.mxu0 0.0
        %3971 = vmatprep.subr.mxu0 0.0
        %3972 = vmatpush1.msra.mxu0 0.0
        %3973 = vmatprep.subr.mxu0 0.0
        %3974 = vmatpush1.msra.mxu0 0.0
        %3975 = vmatprep.subr.mxu0 0.0
        %3976 = vmatpush1.msra.mxu0 0.0
        %3977 = vmatprep.subr.mxu0 0.0
        %3978 = vmatpush1.msra.mxu0 0.0
        %3979 = vmatprep.subr.mxu0 0.0
        %3980 = vmatpush1.msra.mxu0 0.0
        %3981 = vmatprep.subr.mxu0 0.0
        %3982 = vmatpush1.msra.mxu0 0.0
        %3983 = vmatprep.subr.mxu0 0.0
        %3984 = vmatpush1.msra.mxu0 0.0
        %3985 = vmatprep.subr.mxu0 0.0
        %3986 = vmatpush1.msra.mxu0 0.0
        %3987 = vmatprep.subr.mxu0 0.0
        %3988 = vmatpush1.msra.mxu0 0.0
        %3989 = vmatprep.subr.mxu0 0.0
        %3990 = vmatpush1.msra.mxu0 0.0
        %3991 = vmatprep.mubr.f32.mxu0 0.0
        %3992 = vmatmul.mubr.f32.gmra.mrb[0].mxu0 %v1551
        %v3993 = vpop.f32.mrb[0].mxu0
        %v3994 = vadd.f32 0.0, %v3993
        %v3995 = vpop.f32.mrb[0].mxu0
        %3996 = vmatprep.mubr.f32.mxu0 0.0
        %3997 = vmatmul.mubr.f32.gmra.mrb[0].mxu0 %v1552
        %v3998 = vpop.f32.mrb[0].mxu0
        %v3999 = vadd.f32 0.0, %v3998
        %v4000 = vpop.f32.mrb[0].mxu0
        %4001 = vdwg.mxu0
        %4002 = vmatprep.subr.mxu0 0.0
        %4003 = vmatpush1.msra.mxu0 %v3894
        %4004 = vmatprep.subr.mxu0 0.0
        %4005 = vmatpush1.msra.mxu0 %v3895
        %4006 = vmatprep.subr.mxu0 0.0
        %4007 = vmatpush1.msra.mxu0 %v3896
        %4008 = vmatprep.subr.mxu0 0.0
        %4009 = vmatpush1.msra.mxu0 %v3897
        %4010 = vmatprep.subr.mxu0 0.0
        %4011 = vmatpush1.msra.mxu0 %v3898
        %4012 = vmatprep.subr.mxu0 0.0
        %4013 = vmatpush1.msra.mxu0 %v3899
        %4014 = vmatprep.subr.mxu0 0.0
        %4015 = vmatpush1.msra.mxu0 %v3900
        %4016 = vmatprep.subr.mxu0 0.0
        %4017 = vmatpush1.msra.mxu0 %v3901
        %4018 = vmatprep.subr.mxu0 0.0
        %4019 = vmatpush1.msra.mxu0 %v3902
        %4020 = vmatprep.subr.mxu0 0.0
        %4021 = vmatpush1.msra.mxu0 %v3903
        %4022 = vmatprep.subr.mxu0 0.0
        %4023 = vmatpush1.msra.mxu0 %v3904
        %4024 = vmatprep.subr.mxu0 0.0
        %4025 = vmatpush1.msra.mxu0 %v3905
        %4026 = vmatprep.subr.mxu0 0.0
        %4027 = vmatpush1.msra.mxu0 %v3906
        %4028 = vmatprep.subr.mxu0 0.0
        %4029 = vmatpush1.msra.mxu0 %v3907
        %4030 = vmatprep.subr.mxu0 0.0
        %4031 = vmatpush1.msra.mxu0 %v3908
        %4032 = vmatprep.subr.mxu0 0.0
        %4033 = vmatpush1.msra.mxu0 %v3909
        %4034 = vmatprep.subr.mxu0 0.0
        %4035 = vmatpush1.msra.mxu0 0.0
        %4036 = vmatprep.subr.mxu0 0.0
        %4037 = vmatpush1.msra.mxu0 0.0
        %4038 = vmatprep.subr.mxu0 0.0
        %4039 = vmatpush1.msra.mxu0 0.0
        %4040 = vmatprep.subr.mxu0 0.0
        %4041 = vmatpush1.msra.mxu0 0.0
        %4042 = vmatprep.subr.mxu0 0.0
        %4043 = vmatpush1.msra.mxu0 0.0
        %4044 = vmatprep.subr.mxu0 0.0
        %4045 = vmatpush1.msra.mxu0 0.0
        %4046 = vmatprep.subr.mxu0 0.0
        %4047 = vmatpush1.msra.mxu0 0.0
        %4048 = vmatprep.subr.mxu0 0.0
        %4049 = vmatpush1.msra.mxu0 0.0
        %4050 = vmatprep.subr.mxu0 0.0
        %4051 = vmatpush1.msra.mxu0 0.0
        %4052 = vmatprep.subr.mxu0 0.0
        %4053 = vmatpush1.msra.mxu0 0.0
        %4054 = vmatprep.subr.mxu0 0.0
        %4055 = vmatpush1.msra.mxu0 0.0
        %4056 = vmatprep.subr.mxu0 0.0
        %4057 = vmatpush1.msra.mxu0 0.0
        %4058 = vmatprep.subr.mxu0 0.0
        %4059 = vmatpush1.msra.mxu0 0.0
        %4060 = vmatprep.subr.mxu0 0.0
        %4061 = vmatpush1.msra.mxu0 0.0
        %4062 = vmatprep.subr.mxu0 0.0
        %4063 = vmatpush1.msra.mxu0 0.0
        %4064 = vmatprep.subr.mxu0 0.0
        %4065 = vmatpush1.msra.mxu0 0.0
        %4066 = vmatprep.mubr.f32.mxu0 0.0
        %4067 = vmatmul.mubr.f32.gmra.mrb[0].mxu0 %v1620
        %v4068 = vpop.f32.mrb[0].mxu0
        %v4069 = vadd.f32 %v3994, %v4068
        %v4070 = vpop.f32.mrb[0].mxu0
        %4071 = vmatprep.mubr.f32.mxu0 0.0
        %4072 = vmatmul.mubr.f32.gmra.mrb[0].mxu0 %v1625
        %v4073 = vpop.f32.mrb[0].mxu0
        %v4074 = vadd.f32 %v3999, %v4073
        %v4075 = vpop.f32.mrb[0].mxu0
        %4076 = vdwg.mxu0
        %s4077 = scalar_lea.vmem [#allocation9], 3328
        %v4078 = vld [vmem:[%s4077] sm:$0xff]
        %v4079 = vld [vmem:[%s4077 + $0x8] sm:$0xff]
        %v4080 = vld [vmem:[%s4077 + $0x10] sm:$0xff]
        %v4081 = vld [vmem:[%s4077 + $0x18] sm:$0xff]
        %v4082 = vld [vmem:[%s4077 + $0x20] sm:$0xff]
        %v4083 = vld [vmem:[%s4077 + $0x28] sm:$0xff]
        %v4084 = vld [vmem:[%s4077 + $0x30] sm:$0xff]
        %v4085 = vld [vmem:[%s4077 + $0x38] sm:$0xff]
        %v4086 = vld [vmem:[%s4077 + $0x40] sm:$0xff]
        %v4087 = vld [vmem:[%s4077 + $0x48] sm:$0xff]
        %v4088 = vld [vmem:[%s4077 + $0x50] sm:$0xff]
        %v4089 = vld [vmem:[%s4077 + $0x58] sm:$0xff]
        %v4090 = vld [vmem:[%s4077 + $0x60] sm:$0xff]
        %v4091 = vld [vmem:[%s4077 + $0x68] sm:$0xff]
        %v4092 = vld [vmem:[%s4077 + $0x70] sm:$0xff]
        %v4093 = vld [vmem:[%s4077 + $0x78] sm:$0xff]
        %4094 = vmatprep.subr.mxu0 0.0
        %4095 = vmatpush1.msra.mxu0 %v4078
        %4096 = vmatprep.subr.mxu0 0.0
        %4097 = vmatpush1.msra.mxu0 %v4079
        %4098 = vmatprep.subr.mxu0 0.0
        %4099 = vmatpush1.msra.mxu0 %v4080
        %4100 = vmatprep.subr.mxu0 0.0
        %4101 = vmatpush1.msra.mxu0 %v4081
        %4102 = vmatprep.subr.mxu0 0.0
        %4103 = vmatpush1.msra.mxu0 %v4082
        %4104 = vmatprep.subr.mxu0 0.0
        %4105 = vmatpush1.msra.mxu0 %v4083
        %4106 = vmatprep.subr.mxu0 0.0
        %4107 = vmatpush1.msra.mxu0 %v4084
        %4108 = vmatprep.subr.mxu0 0.0
        %4109 = vmatpush1.msra.mxu0 %v4085
        %4110 = vmatprep.subr.mxu0 0.0
        %4111 = vmatpush1.msra.mxu0 %v4086
        %4112 = vmatprep.subr.mxu0 0.0
        %4113 = vmatpush1.msra.mxu0 %v4087
        %4114 = vmatprep.subr.mxu0 0.0
        %4115 = vmatpush1.msra.mxu0 %v4088
        %4116 = vmatprep.subr.mxu0 0.0
        %4117 = vmatpush1.msra.mxu0 %v4089
        %4118 = vmatprep.subr.mxu0 0.0
        %4119 = vmatpush1.msra.mxu0 %v4090
        %4120 = vmatprep.subr.mxu0 0.0
        %4121 = vmatpush1.msra.mxu0 %v4091
        %4122 = vmatprep.subr.mxu0 0.0
        %4123 = vmatpush1.msra.mxu0 %v4092
        %4124 = vmatprep.subr.mxu0 0.0
        %4125 = vmatpush1.msra.mxu0 %v4093
        %4126 = vmatprep.subr.mxu0 0.0
        %4127 = vmatpush1.msra.mxu0 0.0
        %4128 = vmatprep.subr.mxu0 0.0
        %4129 = vmatpush1.msra.mxu0 0.0
        %4130 = vmatprep.subr.mxu0 0.0
        %4131 = vmatpush1.msra.mxu0 0.0
        %4132 = vmatprep.subr.mxu0 0.0
        %4133 = vmatpush1.msra.mxu0 0.0
        %4134 = vmatprep.subr.mxu0 0.0
        %4135 = vmatpush1.msra.mxu0 0.0
        %4136 = vmatprep.subr.mxu0 0.0
        %4137 = vmatpush1.msra.mxu0 0.0
        %4138 = vmatprep.subr.mxu0 0.0
        %4139 = vmatpush1.msra.mxu0 0.0
        %4140 = vmatprep.subr.mxu0 0.0
        %4141 = vmatpush1.msra.mxu0 0.0
        %4142 = vmatprep.subr.mxu0 0.0
        %4143 = vmatpush1.msra.mxu0 0.0
        %4144 = vmatprep.subr.mxu0 0.0
        %4145 = vmatpush1.msra.mxu0 0.0
        %4146 = vmatprep.subr.mxu0 0.0
        %4147 = vmatpush1.msra.mxu0 0.0
        %4148 = vmatprep.subr.mxu0 0.0
        %4149 = vmatpush1.msra.mxu0 0.0
        %4150 = vmatprep.subr.mxu0 0.0
        %4151 = vmatpush1.msra.mxu0 0.0
        %4152 = vmatprep.subr.mxu0 0.0
        %4153 = vmatpush1.msra.mxu0 0.0
        %4154 = vmatprep.subr.mxu0 0.0
        %4155 = vmatpush1.msra.mxu0 0.0
        %4156 = vmatprep.subr.mxu0 0.0
        %4157 = vmatpush1.msra.mxu0 0.0
        %4158 = vmatprep.mubr.f32.mxu0 0.0
        %4159 = vmatmul.mubr.f32.gmra.mrb[0].mxu0 %v1695
        %v4160 = vpop.f32.mrb[0].mxu0
        %v4161 = vadd.f32 0.0, %v4160
        %v4162 = vpop.f32.mrb[0].mxu0
        %4163 = vmatprep.mubr.f32.mxu0 0.0
        %4164 = vmatmul.mubr.f32.gmra.mrb[0].mxu0 %v1700
        %v4165 = vpop.f32.mrb[0].mxu0
        %v4166 = vadd.f32 0.0, %v4165
        %v4167 = vpop.f32.mrb[0].mxu0
        %4168 = vdwg.mxu0
        %v4169 = vadd.f32 %v4069, %v4161
        %v4170 = vadd.f32 %v4074, %v4166
        %s4171 = scalar_lea.vmem [#allocation10], 8
        %v4172 = vld [vmem:[%s4171] sm:$0x1]
        %v4174 = vlaneseq
        %v4175 = vshrl.u32 %v4174, 7
        %v4176 = vsub.s32 0, %v4175
        %v4177 = vrot.slane %v4172, %v4176
        %v4179 = vadd.f32 %v4169, %v4177
        %v4180 = vadd.f32 %v4170, %v4177
        %v4181 = vmax.f32 %v4179, 0.0
        %v4182 = vmax.f32 %v4180, 0.0
        %4183 = vmatprep.subr.mxu0 0.0
        %4184 = vmatpush1.msra.mxu0 %v4181
        %4185 = vmatprep.subr.mxu0 0.0
        %4186 = vmatpush1.msra.mxu0 %v4182
        %4187 = vmatprep.subr.mxu0 0.0
        %4188 = vmatpush1.msra.mxu0 0.0
        %4189 = vmatprep.subr.mxu0 0.0
        %4190 = vmatpush1.msra.mxu0 0.0
        %4191 = vmatprep.subr.mxu0 0.0
        %4192 = vmatpush1.msra.mxu0 0.0
        %4193 = vmatprep.subr.mxu0 0.0
        %4194 = vmatpush1.msra.mxu0 0.0
        %4195 = vmatprep.subr.mxu0 0.0
        %4196 = vmatpush1.msra.mxu0 0.0
        %4197 = vmatprep.subr.mxu0 0.0
        %4198 = vmatpush1.msra.mxu0 0.0
        %4199 = vmatprep.subr.mxu0 0.0
        %4200 = vmatpush1.msra.mxu0 0.0
        %4201 = vmatprep.subr.mxu0 0.0
        %4202 = vmatpush1.msra.mxu0 0.0
        %4203 = vmatprep.subr.mxu0 0.0
        %4204 = vmatpush1.msra.mxu0 0.0
        %4205 = vmatprep.subr.mxu0 0.0
        %4206 = vmatpush1.msra.mxu0 0.0
        %4207 = vmatprep.subr.mxu0 0.0
        %4208 = vmatpush1.msra.mxu0 0.0
        %4209 = vmatprep.subr.mxu0 0.0
        %4210 = vmatpush1.msra.mxu0 0.0
        %4211 = vmatprep.subr.mxu0 0.0
        %4212 = vmatpush1.msra.mxu0 0.0
        %4213 = vmatprep.subr.mxu0 0.0
        %4214 = vmatpush1.msra.mxu0 0.0
        %4215 = vmatprep.subr.mxu0 0.0
        %4216 = vmatpush1.msra.mxu0 0.0
        %4217 = vmatprep.subr.mxu0 0.0
        %4218 = vmatpush1.msra.mxu0 0.0
        %4219 = vmatprep.subr.mxu0 0.0
        %4220 = vmatpush1.msra.mxu0 0.0
        %4221 = vmatprep.subr.mxu0 0.0
        %4222 = vmatpush1.msra.mxu0 0.0
        %4223 = vmatprep.subr.mxu0 0.0
        %4224 = vmatpush1.msra.mxu0 0.0
        %4225 = vmatprep.subr.mxu0 0.0
        %4226 = vmatpush1.msra.mxu0 0.0
        %4227 = vmatprep.subr.mxu0 0.0
        %4228 = vmatpush1.msra.mxu0 0.0
        %4229 = vmatprep.subr.mxu0 0.0
        %4230 = vmatpush1.msra.mxu0 0.0
        %4231 = vmatprep.subr.mxu0 0.0
        %4232 = vmatpush1.msra.mxu0 0.0
        %4233 = vmatprep.subr.mxu0 0.0
        %4234 = vmatpush1.msra.mxu0 0.0
        %4235 = vmatprep.subr.mxu0 0.0
        %4236 = vmatpush1.msra.mxu0 0.0
        %4237 = vmatprep.subr.mxu0 0.0
        %4238 = vmatpush1.msra.mxu0 0.0
        %4239 = vmatprep.subr.mxu0 0.0
        %4240 = vmatpush1.msra.mxu0 0.0
        %4241 = vmatprep.subr.mxu0 0.0
        %4242 = vmatpush1.msra.mxu0 0.0
        %4243 = vmatprep.subr.mxu0 0.0
        %4244 = vmatpush1.msra.mxu0 0.0
        %4245 = vmatprep.subr.mxu0 0.0
        %4246 = vmatpush1.msra.mxu0 0.0
        %4247 = vmatprep.mubr.f32.mxu0 0.0
        %4248 = vmatmul.mubr.f32.gmra.mrb[0].mxu0 %v664
        %v4249 = vpop.f32.mrb[0].mxu0
        %v4250 = vadd.f32 0.0, %v4249
        %v4251 = vpop.f32.mrb[0].mxu0
        %4252 = vmatprep.mubr.f32.mxu0 0.0
        %4253 = vmatmul.mubr.f32.gmra.mrb[0].mxu0 %v667
        %v4254 = vpop.f32.mrb[0].mxu0
        %v4255 = vadd.f32 0.0, %v4254
        %v4256 = vpop.f32.mrb[0].mxu0
        %4257 = vdwg.mxu0
        %4258 = vmatprep.subr.mxu0 0.0
        %4259 = vmatpush1.msra.mxu0 %v4181
        %4260 = vmatprep.subr.mxu0 0.0
        %4261 = vmatpush1.msra.mxu0 %v4182
        %4262 = vmatprep.subr.mxu0 0.0
        %4263 = vmatpush1.msra.mxu0 0.0
        %4264 = vmatprep.subr.mxu0 0.0
        %4265 = vmatpush1.msra.mxu0 0.0
        %4266 = vmatprep.subr.mxu0 0.0
        %4267 = vmatpush1.msra.mxu0 0.0
        %4268 = vmatprep.subr.mxu0 0.0
        %4269 = vmatpush1.msra.mxu0 0.0
        %4270 = vmatprep.subr.mxu0 0.0
        %4271 = vmatpush1.msra.mxu0 0.0
        %4272 = vmatprep.subr.mxu0 0.0
        %4273 = vmatpush1.msra.mxu0 0.0
        %4274 = vmatprep.subr.mxu0 0.0
        %4275 = vmatpush1.msra.mxu0 0.0
        %4276 = vmatprep.subr.mxu0 0.0
        %4277 = vmatpush1.msra.mxu0 0.0
        %4278 = vmatprep.subr.mxu0 0.0
        %4279 = vmatpush1.msra.mxu0 0.0
        %4280 = vmatprep.subr.mxu0 0.0
        %4281 = vmatpush1.msra.mxu0 0.0
        %4282 = vmatprep.subr.mxu0 0.0
        %4283 = vmatpush1.msra.mxu0 0.0
        %4284 = vmatprep.subr.mxu0 0.0
        %4285 = vmatpush1.msra.mxu0 0.0
        %4286 = vmatprep.subr.mxu0 0.0
        %4287 = vmatpush1.msra.mxu0 0.0
        %4288 = vmatprep.subr.mxu0 0.0
        %4289 = vmatpush1.msra.mxu0 0.0
        %4290 = vmatprep.subr.mxu0 0.0
        %4291 = vmatpush1.msra.mxu0 0.0
        %4292 = vmatprep.subr.mxu0 0.0
        %4293 = vmatpush1.msra.mxu0 0.0
        %4294 = vmatprep.subr.mxu0 0.0
        %4295 = vmatpush1.msra.mxu0 0.0
        %4296 = vmatprep.subr.mxu0 0.0
        %4297 = vmatpush1.msra.mxu0 0.0
        %4298 = vmatprep.subr.mxu0 0.0
        %4299 = vmatpush1.msra.mxu0 0.0
        %4300 = vmatprep.subr.mxu0 0.0
        %4301 = vmatpush1.msra.mxu0 0.0
        %4302 = vmatprep.subr.mxu0 0.0
        %4303 = vmatpush1.msra.mxu0 0.0
        %4304 = vmatprep.subr.mxu0 0.0
        %4305 = vmatpush1.msra.mxu0 0.0
        %4306 = vmatprep.subr.mxu0 0.0
        %4307 = vmatpush1.msra.mxu0 0.0
        %4308 = vmatprep.subr.mxu0 0.0
        %4309 = vmatpush1.msra.mxu0 0.0
        %4310 = vmatprep.subr.mxu0 0.0
        %4311 = vmatpush1.msra.mxu0 0.0
        %4312 = vmatprep.subr.mxu0 0.0
        %4313 = vmatpush1.msra.mxu0 0.0
        %4314 = vmatprep.subr.mxu0 0.0
        %4315 = vmatpush1.msra.mxu0 0.0
        %4316 = vmatprep.subr.mxu0 0.0
        %4317 = vmatpush1.msra.mxu0 0.0
        %4318 = vmatprep.subr.mxu0 0.0
        %4319 = vmatpush1.msra.mxu0 0.0
        %4320 = vmatprep.subr.mxu0 0.0
        %4321 = vmatpush1.msra.mxu0 0.0
        %4322 = vmatprep.mubr.f32.mxu0 0.0
        %4323 = vmatmul.mubr.f32.gmra.mrb[0].mxu0 %v745
        %v4324 = vpop.f32.mrb[0].mxu0
        %v4325 = vadd.f32 0.0, %v4324
        %v4326 = vpop.f32.mrb[0].mxu0
        %4327 = vmatprep.mubr.f32.mxu0 0.0
        %4328 = vmatmul.mubr.f32.gmra.mrb[0].mxu0 %v748
        %v4329 = vpop.f32.mrb[0].mxu0
        %v4330 = vadd.f32 0.0, %v4329
        %v4331 = vpop.f32.mrb[0].mxu0
        %4332 = vdwg.mxu0
        %s4333 = scalar_lea.vmem [#allocation9], 3456
        %v4334 = vld [vmem:[%s4333] sm:$0xff]
        %v4335 = vld [vmem:[%s4333 + $0x8] sm:$0xff]
        %v4336 = vld [vmem:[%s4333 + $0x10] sm:$0xff]
        %v4337 = vld [vmem:[%s4333 + $0x18] sm:$0xff]
        %v4338 = vld [vmem:[%s4333 + $0x20] sm:$0xff]
        %v4339 = vld [vmem:[%s4333 + $0x28] sm:$0xff]
        %v4340 = vld [vmem:[%s4333 + $0x30] sm:$0xff]
        %v4341 = vld [vmem:[%s4333 + $0x38] sm:$0xff]
        %v4342 = vld [vmem:[%s4333 + $0x40] sm:$0xff]
        %v4343 = vld [vmem:[%s4333 + $0x48] sm:$0xff]
        %v4344 = vld [vmem:[%s4333 + $0x50] sm:$0xff]
        %v4345 = vld [vmem:[%s4333 + $0x58] sm:$0xff]
        %v4346 = vld [vmem:[%s4333 + $0x60] sm:$0xff]
        %v4347 = vld [vmem:[%s4333 + $0x68] sm:$0xff]
        %v4348 = vld [vmem:[%s4333 + $0x70] sm:$0xff]
        %v4349 = vld [vmem:[%s4333 + $0x78] sm:$0xff]
        %s4350 = scalar_lea.vmem [#allocation9], 3584
        %v4351 = vld [vmem:[%s4350] sm:$0xff]
        %v4352 = vld [vmem:[%s4350 + $0x8] sm:$0xff]
        %v4353 = vld [vmem:[%s4350 + $0x10] sm:$0xff]
        %v4354 = vld [vmem:[%s4350 + $0x18] sm:$0xff]
        %v4355 = vld [vmem:[%s4350 + $0x20] sm:$0xff]
        %v4356 = vld [vmem:[%s4350 + $0x28] sm:$0xff]
        %v4357 = vld [vmem:[%s4350 + $0x30] sm:$0xff]
        %v4358 = vld [vmem:[%s4350 + $0x38] sm:$0xff]
        %v4359 = vld [vmem:[%s4350 + $0x40] sm:$0xff]
        %v4360 = vld [vmem:[%s4350 + $0x48] sm:$0xff]
        %v4361 = vld [vmem:[%s4350 + $0x50] sm:$0xff]
        %v4362 = vld [vmem:[%s4350 + $0x58] sm:$0xff]
        %v4363 = vld [vmem:[%s4350 + $0x60] sm:$0xff]
        %v4364 = vld [vmem:[%s4350 + $0x68] sm:$0xff]
        %v4365 = vld [vmem:[%s4350 + $0x70] sm:$0xff]
        %v4366 = vld [vmem:[%s4350 + $0x78] sm:$0xff]
        %4367 = vmatprep.subr.mxu0 0.0
        %4368 = vmatpush1.msra.mxu0 %v4351
        %4369 = vmatprep.subr.mxu0 0.0
        %4370 = vmatpush1.msra.mxu0 %v4352
        %4371 = vmatprep.subr.mxu0 0.0
        %4372 = vmatpush1.msra.mxu0 %v4353
        %4373 = vmatprep.subr.mxu0 0.0
        %4374 = vmatpush1.msra.mxu0 %v4354
        %4375 = vmatprep.subr.mxu0 0.0
        %4376 = vmatpush1.msra.mxu0 %v4355
        %4377 = vmatprep.subr.mxu0 0.0
        %4378 = vmatpush1.msra.mxu0 %v4356
        %4379 = vmatprep.subr.mxu0 0.0
        %4380 = vmatpush1.msra.mxu0 %v4357
        %4381 = vmatprep.subr.mxu0 0.0
        %4382 = vmatpush1.msra.mxu0 %v4358
        %4383 = vmatprep.subr.mxu0 0.0
        %4384 = vmatpush1.msra.mxu0 %v4359
        %4385 = vmatprep.subr.mxu0 0.0
        %4386 = vmatpush1.msra.mxu0 %v4360
        %4387 = vmatprep.subr.mxu0 0.0
        %4388 = vmatpush1.msra.mxu0 %v4361
        %4389 = vmatprep.subr.mxu0 0.0
        %4390 = vmatpush1.msra.mxu0 %v4362
        %4391 = vmatprep.subr.mxu0 0.0
        %4392 = vmatpush1.msra.mxu0 %v4363
        %4393 = vmatprep.subr.mxu0 0.0
        %4394 = vmatpush1.msra.mxu0 %v4364
        %4395 = vmatprep.subr.mxu0 0.0
        %4396 = vmatpush1.msra.mxu0 %v4365
        %4397 = vmatprep.subr.mxu0 0.0
        %4398 = vmatpush1.msra.mxu0 %v4366
        %4399 = vmatprep.subr.mxu0 0.0
        %4400 = vmatpush1.msra.mxu0 0.0
        %4401 = vmatprep.subr.mxu0 0.0
        %4402 = vmatpush1.msra.mxu0 0.0
        %4403 = vmatprep.subr.mxu0 0.0
        %4404 = vmatpush1.msra.mxu0 0.0
        %4405 = vmatprep.subr.mxu0 0.0
        %4406 = vmatpush1.msra.mxu0 0.0
        %4407 = vmatprep.subr.mxu0 0.0
        %4408 = vmatpush1.msra.mxu0 0.0
        %4409 = vmatprep.subr.mxu0 0.0
        %4410 = vmatpush1.msra.mxu0 0.0
        %4411 = vmatprep.subr.mxu0 0.0
        %4412 = vmatpush1.msra.mxu0 0.0
        %4413 = vmatprep.subr.mxu0 0.0
        %4414 = vmatpush1.msra.mxu0 0.0
        %4415 = vmatprep.subr.mxu0 0.0
        %4416 = vmatpush1.msra.mxu0 0.0
        %4417 = vmatprep.subr.mxu0 0.0
        %4418 = vmatpush1.msra.mxu0 0.0
        %4419 = vmatprep.subr.mxu0 0.0
        %4420 = vmatpush1.msra.mxu0 0.0
        %4421 = vmatprep.subr.mxu0 0.0
        %4422 = vmatpush1.msra.mxu0 0.0
        %4423 = vmatprep.subr.mxu0 0.0
        %4424 = vmatpush1.msra.mxu0 0.0
        %4425 = vmatprep.subr.mxu0 0.0
        %4426 = vmatpush1.msra.mxu0 0.0
        %4427 = vmatprep.subr.mxu0 0.0
        %4428 = vmatpush1.msra.mxu0 0.0
        %4429 = vmatprep.subr.mxu0 0.0
        %4430 = vmatpush1.msra.mxu0 0.0
        %4431 = vmatprep.mubr.f32.mxu0 0.0
        %4432 = vmatmul.mubr.f32.gmra.mrb[0].mxu0 %v4181
        %v4433 = vpop.f32.mrb[0].mxu0
        %v4434 = vadd.f32 0.0, %v4433
        %v4435 = vpop.f32.mrb[0].mxu0
        %4436 = vmatprep.mubr.f32.mxu0 0.0
        %4437 = vmatmul.mubr.f32.gmra.mrb[0].mxu0 %v4182
        %v4438 = vpop.f32.mrb[0].mxu0
        %v4439 = vadd.f32 0.0, %v4438
        %v4440 = vpop.f32.mrb[0].mxu0
        %4441 = vdwg.mxu0
        %4442 = vmatprep.subr.mxu0 0.0
        %4443 = vmatpush1.msra.mxu0 %v4334
        %4444 = vmatprep.subr.mxu0 0.0
        %4445 = vmatpush1.msra.mxu0 %v4335
        %4446 = vmatprep.subr.mxu0 0.0
        %4447 = vmatpush1.msra.mxu0 %v4336
        %4448 = vmatprep.subr.mxu0 0.0
        %4449 = vmatpush1.msra.mxu0 %v4337
        %4450 = vmatprep.subr.mxu0 0.0
        %4451 = vmatpush1.msra.mxu0 %v4338
        %4452 = vmatprep.subr.mxu0 0.0
        %4453 = vmatpush1.msra.mxu0 %v4339
        %4454 = vmatprep.subr.mxu0 0.0
        %4455 = vmatpush1.msra.mxu0 %v4340
        %4456 = vmatprep.subr.mxu0 0.0
        %4457 = vmatpush1.msra.mxu0 %v4341
        %4458 = vmatprep.subr.mxu0 0.0
        %4459 = vmatpush1.msra.mxu0 %v4342
        %4460 = vmatprep.subr.mxu0 0.0
        %4461 = vmatpush1.msra.mxu0 %v4343
        %4462 = vmatprep.subr.mxu0 0.0
        %4463 = vmatpush1.msra.mxu0 %v4344
        %4464 = vmatprep.subr.mxu0 0.0
        %4465 = vmatpush1.msra.mxu0 %v4345
        %4466 = vmatprep.subr.mxu0 0.0
        %4467 = vmatpush1.msra.mxu0 %v4346
        %4468 = vmatprep.subr.mxu0 0.0
        %4469 = vmatpush1.msra.mxu0 %v4347
        %4470 = vmatprep.subr.mxu0 0.0
        %4471 = vmatpush1.msra.mxu0 %v4348
        %4472 = vmatprep.subr.mxu0 0.0
        %4473 = vmatpush1.msra.mxu0 %v4349
        %4474 = vmatprep.subr.mxu0 0.0
        %4475 = vmatpush1.msra.mxu0 0.0
        %4476 = vmatprep.subr.mxu0 0.0
        %4477 = vmatpush1.msra.mxu0 0.0
        %4478 = vmatprep.subr.mxu0 0.0
        %4479 = vmatpush1.msra.mxu0 0.0
        %4480 = vmatprep.subr.mxu0 0.0
        %4481 = vmatpush1.msra.mxu0 0.0
        %4482 = vmatprep.subr.mxu0 0.0
        %4483 = vmatpush1.msra.mxu0 0.0
        %4484 = vmatprep.subr.mxu0 0.0
        %4485 = vmatpush1.msra.mxu0 0.0
        %4486 = vmatprep.subr.mxu0 0.0
        %4487 = vmatpush1.msra.mxu0 0.0
        %4488 = vmatprep.subr.mxu0 0.0
        %4489 = vmatpush1.msra.mxu0 0.0
        %4490 = vmatprep.subr.mxu0 0.0
        %4491 = vmatpush1.msra.mxu0 0.0
        %4492 = vmatprep.subr.mxu0 0.0
        %4493 = vmatpush1.msra.mxu0 0.0
        %4494 = vmatprep.subr.mxu0 0.0
        %4495 = vmatpush1.msra.mxu0 0.0
        %4496 = vmatprep.subr.mxu0 0.0
        %4497 = vmatpush1.msra.mxu0 0.0
        %4498 = vmatprep.subr.mxu0 0.0
        %4499 = vmatpush1.msra.mxu0 0.0
        %4500 = vmatprep.subr.mxu0 0.0
        %4501 = vmatpush1.msra.mxu0 0.0
        %4502 = vmatprep.subr.mxu0 0.0
        %4503 = vmatpush1.msra.mxu0 0.0
        %4504 = vmatprep.subr.mxu0 0.0
        %4505 = vmatpush1.msra.mxu0 0.0
        %4506 = vmatprep.mubr.f32.mxu0 0.0
        %4507 = vmatmul.mubr.f32.gmra.mrb[0].mxu0 %v4250
        %v4508 = vpop.f32.mrb[0].mxu0
        %v4509 = vadd.f32 %v4434, %v4508
        %v4510 = vpop.f32.mrb[0].mxu0
        %4511 = vmatprep.mubr.f32.mxu0 0.0
        %4512 = vmatmul.mubr.f32.gmra.mrb[0].mxu0 %v4255
        %v4513 = vpop.f32.mrb[0].mxu0
        %v4514 = vadd.f32 %v4439, %v4513
        %v4515 = vpop.f32.mrb[0].mxu0
        %4516 = vdwg.mxu0
        %s4517 = scalar_lea.vmem [#allocation9], 3712
        %v4518 = vld [vmem:[%s4517] sm:$0xff]
        %v4519 = vld [vmem:[%s4517 + $0x8] sm:$0xff]
        %v4520 = vld [vmem:[%s4517 + $0x10] sm:$0xff]
        %v4521 = vld [vmem:[%s4517 + $0x18] sm:$0xff]
        %v4522 = vld [vmem:[%s4517 + $0x20] sm:$0xff]
        %v4523 = vld [vmem:[%s4517 + $0x28] sm:$0xff]
        %v4524 = vld [vmem:[%s4517 + $0x30] sm:$0xff]
        %v4525 = vld [vmem:[%s4517 + $0x38] sm:$0xff]
        %v4526 = vld [vmem:[%s4517 + $0x40] sm:$0xff]
        %v4527 = vld [vmem:[%s4517 + $0x48] sm:$0xff]
        %v4528 = vld [vmem:[%s4517 + $0x50] sm:$0xff]
        %v4529 = vld [vmem:[%s4517 + $0x58] sm:$0xff]
        %v4530 = vld [vmem:[%s4517 + $0x60] sm:$0xff]
        %v4531 = vld [vmem:[%s4517 + $0x68] sm:$0xff]
        %v4532 = vld [vmem:[%s4517 + $0x70] sm:$0xff]
        %v4533 = vld [vmem:[%s4517 + $0x78] sm:$0xff]
        %4534 = vmatprep.subr.mxu0 0.0
        %4535 = vmatpush1.msra.mxu0 %v4518
        %4536 = vmatprep.subr.mxu0 0.0
        %4537 = vmatpush1.msra.mxu0 %v4519
        %4538 = vmatprep.subr.mxu0 0.0
        %4539 = vmatpush1.msra.mxu0 %v4520
        %4540 = vmatprep.subr.mxu0 0.0
        %4541 = vmatpush1.msra.mxu0 %v4521
        %4542 = vmatprep.subr.mxu0 0.0
        %4543 = vmatpush1.msra.mxu0 %v4522
        %4544 = vmatprep.subr.mxu0 0.0
        %4545 = vmatpush1.msra.mxu0 %v4523
        %4546 = vmatprep.subr.mxu0 0.0
        %4547 = vmatpush1.msra.mxu0 %v4524
        %4548 = vmatprep.subr.mxu0 0.0
        %4549 = vmatpush1.msra.mxu0 %v4525
        %4550 = vmatprep.subr.mxu0 0.0
        %4551 = vmatpush1.msra.mxu0 %v4526
        %4552 = vmatprep.subr.mxu0 0.0
        %4553 = vmatpush1.msra.mxu0 %v4527
        %4554 = vmatprep.subr.mxu0 0.0
        %4555 = vmatpush1.msra.mxu0 %v4528
        %4556 = vmatprep.subr.mxu0 0.0
        %4557 = vmatpush1.msra.mxu0 %v4529
        %4558 = vmatprep.subr.mxu0 0.0
        %4559 = vmatpush1.msra.mxu0 %v4530
        %4560 = vmatprep.subr.mxu0 0.0
        %4561 = vmatpush1.msra.mxu0 %v4531
        %4562 = vmatprep.subr.mxu0 0.0
        %4563 = vmatpush1.msra.mxu0 %v4532
        %4564 = vmatprep.subr.mxu0 0.0
        %4565 = vmatpush1.msra.mxu0 %v4533
        %4566 = vmatprep.subr.mxu0 0.0
        %4567 = vmatpush1.msra.mxu0 0.0
        %4568 = vmatprep.subr.mxu0 0.0
        %4569 = vmatpush1.msra.mxu0 0.0
        %4570 = vmatprep.subr.mxu0 0.0
        %4571 = vmatpush1.msra.mxu0 0.0
        %4572 = vmatprep.subr.mxu0 0.0
        %4573 = vmatpush1.msra.mxu0 0.0
        %4574 = vmatprep.subr.mxu0 0.0
        %4575 = vmatpush1.msra.mxu0 0.0
        %4576 = vmatprep.subr.mxu0 0.0
        %4577 = vmatpush1.msra.mxu0 0.0
        %4578 = vmatprep.subr.mxu0 0.0
        %4579 = vmatpush1.msra.mxu0 0.0
        %4580 = vmatprep.subr.mxu0 0.0
        %4581 = vmatpush1.msra.mxu0 0.0
        %4582 = vmatprep.subr.mxu0 0.0
        %4583 = vmatpush1.msra.mxu0 0.0
        %4584 = vmatprep.subr.mxu0 0.0
        %4585 = vmatpush1.msra.mxu0 0.0
        %4586 = vmatprep.subr.mxu0 0.0
        %4587 = vmatpush1.msra.mxu0 0.0
        %4588 = vmatprep.subr.mxu0 0.0
        %4589 = vmatpush1.msra.mxu0 0.0
        %4590 = vmatprep.subr.mxu0 0.0
        %4591 = vmatpush1.msra.mxu0 0.0
        %4592 = vmatprep.subr.mxu0 0.0
        %4593 = vmatpush1.msra.mxu0 0.0
        %4594 = vmatprep.subr.mxu0 0.0
        %4595 = vmatpush1.msra.mxu0 0.0
        %4596 = vmatprep.subr.mxu0 0.0
        %4597 = vmatpush1.msra.mxu0 0.0
        %4598 = vmatprep.mubr.f32.mxu0 0.0
        %4599 = vmatmul.mubr.f32.gmra.mrb[0].mxu0 %v4325
        %v4600 = vpop.f32.mrb[0].mxu0
        %v4601 = vadd.f32 0.0, %v4600
        %v4602 = vpop.f32.mrb[0].mxu0
        %4603 = vmatprep.mubr.f32.mxu0 0.0
        %4604 = vmatmul.mubr.f32.gmra.mrb[0].mxu0 %v4330
        %v4605 = vpop.f32.mrb[0].mxu0
        %v4606 = vadd.f32 0.0, %v4605
        %v4607 = vpop.f32.mrb[0].mxu0
        %4608 = vdwg.mxu0
        %v4609 = vadd.f32 %v4509, %v4601
        %v4610 = vadd.f32 %v4514, %v4606
        %s4611 = scalar_lea.vmem [#allocation10], 9
        %v4612 = vld [vmem:[%s4611] sm:$0x1]
        %v4614 = vlaneseq
        %v4615 = vshrl.u32 %v4614, 7
        %v4616 = vsub.s32 0, %v4615
        %v4617 = vrot.slane %v4612, %v4616
        %v4619 = vadd.f32 %v4609, %v4617
        %v4620 = vadd.f32 %v4610, %v4617
        %v4621 = vadd.f32 %v4619, %v2431
        %v4622 = vadd.f32 %v4620, %v2432
        %4623 = vst [vmem:[%s450] sm:$0xff] %v2431
        %4624 = vst [vmem:[%s450 + $0x8] sm:$0xff] %v2432
        %4625 = vst [vmem:[%s450 + $0x10] sm:$0xff] %v3161
        %4626 = vst [vmem:[%s450 + $0x18] sm:$0xff] %v3162
        %4627 = vst [vmem:[%s450 + $0x20] sm:$0xff] %v3891
        %4628 = vst [vmem:[%s450 + $0x28] sm:$0xff] %v3892
        %4629 = vst [vmem:[%s450 + $0x30] sm:$0xff] %v4621
        %4630 = vst [vmem:[%s450 + $0x38] sm:$0xff] %v4622
        %p4631 = scmp.lt.s32.totalorder %s24, 1
        %s4632 = scalar_select %p4631, %s24, 1
        %s4633 = smul.addr %s4632, 8
        %s4634 = smul.addr %s4633, 8
        %s4635 = scalar_lea.vmem %s9, %s4634
        // Predicated region
        $region85: #{_lambda_.1} parent=55 // pred_check
          %p4636 = pneg %p241
        $region86: #{_lambda_.1} parent=55 // pred_check_branch
          %4638 = sbr.rel (%p4636) target = $region88
        $region87: #{_lambda_.1} parent=55 // pred_region
          _
        $region88: #{_lambda_.1} parent=55 // pred_fallthru
          _
      $region56: #{_lambda_.1} parent=5 // pred_fallthru
        _
      %p4639 = scmp.le.s32.totalorder 2, %s19
      // Predicated region
      $region89: #{_lambda_.1} parent=5 // pred_check
        %p4640 = pneg %p4639
      $region90: #{_lambda_.1} parent=5 // pred_check_branch
        %4642 = sbr.rel (%p4640) target = $region92
      $region91: #{_lambda_.1} parent=5 // pred_region
        %s4643 = ssub.s32 %s19, 2
        // Predicated region
        $region93: #{_lambda_.1} parent=91 // pred_check
          %p4644 = pneg %p247
        $region94: #{_lambda_.1} parent=91 // pred_check_branch
          %4646 = sbr.rel (%p4644) target = $region96
        $region95: #{_lambda_.1} parent=91 // pred_region
          %p4647 = scmp.lt.s32.totalorder %s25, 1
          %s4648 = scalar_select %p4647, %s25, 1
          %s4649 = smul.addr %s4648, 8
          %s4650 = smul.addr %s4649, 8
          %s4651 = scalar_lea.vmem %s9, %s4650
        $region96: #{_lambda_.1} parent=91 // pred_fallthru
          _
      $region92: #{_lambda_.1} parent=5 // pred_fallthru
        _
    $region6: #{_lambda_.1} parent=1 // loop_footer
      %s23 = sadd.s32 1, %s19
    $region7: #{_lambda_.1} parent=1 // loop_footer_branch
      %18 = sbr.rel target = $region3
    $region8: #{_lambda_.1} parent=1 // loop_exit
      _
    %4652 = vsyncpa [#allocation3], 1
    %s4653 = scalar_lea.sflag [#allocation3], 1
    %4654 = vsyncpa %s4653, 1
    %4655 = vsyncpa [#allocation5], 1
    %4656 = vsyncpa [#allocation8], 1
    %4657 = vsyncpa [#allocation11], 1

</llo_original>
